<compile_context>
chip_gen: v7x
topology: tpu7x:2x2x1
jax: 0.10.0
libtpu: 0.0.40
codegen_flags: <defaults>
</compile_context>

<pallas_src>
import functools

import jax
import jax.numpy as jnp
from jax.experimental import pallas as pl
from jax.experimental.pallas import tpu as pltpu

PAD = 2          # nn.Conv1d(..., padding=2)
BN_EPS = 1e-5    # nn.BatchNorm1d default eps


# ---------------------------------------------------------------------------
# Fused Pallas kernel: conv1->bn1 ... conv5->bn5, conv6 (+residual), sigmoid
# ---------------------------------------------------------------------------
def _cnn1d_fused_kernel(x_ref, w_ref, b_ref, g_ref, be_ref, o_ref, xp_ref, *,
                        N, L, C, Cmax, K, n_layers, pred_diff):
    """All refs are whole-array VMEM blocks.

    x_ref:   (N, L, Cmax)          channel-padded input, channels last
    w_ref:   (n_layers, K, Cmax, Cmax)   zero-padded conv taps
    b_ref:   (n_layers, Cmax)      zero-padded conv biases
    g_ref:   (n_layers, Cmax)      zero-padded BN gammas (row n_layers-1 unused)
    be_ref:  (n_layers, Cmax)      zero-padded BN betas  (row n_layers-1 unused)
    o_ref:   (N*L, C)              final sigmoid output, flattened rows
    xp_ref:  (N, xp_rows, Cmax)    VMEM working buffer with zero halo rows
    """
    rows = N * L
    xoff = (PAD + 7) // 8 * 8      # sublane-aligned start of the valid rows

    # Zero the working buffer once; halo rows stay zero for every layer.
    xp_ref[...] = jnp.zeros_like(xp_ref)
    xp_ref[:, xoff:xoff + L, :] = x_ref[...]

    for i in range(n_layers):                      # static: channel widths differ
        # Conv1d: K shifted whole-batch matmuls accumulated in f32 on the MXU.
        acc = jnp.zeros((rows, Cmax), jnp.float32)
        for k in range(K):
            lo = xoff - PAD + k
            xk = xp_ref[:, lo:lo + L, :].reshape(rows, Cmax)
            acc = acc + jnp.dot(xk, w_ref[i, k],
                                preferred_element_type=jnp.float32)
        h = acc + b_ref[i:i + 1, :]                # hoisted (1, Cmax) broadcast

        if i < n_layers - 1:
            h = jnp.maximum(h, 0.0)                # ReLU
            # BatchNorm1d (training-mode batch stats), single reduction pass.
            mean = jnp.mean(h, axis=0, keepdims=True)
            var = jnp.mean(h * h, axis=0, keepdims=True) - mean * mean
            h = (h - mean) * jax.lax.rsqrt(var + BN_EPS)
            h = h * g_ref[i:i + 1, :] + be_ref[i:i + 1, :]
            # Next layer's input; padded channels are exactly zero again.
            xp_ref[:, xoff:xoff + L, :] = h.reshape(N, L, Cmax)
        else:
            if pred_diff:
                h = h + x_ref[...].reshape(rows, Cmax)   # residual with input
            h = 1.0 / (1.0 + jnp.exp(-h))                # sigmoid
            o_ref[...] = h[:, :C].astype(o_ref.dtype)


# ---------------------------------------------------------------------------
# Parameter packing: uniform zero-padded channel width Cmax
# ---------------------------------------------------------------------------
def _pack_params(params):
    conv_bn = params["conv_bn"]
    w6, b6 = params["conv_out"]
    ws = [w for (w, _, _, _) in conv_bn] + [w6]
    bs = [b for (_, b, _, _) in conv_bn] + [b6]
    gs = [g for (_, _, g, _) in conv_bn]
    bes = [be for (_, _, _, be) in conv_bn]

    K = ws[0].shape[0]
    Cmax = max(max(w.shape[1], w.shape[2]) for w in ws)
    nl = len(ws)

    w_all = jnp.zeros((nl, K, Cmax, Cmax), jnp.float32)
    b_all = jnp.zeros((nl, Cmax), jnp.float32)
    g_all = jnp.zeros((nl, Cmax), jnp.float32)
    be_all = jnp.zeros((nl, Cmax), jnp.float32)
    for i, w in enumerate(ws):
        cin, cout = w.shape[1], w.shape[2]
        w_all = w_all.at[i, :, :cin, :cout].set(w.astype(jnp.float32))
        b_all = b_all.at[i, :cout].set(bs[i].astype(jnp.float32))
        if i < len(gs):
            g_all = g_all.at[i, :cout].set(gs[i].astype(jnp.float32))
            be_all = be_all.at[i, :cout].set(bes[i].astype(jnp.float32))
    return w_all, b_all, g_all, be_all, K, Cmax


# ---------------------------------------------------------------------------
# Public forward: matches PyTorch layout (N, C, L)
# ---------------------------------------------------------------------------
def cnn_1d_forward(x_ncl, params, pred_diff):
    N, C, L = x_ncl.shape
    w_all, b_all, g_all, be_all, K, Cmax = _pack_params(params)
    n_layers = w_all.shape[0]
    # Same-length conv (and hence the residual) requires K == 2*PAD + 1,
    # exactly like the PyTorch module with padding=2 and kernel_size=5.
    assert K == 2 * PAD + 1, "residual path requires kernel_size == 2*padding+1"

    # NCL -> NLC once, plus a single tiny channel pad up to Cmax.
    x_nlc = jnp.transpose(x_ncl, (0, 2, 1)).astype(jnp.float32)
    x_pad = jnp.pad(x_nlc, ((0, 0), (0, 0), (0, Cmax - C)))

    xoff = (PAD + 7) // 8 * 8
    xp_rows = xoff + L + 8                       # zero halo on both sides

    kernel = functools.partial(
        _cnn1d_fused_kernel, N=N, L=L, C=C, Cmax=Cmax, K=K,
        n_layers=n_layers, pred_diff=bool(pred_diff))

    out2d = pl.pallas_call(
        kernel,
        out_shape=jax.ShapeDtypeStruct((N * L, C), jnp.float32),
        grid=(1,),
        in_specs=[
            pl.BlockSpec((N, L, Cmax), lambda i: (0, 0, 0)),
            pl.BlockSpec(tuple(w_all.shape), lambda i: (0, 0, 0, 0)),
            pl.BlockSpec(tuple(b_all.shape), lambda i: (0, 0)),
            pl.BlockSpec(tuple(g_all.shape), lambda i: (0, 0)),
            pl.BlockSpec(tuple(be_all.shape), lambda i: (0, 0)),
        ],
        out_specs=pl.BlockSpec((N * L, C), lambda i: (0, 0)),
        scratch_shapes=[pltpu.VMEM((N, xp_rows, Cmax), jnp.float32)],
        compiler_params=pltpu.CompilerParams(
            dimension_semantics=("arbitrary",)),
    )(x_pad, w_all, b_all, g_all, be_all)

    out = out2d.reshape(N, L, C)
    return jnp.transpose(out, (0, 2, 1))         # NLC -> NCL


# ---------------------------------------------------------------------------
# Deterministic parameter initialization (shapes from the PyTorch __init__)
# ---------------------------------------------------------------------------
def init_params(key, kernel_size, in_channels):
    C = in_channels
    chans = [C, 2 * C, 4 * C, 8 * C, 4 * C, 2 * C, C]
    params = {"conv_bn": []}
    for i in range(5):
        cin, cout = chans[i], chans[i + 1]
        key, kw, kb, kg, kbe = jax.random.split(key, 5)
        w = 0.1 * jax.random.normal(kw, (kernel_size, cin, cout), jnp.float32)
        b = 0.1 * jax.random.normal(kb, (cout,), jnp.float32)
        g = 1.0 + 0.1 * jax.random.normal(kg, (cout,), jnp.float32)
        be = 0.1 * jax.random.normal(kbe, (cout,), jnp.float32)
        params["conv_bn"].append((w, b, g, be))
    cin, cout = chans[5], chans[6]
    key, kw, kb = jax.random.split(key, 3)
    w = 0.1 * jax.random.normal(kw, (kernel_size, cin, cout), jnp.float32)
    b = 0.1 * jax.random.normal(kb, (cout,), jnp.float32)
    params["conv_out"] = (w, b)
    return params


# ---------------------------------------------------------------------------
# Pure-JAX reference (independent path via lax.conv_general_dilated)
# ---------------------------------------------------------------------------
def ref_forward(x_ncl, params, pred_diff):
    def conv(x, w, b):  # x: (N, C, L), w: (K, Cin, Cout)
        w_oik = jnp.transpose(w, (2, 1, 0))  # (Cout, Cin, K)
        y = jax.lax.conv_general_dilated(
            x, w_oik, window_strides=(1,), padding=[(PAD, PAD)],
            dimension_numbers=("NCH", "OIH", "NCH"))
        return y + b[None, :, None]

    def bn(h, g, be):
        mean = jnp.mean(h, axis=(0, 2), keepdims=True)
        var = jnp.mean(jnp.square(h - mean), axis=(0, 2), keepdims=True)
        return (h - mean) / jnp.sqrt(var + BN_EPS) * g[None, :, None] \
            + be[None, :, None]

    x = x_ncl
    init = x
    for (w, b, g, be) in params["conv_bn"]:
        x = bn(jnp.maximum(conv(x, w, b), 0.0), g, be)
    w6, b6 = params["conv_out"]
    x = conv(x, w6, b6)
    if pred_diff:
        x = x + init
    return jax.nn.sigmoid(x)


# ---------------------------------------------------------------------------
if __name__ == "__main__":
    kernel_size, pred_diff, in_channels = 5, True, 4   # K=5, pad=2 -> same length
    N, L = 2, 16

    key = jax.random.PRNGKey(0)
    kx, kp = jax.random.split(key)
    x = jax.random.normal(kx, (N, in_channels, L), jnp.float32)   # PyTorch NCL
    params = init_params(kp, kernel_size, in_channels)

    fwd = jax.jit(cnn_1d_forward, static_argnames=("pred_diff",))
    out = fwd(x, params, pred_diff=pred_diff)
    out = jax.block_until_ready(out)
    assert out.shape == (N, in_channels, L), out.shape

    ref = ref_forward(x, params, pred_diff)
    err = float(jnp.max(jnp.abs(out - ref)))
    assert jnp.allclose(out, ref, atol=1e-4, rtol=1e-4), err

    print("KERNEL_OK")
</pallas_src>

<mosaic_0001>
module attributes {stable_mosaic.version = 11 : i64} {
  func.func @_cnn1d_fused_kernel(%arg0: i32, %arg1: memref<2x16x32xf32, #tpu.memory_space<vmem>>, %arg2: memref<6x5x32x32xf32, #tpu.memory_space<vmem>>, %arg3: memref<6x32xf32, #tpu.memory_space<vmem>>, %arg4: memref<6x32xf32, #tpu.memory_space<vmem>>, %arg5: memref<6x32xf32, #tpu.memory_space<vmem>>, %arg6: memref<32x4xf32, #tpu.memory_space<vmem>>, %arg7: memref<2x32x32xf32, #tpu.memory_space<vmem>>) attributes {dimension_semantics = [#tpu.dimension_semantics<arbitrary>], iteration_bounds = array<i64: 1>, scalar_prefetch = 0 : i64, scratch_operands = 1 : i64, tpu.core_type = #tpu.core_type<tc>, window_params = [{pipeline_mode = #tpu.pipeline_mode<synchronous>, transform_indices = @transform_0, window_bounds = array<i64: 2, 16, 32>}, {pipeline_mode = #tpu.pipeline_mode<synchronous>, transform_indices = @transform_1, window_bounds = array<i64: 6, 5, 32, 32>}, {pipeline_mode = #tpu.pipeline_mode<synchronous>, transform_indices = @transform_2, window_bounds = array<i64: 6, 32>}, {pipeline_mode = #tpu.pipeline_mode<synchronous>, transform_indices = @transform_3, window_bounds = array<i64: 6, 32>}, {pipeline_mode = #tpu.pipeline_mode<synchronous>, transform_indices = @transform_4, window_bounds = array<i64: 6, 32>}, {pipeline_mode = #tpu.pipeline_mode<synchronous>, transform_indices = @transform_5, window_bounds = array<i64: 32, 4>}]} {
    %cst = arith.constant 0.000000e+00 : f32
    %0 = vector.broadcast %cst : f32 to vector<2x32x32xf32>
    %c0 = arith.constant 0 : index
    %c0_0 = arith.constant 0 : index
    %c0_1 = arith.constant 0 : index
    %1 = vector.load %arg7[%c0, %c0_0, %c0_1] : memref<2x32x32xf32, #tpu.memory_space<vmem>>, vector<2x32x32xf32>
    tpu.vector_store %arg7[%c0, %c0_0, %c0_1], %0 {strides = array<i32>} : memref<2x32x32xf32, #tpu.memory_space<vmem>>, vector<2x32x32xf32>,
    %c0_2 = arith.constant 0 : index
    %c0_3 = arith.constant 0 : index
    %c0_4 = arith.constant 0 : index
    %2 = vector.load %arg1[%c0_2, %c0_3, %c0_4] : memref<2x16x32xf32, #tpu.memory_space<vmem>>, vector<2x16x32xf32>
    %c0_5 = arith.constant 0 : index
    %c8 = arith.constant 8 : index
    %c0_6 = arith.constant 0 : index
    %3 = vector.load %arg7[%c0_5, %c8, %c0_6] : memref<2x32x32xf32, #tpu.memory_space<vmem>>, vector<2x16x32xf32>
    tpu.vector_store %arg7[%c0_5, %c8, %c0_6], %2 {strides = array<i32>} : memref<2x32x32xf32, #tpu.memory_space<vmem>>, vector<2x16x32xf32>,
    %cst_7 = arith.constant 0.000000e+00 : f32
    %4 = vector.broadcast %cst_7 : f32 to vector<32x32xf32>
    %c0_8 = arith.constant 0 : index
    %c6 = arith.constant 6 : index
    %c0_9 = arith.constant 0 : index
    %5 = vector.load %arg7[%c0_8, %c6, %c0_9] : memref<2x32x32xf32, #tpu.memory_space<vmem>>, vector<2x16x32xf32>
    %6 = vector.shape_cast %5 : vector<2x16x32xf32> to vector<32x32xf32>
    %c0_10 = arith.constant 0 : index
    %c0_11 = arith.constant 0 : index
    %c0_12 = arith.constant 0 : index
    %c0_13 = arith.constant 0 : index
    %7 = vector.load %arg2[%c0_10, %c0_11, %c0_12, %c0_13] : memref<6x5x32x32xf32, #tpu.memory_space<vmem>>, vector<1x1x32x32xf32>
    %8 = vector.shape_cast %7 : vector<1x1x32x32xf32> to vector<32x32xf32>
    %cst_14 = arith.constant dense<0.000000e+00> : vector<32x32xf32>
    %9 = tpu.matmul %6, %8, %cst_14 {dimension_numbers = #tpu.dot_dimension_numbers<[1], [0], [0], [1], [0, 0, 1, 1], [], []>} : vector<32x32xf32>, vector<32x32xf32>, vector<32x32xf32> -> vector<32x32xf32>
    %10 = arith.addf %4, %9 : vector<32x32xf32>
    %c0_15 = arith.constant 0 : index
    %c7 = arith.constant 7 : index
    %c0_16 = arith.constant 0 : index
    %11 = vector.load %arg7[%c0_15, %c7, %c0_16] : memref<2x32x32xf32, #tpu.memory_space<vmem>>, vector<2x16x32xf32>
    %12 = vector.shape_cast %11 : vector<2x16x32xf32> to vector<32x32xf32>
    %c0_17 = arith.constant 0 : index
    %c1 = arith.constant 1 : index
    %c0_18 = arith.constant 0 : index
    %c0_19 = arith.constant 0 : index
    %13 = vector.load %arg2[%c0_17, %c1, %c0_18, %c0_19] : memref<6x5x32x32xf32, #tpu.memory_space<vmem>>, vector<1x1x32x32xf32>
    %14 = vector.shape_cast %13 : vector<1x1x32x32xf32> to vector<32x32xf32>
    %cst_20 = arith.constant dense<0.000000e+00> : vector<32x32xf32>
    %15 = tpu.matmul %12, %14, %cst_20 {dimension_numbers = #tpu.dot_dimension_numbers<[1], [0], [0], [1], [0, 0, 1, 1], [], []>} : vector<32x32xf32>, vector<32x32xf32>, vector<32x32xf32> -> vector<32x32xf32>
    %16 = arith.addf %10, %15 : vector<32x32xf32>
    %c0_21 = arith.constant 0 : index
    %c8_22 = arith.constant 8 : index
    %c0_23 = arith.constant 0 : index
    %17 = vector.load %arg7[%c0_21, %c8_22, %c0_23] : memref<2x32x32xf32, #tpu.memory_space<vmem>>, vector<2x16x32xf32>
    %18 = vector.shape_cast %17 : vector<2x16x32xf32> to vector<32x32xf32>
    %c0_24 = arith.constant 0 : index
    %c2 = arith.constant 2 : index
    %c0_25 = arith.constant 0 : index
    %c0_26 = arith.constant 0 : index
    %19 = vector.load %arg2[%c0_24, %c2, %c0_25, %c0_26] : memref<6x5x32x32xf32, #tpu.memory_space<vmem>>, vector<1x1x32x32xf32>
    %20 = vector.shape_cast %19 : vector<1x1x32x32xf32> to vector<32x32xf32>
    %cst_27 = arith.constant dense<0.000000e+00> : vector<32x32xf32>
    %21 = tpu.matmul %18, %20, %cst_27 {dimension_numbers = #tpu.dot_dimension_numbers<[1], [0], [0], [1], [0, 0, 1, 1], [], []>} : vector<32x32xf32>, vector<32x32xf32>, vector<32x32xf32> -> vector<32x32xf32>
    %22 = arith.addf %16, %21 : vector<32x32xf32>
    %c0_28 = arith.constant 0 : index
    %c9 = arith.constant 9 : index
    %c0_29 = arith.constant 0 : index
    %23 = vector.load %arg7[%c0_28, %c9, %c0_29] : memref<2x32x32xf32, #tpu.memory_space<vmem>>, vector<2x16x32xf32>
    %24 = vector.shape_cast %23 : vector<2x16x32xf32> to vector<32x32xf32>
    %c0_30 = arith.constant 0 : index
    %c3 = arith.constant 3 : index
    %c0_31 = arith.constant 0 : index
    %c0_32 = arith.constant 0 : index
    %25 = vector.load %arg2[%c0_30, %c3, %c0_31, %c0_32] : memref<6x5x32x32xf32, #tpu.memory_space<vmem>>, vector<1x1x32x32xf32>
    %26 = vector.shape_cast %25 : vector<1x1x32x32xf32> to vector<32x32xf32>
    %cst_33 = arith.constant dense<0.000000e+00> : vector<32x32xf32>
    %27 = tpu.matmul %24, %26, %cst_33 {dimension_numbers = #tpu.dot_dimension_numbers<[1], [0], [0], [1], [0, 0, 1, 1], [], []>} : vector<32x32xf32>, vector<32x32xf32>, vector<32x32xf32> -> vector<32x32xf32>
    %28 = arith.addf %22, %27 : vector<32x32xf32>
    %c0_34 = arith.constant 0 : index
    %c10 = arith.constant 10 : index
    %c0_35 = arith.constant 0 : index
    %29 = vector.load %arg7[%c0_34, %c10, %c0_35] : memref<2x32x32xf32, #tpu.memory_space<vmem>>, vector<2x16x32xf32>
    %30 = vector.shape_cast %29 : vector<2x16x32xf32> to vector<32x32xf32>
    %c0_36 = arith.constant 0 : index
    %c4 = arith.constant 4 : index
    %c0_37 = arith.constant 0 : index
    %c0_38 = arith.constant 0 : index
    %31 = vector.load %arg2[%c0_36, %c4, %c0_37, %c0_38] : memref<6x5x32x32xf32, #tpu.memory_space<vmem>>, vector<1x1x32x32xf32>
    %32 = vector.shape_cast %31 : vector<1x1x32x32xf32> to vector<32x32xf32>
    %cst_39 = arith.constant dense<0.000000e+00> : vector<32x32xf32>
    %33 = tpu.matmul %30, %32, %cst_39 {dimension_numbers = #tpu.dot_dimension_numbers<[1], [0], [0], [1], [0, 0, 1, 1], [], []>} : vector<32x32xf32>, vector<32x32xf32>, vector<32x32xf32> -> vector<32x32xf32>
    %34 = arith.addf %28, %33 : vector<32x32xf32>
    %c0_40 = arith.constant 0 : index
    %c0_41 = arith.constant 0 : index
    %35 = vector.load %arg3[%c0_40, %c0_41] : memref<6x32xf32, #tpu.memory_space<vmem>>, vector<1x32xf32>
    %36 = vector.broadcast %35 : vector<1x32xf32> to vector<32x32xf32>
    %37 = arith.addf %34, %36 : vector<32x32xf32>
    %cst_42 = arith.constant 0.000000e+00 : f32
    %38 = vector.broadcast %cst_42 : f32 to vector<32x32xf32>
    %39 = arith.maximumf %37, %38 : vector<32x32xf32>
    %cst_43 = arith.constant dense<0.000000e+00> : vector<32xf32>
    %40 = vector.multi_reduction <add>, %39, %cst_43 [0] : vector<32x32xf32> to vector<32xf32>
    %41 = vector.shape_cast %40 : vector<32xf32> to vector<1x32xf32>
    %cst_44 = arith.constant 3.200000e+01 : f32
    %42 = vector.broadcast %cst_44 : f32 to vector<1x32xf32>
    %43 = arith.divf %41, %42 : vector<1x32xf32>
    %44 = arith.mulf %39, %39 : vector<32x32xf32>
    %cst_45 = arith.constant dense<0.000000e+00> : vector<32xf32>
    %45 = vector.multi_reduction <add>, %44, %cst_45 [0] : vector<32x32xf32> to vector<32xf32>
    %46 = vector.shape_cast %45 : vector<32xf32> to vector<1x32xf32>
    %cst_46 = arith.constant 3.200000e+01 : f32
    %47 = vector.broadcast %cst_46 : f32 to vector<1x32xf32>
    %48 = arith.divf %46, %47 : vector<1x32xf32>
    %49 = arith.mulf %43, %43 : vector<1x32xf32>
    %50 = arith.subf %48, %49 : vector<1x32xf32>
    %51 = vector.broadcast %43 : vector<1x32xf32> to vector<32x32xf32>
    %52 = arith.subf %39, %51 : vector<32x32xf32>
    %cst_47 = arith.constant 9.99999974E-6 : f32
    %53 = vector.broadcast %cst_47 : f32 to vector<1x32xf32>
    %54 = arith.addf %50, %53 : vector<1x32xf32>
    %55 = math.rsqrt %54 : vector<1x32xf32>
    %56 = vector.broadcast %55 : vector<1x32xf32> to vector<32x32xf32>
    %57 = arith.mulf %52, %56 : vector<32x32xf32>
    %c0_48 = arith.constant 0 : index
    %c0_49 = arith.constant 0 : index
    %58 = vector.load %arg4[%c0_48, %c0_49] : memref<6x32xf32, #tpu.memory_space<vmem>>, vector<1x32xf32>
    %59 = vector.broadcast %58 : vector<1x32xf32> to vector<32x32xf32>
    %60 = arith.mulf %57, %59 : vector<32x32xf32>
    %c0_50 = arith.constant 0 : index
    %c0_51 = arith.constant 0 : index
    %61 = vector.load %arg5[%c0_50, %c0_51] : memref<6x32xf32, #tpu.memory_space<vmem>>, vector<1x32xf32>
    %62 = vector.broadcast %61 : vector<1x32xf32> to vector<32x32xf32>
    %63 = arith.addf %60, %62 : vector<32x32xf32>
    %64 = vector.shape_cast %63 : vector<32x32xf32> to vector<2x16x32xf32>
    %c0_52 = arith.constant 0 : index
    %c8_53 = arith.constant 8 : index
    %c0_54 = arith.constant 0 : index
    %65 = vector.load %arg7[%c0_52, %c8_53, %c0_54] : memref<2x32x32xf32, #tpu.memory_space<vmem>>, vector<2x16x32xf32>
    tpu.vector_store %arg7[%c0_52, %c8_53, %c0_54], %64 {strides = array<i32>} : memref<2x32x32xf32, #tpu.memory_space<vmem>>, vector<2x16x32xf32>,
    %cst_55 = arith.constant 0.000000e+00 : f32
    %66 = vector.broadcast %cst_55 : f32 to vector<32x32xf32>
    %c0_56 = arith.constant 0 : index
    %c6_57 = arith.constant 6 : index
    %c0_58 = arith.constant 0 : index
    %67 = vector.load %arg7[%c0_56, %c6_57, %c0_58] : memref<2x32x32xf32, #tpu.memory_space<vmem>>, vector<2x16x32xf32>
    %68 = vector.shape_cast %67 : vector<2x16x32xf32> to vector<32x32xf32>
    %c1_59 = arith.constant 1 : index
    %c0_60 = arith.constant 0 : index
    %c0_61 = arith.constant 0 : index
    %c0_62 = arith.constant 0 : index
    %69 = vector.load %arg2[%c1_59, %c0_60, %c0_61, %c0_62] : memref<6x5x32x32xf32, #tpu.memory_space<vmem>>, vector<1x1x32x32xf32>
    %70 = vector.shape_cast %69 : vector<1x1x32x32xf32> to vector<32x32xf32>
    %cst_63 = arith.constant dense<0.000000e+00> : vector<32x32xf32>
    %71 = tpu.matmul %68, %70, %cst_63 {dimension_numbers = #tpu.dot_dimension_numbers<[1], [0], [0], [1], [0, 0, 1, 1], [], []>} : vector<32x32xf32>, vector<32x32xf32>, vector<32x32xf32> -> vector<32x32xf32>
    %72 = arith.addf %66, %71 : vector<32x32xf32>
    %c0_64 = arith.constant 0 : index
    %c7_65 = arith.constant 7 : index
    %c0_66 = arith.constant 0 : index
    %73 = vector.load %arg7[%c0_64, %c7_65, %c0_66] : memref<2x32x32xf32, #tpu.memory_space<vmem>>, vector<2x16x32xf32>
    %74 = vector.shape_cast %73 : vector<2x16x32xf32> to vector<32x32xf32>
    %c1_67 = arith.constant 1 : index
    %c1_68 = arith.constant 1 : index
    %c0_69 = arith.constant 0 : index
    %c0_70 = arith.constant 0 : index
    %75 = vector.load %arg2[%c1_67, %c1_68, %c0_69, %c0_70] : memref<6x5x32x32xf32, #tpu.memory_space<vmem>>, vector<1x1x32x32xf32>
    %76 = vector.shape_cast %75 : vector<1x1x32x32xf32> to vector<32x32xf32>
    %cst_71 = arith.constant dense<0.000000e+00> : vector<32x32xf32>
    %77 = tpu.matmul %74, %76, %cst_71 {dimension_numbers = #tpu.dot_dimension_numbers<[1], [0], [0], [1], [0, 0, 1, 1], [], []>} : vector<32x32xf32>, vector<32x32xf32>, vector<32x32xf32> -> vector<32x32xf32>
    %78 = arith.addf %72, %77 : vector<32x32xf32>
    %c0_72 = arith.constant 0 : index
    %c8_73 = arith.constant 8 : index
    %c0_74 = arith.constant 0 : index
    %79 = vector.load %arg7[%c0_72, %c8_73, %c0_74] : memref<2x32x32xf32, #tpu.memory_space<vmem>>, vector<2x16x32xf32>
    %80 = vector.shape_cast %79 : vector<2x16x32xf32> to vector<32x32xf32>
    %c1_75 = arith.constant 1 : index
    %c2_76 = arith.constant 2 : index
    %c0_77 = arith.constant 0 : index
    %c0_78 = arith.constant 0 : index
    %81 = vector.load %arg2[%c1_75, %c2_76, %c0_77, %c0_78] : memref<6x5x32x32xf32, #tpu.memory_space<vmem>>, vector<1x1x32x32xf32>
    %82 = vector.shape_cast %81 : vector<1x1x32x32xf32> to vector<32x32xf32>
    %cst_79 = arith.constant dense<0.000000e+00> : vector<32x32xf32>
    %83 = tpu.matmul %80, %82, %cst_79 {dimension_numbers = #tpu.dot_dimension_numbers<[1], [0], [0], [1], [0, 0, 1, 1], [], []>} : vector<32x32xf32>, vector<32x32xf32>, vector<32x32xf32> -> vector<32x32xf32>
    %84 = arith.addf %78, %83 : vector<32x32xf32>
    %c0_80 = arith.constant 0 : index
    %c9_81 = arith.constant 9 : index
    %c0_82 = arith.constant 0 : index
    %85 = vector.load %arg7[%c0_80, %c9_81, %c0_82] : memref<2x32x32xf32, #tpu.memory_space<vmem>>, vector<2x16x32xf32>
    %86 = vector.shape_cast %85 : vector<2x16x32xf32> to vector<32x32xf32>
    %c1_83 = arith.constant 1 : index
    %c3_84 = arith.constant 3 : index
    %c0_85 = arith.constant 0 : index
    %c0_86 = arith.constant 0 : index
    %87 = vector.load %arg2[%c1_83, %c3_84, %c0_85, %c0_86] : memref<6x5x32x32xf32, #tpu.memory_space<vmem>>, vector<1x1x32x32xf32>
    %88 = vector.shape_cast %87 : vector<1x1x32x32xf32> to vector<32x32xf32>
    %cst_87 = arith.constant dense<0.000000e+00> : vector<32x32xf32>
    %89 = tpu.matmul %86, %88, %cst_87 {dimension_numbers = #tpu.dot_dimension_numbers<[1], [0], [0], [1], [0, 0, 1, 1], [], []>} : vector<32x32xf32>, vector<32x32xf32>, vector<32x32xf32> -> vector<32x32xf32>
    %90 = arith.addf %84, %89 : vector<32x32xf32>
    %c0_88 = arith.constant 0 : index
    %c10_89 = arith.constant 10 : index
    %c0_90 = arith.constant 0 : index
    %91 = vector.load %arg7[%c0_88, %c10_89, %c0_90] : memref<2x32x32xf32, #tpu.memory_space<vmem>>, vector<2x16x32xf32>
    %92 = vector.shape_cast %91 : vector<2x16x32xf32> to vector<32x32xf32>
    %c1_91 = arith.constant 1 : index
    %c4_92 = arith.constant 4 : index
    %c0_93 = arith.constant 0 : index
    %c0_94 = arith.constant 0 : index
    %93 = vector.load %arg2[%c1_91, %c4_92, %c0_93, %c0_94] : memref<6x5x32x32xf32, #tpu.memory_space<vmem>>, vector<1x1x32x32xf32>
    %94 = vector.shape_cast %93 : vector<1x1x32x32xf32> to vector<32x32xf32>
    %cst_95 = arith.constant dense<0.000000e+00> : vector<32x32xf32>
    %95 = tpu.matmul %92, %94, %cst_95 {dimension_numbers = #tpu.dot_dimension_numbers<[1], [0], [0], [1], [0, 0, 1, 1], [], []>} : vector<32x32xf32>, vector<32x32xf32>, vector<32x32xf32> -> vector<32x32xf32>
    %96 = arith.addf %90, %95 : vector<32x32xf32>
    %c1_96 = arith.constant 1 : index
    %c0_97 = arith.constant 0 : index
    %97 = vector.load %arg3[%c1_96, %c0_97] : memref<6x32xf32, #tpu.memory_space<vmem>>, vector<1x32xf32>
    %98 = vector.broadcast %97 : vector<1x32xf32> to vector<32x32xf32>
    %99 = arith.addf %96, %98 : vector<32x32xf32>
    %cst_98 = arith.constant 0.000000e+00 : f32
    %100 = vector.broadcast %cst_98 : f32 to vector<32x32xf32>
    %101 = arith.maximumf %99, %100 : vector<32x32xf32>
    %cst_99 = arith.constant dense<0.000000e+00> : vector<32xf32>
    %102 = vector.multi_reduction <add>, %101, %cst_99 [0] : vector<32x32xf32> to vector<32xf32>
    %103 = vector.shape_cast %102 : vector<32xf32> to vector<1x32xf32>
    %cst_100 = arith.constant 3.200000e+01 : f32
    %104 = vector.broadcast %cst_100 : f32 to vector<1x32xf32>
    %105 = arith.divf %103, %104 : vector<1x32xf32>
    %106 = arith.mulf %101, %101 : vector<32x32xf32>
    %cst_101 = arith.constant dense<0.000000e+00> : vector<32xf32>
    %107 = vector.multi_reduction <add>, %106, %cst_101 [0] : vector<32x32xf32> to vector<32xf32>
    %108 = vector.shape_cast %107 : vector<32xf32> to vector<1x32xf32>
    %cst_102 = arith.constant 3.200000e+01 : f32
    %109 = vector.broadcast %cst_102 : f32 to vector<1x32xf32>
    %110 = arith.divf %108, %109 : vector<1x32xf32>
    %111 = arith.mulf %105, %105 : vector<1x32xf32>
    %112 = arith.subf %110, %111 : vector<1x32xf32>
    %113 = vector.broadcast %105 : vector<1x32xf32> to vector<32x32xf32>
    %114 = arith.subf %101, %113 : vector<32x32xf32>
    %cst_103 = arith.constant 9.99999974E-6 : f32
    %115 = vector.broadcast %cst_103 : f32 to vector<1x32xf32>
    %116 = arith.addf %112, %115 : vector<1x32xf32>
    %117 = math.rsqrt %116 : vector<1x32xf32>
    %118 = vector.broadcast %117 : vector<1x32xf32> to vector<32x32xf32>
    %119 = arith.mulf %114, %118 : vector<32x32xf32>
    %c1_104 = arith.constant 1 : index
    %c0_105 = arith.constant 0 : index
    %120 = vector.load %arg4[%c1_104, %c0_105] : memref<6x32xf32, #tpu.memory_space<vmem>>, vector<1x32xf32>
    %121 = vector.broadcast %120 : vector<1x32xf32> to vector<32x32xf32>
    %122 = arith.mulf %119, %121 : vector<32x32xf32>
    %c1_106 = arith.constant 1 : index
    %c0_107 = arith.constant 0 : index
    %123 = vector.load %arg5[%c1_106, %c0_107] : memref<6x32xf32, #tpu.memory_space<vmem>>, vector<1x32xf32>
    %124 = vector.broadcast %123 : vector<1x32xf32> to vector<32x32xf32>
    %125 = arith.addf %122, %124 : vector<32x32xf32>
    %126 = vector.shape_cast %125 : vector<32x32xf32> to vector<2x16x32xf32>
    %c0_108 = arith.constant 0 : index
    %c8_109 = arith.constant 8 : index
    %c0_110 = arith.constant 0 : index
    %127 = vector.load %arg7[%c0_108, %c8_109, %c0_110] : memref<2x32x32xf32, #tpu.memory_space<vmem>>, vector<2x16x32xf32>
    tpu.vector_store %arg7[%c0_108, %c8_109, %c0_110], %126 {strides = array<i32>} : memref<2x32x32xf32, #tpu.memory_space<vmem>>, vector<2x16x32xf32>,
    %cst_111 = arith.constant 0.000000e+00 : f32
    %128 = vector.broadcast %cst_111 : f32 to vector<32x32xf32>
    %c0_112 = arith.constant 0 : index
    %c6_113 = arith.constant 6 : index
    %c0_114 = arith.constant 0 : index
    %129 = vector.load %arg7[%c0_112, %c6_113, %c0_114] : memref<2x32x32xf32, #tpu.memory_space<vmem>>, vector<2x16x32xf32>
    %130 = vector.shape_cast %129 : vector<2x16x32xf32> to vector<32x32xf32>
    %c2_115 = arith.constant 2 : index
    %c0_116 = arith.constant 0 : index
    %c0_117 = arith.constant 0 : index
    %c0_118 = arith.constant 0 : index
    %131 = vector.load %arg2[%c2_115, %c0_116, %c0_117, %c0_118] : memref<6x5x32x32xf32, #tpu.memory_space<vmem>>, vector<1x1x32x32xf32>
    %132 = vector.shape_cast %131 : vector<1x1x32x32xf32> to vector<32x32xf32>
    %cst_119 = arith.constant dense<0.000000e+00> : vector<32x32xf32>
    %133 = tpu.matmul %130, %132, %cst_119 {dimension_numbers = #tpu.dot_dimension_numbers<[1], [0], [0], [1], [0, 0, 1, 1], [], []>} : vector<32x32xf32>, vector<32x32xf32>, vector<32x32xf32> -> vector<32x32xf32>
    %134 = arith.addf %128, %133 : vector<32x32xf32>
    %c0_120 = arith.constant 0 : index
    %c7_121 = arith.constant 7 : index
    %c0_122 = arith.constant 0 : index
    %135 = vector.load %arg7[%c0_120, %c7_121, %c0_122] : memref<2x32x32xf32, #tpu.memory_space<vmem>>, vector<2x16x32xf32>
    %136 = vector.shape_cast %135 : vector<2x16x32xf32> to vector<32x32xf32>
    %c2_123 = arith.constant 2 : index
    %c1_124 = arith.constant 1 : index
    %c0_125 = arith.constant 0 : index
    %c0_126 = arith.constant 0 : index
    %137 = vector.load %arg2[%c2_123, %c1_124, %c0_125, %c0_126] : memref<6x5x32x32xf32, #tpu.memory_space<vmem>>, vector<1x1x32x32xf32>
    %138 = vector.shape_cast %137 : vector<1x1x32x32xf32> to vector<32x32xf32>
    %cst_127 = arith.constant dense<0.000000e+00> : vector<32x32xf32>
    %139 = tpu.matmul %136, %138, %cst_127 {dimension_numbers = #tpu.dot_dimension_numbers<[1], [0], [0], [1], [0, 0, 1, 1], [], []>} : vector<32x32xf32>, vector<32x32xf32>, vector<32x32xf32> -> vector<32x32xf32>
    %140 = arith.addf %134, %139 : vector<32x32xf32>
    %c0_128 = arith.constant 0 : index
    %c8_129 = arith.constant 8 : index
    %c0_130 = arith.constant 0 : index
    %141 = vector.load %arg7[%c0_128, %c8_129, %c0_130] : memref<2x32x32xf32, #tpu.memory_space<vmem>>, vector<2x16x32xf32>
    %142 = vector.shape_cast %141 : vector<2x16x32xf32> to vector<32x32xf32>
    %c2_131 = arith.constant 2 : index
    %c2_132 = arith.constant 2 : index
    %c0_133 = arith.constant 0 : index
    %c0_134 = arith.constant 0 : index
    %143 = vector.load %arg2[%c2_131, %c2_132, %c0_133, %c0_134] : memref<6x5x32x32xf32, #tpu.memory_space<vmem>>, vector<1x1x32x32xf32>
    %144 = vector.shape_cast %143 : vector<1x1x32x32xf32> to vector<32x32xf32>
    %cst_135 = arith.constant dense<0.000000e+00> : vector<32x32xf32>
    %145 = tpu.matmul %142, %144, %cst_135 {dimension_numbers = #tpu.dot_dimension_numbers<[1], [0], [0], [1], [0, 0, 1, 1], [], []>} : vector<32x32xf32>, vector<32x32xf32>, vector<32x32xf32> -> vector<32x32xf32>
    %146 = arith.addf %140, %145 : vector<32x32xf32>
    %c0_136 = arith.constant 0 : index
    %c9_137 = arith.constant 9 : index
    %c0_138 = arith.constant 0 : index
    %147 = vector.load %arg7[%c0_136, %c9_137, %c0_138] : memref<2x32x32xf32, #tpu.memory_space<vmem>>, vector<2x16x32xf32>
    %148 = vector.shape_cast %147 : vector<2x16x32xf32> to vector<32x32xf32>
    %c2_139 = arith.constant 2 : index
    %c3_140 = arith.constant 3 : index
    %c0_141 = arith.constant 0 : index
    %c0_142 = arith.constant 0 : index
    %149 = vector.load %arg2[%c2_139, %c3_140, %c0_141, %c0_142] : memref<6x5x32x32xf32, #tpu.memory_space<vmem>>, vector<1x1x32x32xf32>
    %150 = vector.shape_cast %149 : vector<1x1x32x32xf32> to vector<32x32xf32>
    %cst_143 = arith.constant dense<0.000000e+00> : vector<32x32xf32>
    %151 = tpu.matmul %148, %150, %cst_143 {dimension_numbers = #tpu.dot_dimension_numbers<[1], [0], [0], [1], [0, 0, 1, 1], [], []>} : vector<32x32xf32>, vector<32x32xf32>, vector<32x32xf32> -> vector<32x32xf32>
    %152 = arith.addf %146, %151 : vector<32x32xf32>
    %c0_144 = arith.constant 0 : index
    %c10_145 = arith.constant 10 : index
    %c0_146 = arith.constant 0 : index
    %153 = vector.load %arg7[%c0_144, %c10_145, %c0_146] : memref<2x32x32xf32, #tpu.memory_space<vmem>>, vector<2x16x32xf32>
    %154 = vector.shape_cast %153 : vector<2x16x32xf32> to vector<32x32xf32>
    %c2_147 = arith.constant 2 : index
    %c4_148 = arith.constant 4 : index
    %c0_149 = arith.constant 0 : index
    %c0_150 = arith.constant 0 : index
    %155 = vector.load %arg2[%c2_147, %c4_148, %c0_149, %c0_150] : memref<6x5x32x32xf32, #tpu.memory_space<vmem>>, vector<1x1x32x32xf32>
    %156 = vector.shape_cast %155 : vector<1x1x32x32xf32> to vector<32x32xf32>
    %cst_151 = arith.constant dense<0.000000e+00> : vector<32x32xf32>
    %157 = tpu.matmul %154, %156, %cst_151 {dimension_numbers = #tpu.dot_dimension_numbers<[1], [0], [0], [1], [0, 0, 1, 1], [], []>} : vector<32x32xf32>, vector<32x32xf32>, vector<32x32xf32> -> vector<32x32xf32>
    %158 = arith.addf %152, %157 : vector<32x32xf32>
    %c2_152 = arith.constant 2 : index
    %c0_153 = arith.constant 0 : index
    %159 = vector.load %arg3[%c2_152, %c0_153] : memref<6x32xf32, #tpu.memory_space<vmem>>, vector<1x32xf32>
    %160 = vector.broadcast %159 : vector<1x32xf32> to vector<32x32xf32>
    %161 = arith.addf %158, %160 : vector<32x32xf32>
    %cst_154 = arith.constant 0.000000e+00 : f32
    %162 = vector.broadcast %cst_154 : f32 to vector<32x32xf32>
    %163 = arith.maximumf %161, %162 : vector<32x32xf32>
    %cst_155 = arith.constant dense<0.000000e+00> : vector<32xf32>
    %164 = vector.multi_reduction <add>, %163, %cst_155 [0] : vector<32x32xf32> to vector<32xf32>
    %165 = vector.shape_cast %164 : vector<32xf32> to vector<1x32xf32>
    %cst_156 = arith.constant 3.200000e+01 : f32
    %166 = vector.broadcast %cst_156 : f32 to vector<1x32xf32>
    %167 = arith.divf %165, %166 : vector<1x32xf32>
    %168 = arith.mulf %163, %163 : vector<32x32xf32>
    %cst_157 = arith.constant dense<0.000000e+00> : vector<32xf32>
    %169 = vector.multi_reduction <add>, %168, %cst_157 [0] : vector<32x32xf32> to vector<32xf32>
    %170 = vector.shape_cast %169 : vector<32xf32> to vector<1x32xf32>
    %cst_158 = arith.constant 3.200000e+01 : f32
    %171 = vector.broadcast %cst_158 : f32 to vector<1x32xf32>
    %172 = arith.divf %170, %171 : vector<1x32xf32>
    %173 = arith.mulf %167, %167 : vector<1x32xf32>
    %174 = arith.subf %172, %173 : vector<1x32xf32>
    %175 = vector.broadcast %167 : vector<1x32xf32> to vector<32x32xf32>
    %176 = arith.subf %163, %175 : vector<32x32xf32>
    %cst_159 = arith.constant 9.99999974E-6 : f32
    %177 = vector.broadcast %cst_159 : f32 to vector<1x32xf32>
    %178 = arith.addf %174, %177 : vector<1x32xf32>
    %179 = math.rsqrt %178 : vector<1x32xf32>
    %180 = vector.broadcast %179 : vector<1x32xf32> to vector<32x32xf32>
    %181 = arith.mulf %176, %180 : vector<32x32xf32>
    %c2_160 = arith.constant 2 : index
    %c0_161 = arith.constant 0 : index
    %182 = vector.load %arg4[%c2_160, %c0_161] : memref<6x32xf32, #tpu.memory_space<vmem>>, vector<1x32xf32>
    %183 = vector.broadcast %182 : vector<1x32xf32> to vector<32x32xf32>
    %184 = arith.mulf %181, %183 : vector<32x32xf32>
    %c2_162 = arith.constant 2 : index
    %c0_163 = arith.constant 0 : index
    %185 = vector.load %arg5[%c2_162, %c0_163] : memref<6x32xf32, #tpu.memory_space<vmem>>, vector<1x32xf32>
    %186 = vector.broadcast %185 : vector<1x32xf32> to vector<32x32xf32>
    %187 = arith.addf %184, %186 : vector<32x32xf32>
    %188 = vector.shape_cast %187 : vector<32x32xf32> to vector<2x16x32xf32>
    %c0_164 = arith.constant 0 : index
    %c8_165 = arith.constant 8 : index
    %c0_166 = arith.constant 0 : index
    %189 = vector.load %arg7[%c0_164, %c8_165, %c0_166] : memref<2x32x32xf32, #tpu.memory_space<vmem>>, vector<2x16x32xf32>
    tpu.vector_store %arg7[%c0_164, %c8_165, %c0_166], %188 {strides = array<i32>} : memref<2x32x32xf32, #tpu.memory_space<vmem>>, vector<2x16x32xf32>,
    %cst_167 = arith.constant 0.000000e+00 : f32
    %190 = vector.broadcast %cst_167 : f32 to vector<32x32xf32>
    %c0_168 = arith.constant 0 : index
    %c6_169 = arith.constant 6 : index
    %c0_170 = arith.constant 0 : index
    %191 = vector.load %arg7[%c0_168, %c6_169, %c0_170] : memref<2x32x32xf32, #tpu.memory_space<vmem>>, vector<2x16x32xf32>
    %192 = vector.shape_cast %191 : vector<2x16x32xf32> to vector<32x32xf32>
    %c3_171 = arith.constant 3 : index
    %c0_172 = arith.constant 0 : index
    %c0_173 = arith.constant 0 : index
    %c0_174 = arith.constant 0 : index
    %193 = vector.load %arg2[%c3_171, %c0_172, %c0_173, %c0_174] : memref<6x5x32x32xf32, #tpu.memory_space<vmem>>, vector<1x1x32x32xf32>
    %194 = vector.shape_cast %193 : vector<1x1x32x32xf32> to vector<32x32xf32>
    %cst_175 = arith.constant dense<0.000000e+00> : vector<32x32xf32>
    %195 = tpu.matmul %192, %194, %cst_175 {dimension_numbers = #tpu.dot_dimension_numbers<[1], [0], [0], [1], [0, 0, 1, 1], [], []>} : vector<32x32xf32>, vector<32x32xf32>, vector<32x32xf32> -> vector<32x32xf32>
    %196 = arith.addf %190, %195 : vector<32x32xf32>
    %c0_176 = arith.constant 0 : index
    %c7_177 = arith.constant 7 : index
    %c0_178 = arith.constant 0 : index
    %197 = vector.load %arg7[%c0_176, %c7_177, %c0_178] : memref<2x32x32xf32, #tpu.memory_space<vmem>>, vector<2x16x32xf32>
    %198 = vector.shape_cast %197 : vector<2x16x32xf32> to vector<32x32xf32>
    %c3_179 = arith.constant 3 : index
    %c1_180 = arith.constant 1 : index
    %c0_181 = arith.constant 0 : index
    %c0_182 = arith.constant 0 : index
    %199 = vector.load %arg2[%c3_179, %c1_180, %c0_181, %c0_182] : memref<6x5x32x32xf32, #tpu.memory_space<vmem>>, vector<1x1x32x32xf32>
    %200 = vector.shape_cast %199 : vector<1x1x32x32xf32> to vector<32x32xf32>
    %cst_183 = arith.constant dense<0.000000e+00> : vector<32x32xf32>
    %201 = tpu.matmul %198, %200, %cst_183 {dimension_numbers = #tpu.dot_dimension_numbers<[1], [0], [0], [1], [0, 0, 1, 1], [], []>} : vector<32x32xf32>, vector<32x32xf32>, vector<32x32xf32> -> vector<32x32xf32>
    %202 = arith.addf %196, %201 : vector<32x32xf32>
    %c0_184 = arith.constant 0 : index
    %c8_185 = arith.constant 8 : index
    %c0_186 = arith.constant 0 : index
    %203 = vector.load %arg7[%c0_184, %c8_185, %c0_186] : memref<2x32x32xf32, #tpu.memory_space<vmem>>, vector<2x16x32xf32>
    %204 = vector.shape_cast %203 : vector<2x16x32xf32> to vector<32x32xf32>
    %c3_187 = arith.constant 3 : index
    %c2_188 = arith.constant 2 : index
    %c0_189 = arith.constant 0 : index
    %c0_190 = arith.constant 0 : index
    %205 = vector.load %arg2[%c3_187, %c2_188, %c0_189, %c0_190] : memref<6x5x32x32xf32, #tpu.memory_space<vmem>>, vector<1x1x32x32xf32>
    %206 = vector.shape_cast %205 : vector<1x1x32x32xf32> to vector<32x32xf32>
    %cst_191 = arith.constant dense<0.000000e+00> : vector<32x32xf32>
    %207 = tpu.matmul %204, %206, %cst_191 {dimension_numbers = #tpu.dot_dimension_numbers<[1], [0], [0], [1], [0, 0, 1, 1], [], []>} : vector<32x32xf32>, vector<32x32xf32>, vector<32x32xf32> -> vector<32x32xf32>
    %208 = arith.addf %202, %207 : vector<32x32xf32>
    %c0_192 = arith.constant 0 : index
    %c9_193 = arith.constant 9 : index
    %c0_194 = arith.constant 0 : index
    %209 = vector.load %arg7[%c0_192, %c9_193, %c0_194] : memref<2x32x32xf32, #tpu.memory_space<vmem>>, vector<2x16x32xf32>
    %210 = vector.shape_cast %209 : vector<2x16x32xf32> to vector<32x32xf32>
    %c3_195 = arith.constant 3 : index
    %c3_196 = arith.constant 3 : index
    %c0_197 = arith.constant 0 : index
    %c0_198 = arith.constant 0 : index
    %211 = vector.load %arg2[%c3_195, %c3_196, %c0_197, %c0_198] : memref<6x5x32x32xf32, #tpu.memory_space<vmem>>, vector<1x1x32x32xf32>
    %212 = vector.shape_cast %211 : vector<1x1x32x32xf32> to vector<32x32xf32>
    %cst_199 = arith.constant dense<0.000000e+00> : vector<32x32xf32>
    %213 = tpu.matmul %210, %212, %cst_199 {dimension_numbers = #tpu.dot_dimension_numbers<[1], [0], [0], [1], [0, 0, 1, 1], [], []>} : vector<32x32xf32>, vector<32x32xf32>, vector<32x32xf32> -> vector<32x32xf32>
    %214 = arith.addf %208, %213 : vector<32x32xf32>
    %c0_200 = arith.constant 0 : index
    %c10_201 = arith.constant 10 : index
    %c0_202 = arith.constant 0 : index
    %215 = vector.load %arg7[%c0_200, %c10_201, %c0_202] : memref<2x32x32xf32, #tpu.memory_space<vmem>>, vector<2x16x32xf32>
    %216 = vector.shape_cast %215 : vector<2x16x32xf32> to vector<32x32xf32>
    %c3_203 = arith.constant 3 : index
    %c4_204 = arith.constant 4 : index
    %c0_205 = arith.constant 0 : index
    %c0_206 = arith.constant 0 : index
    %217 = vector.load %arg2[%c3_203, %c4_204, %c0_205, %c0_206] : memref<6x5x32x32xf32, #tpu.memory_space<vmem>>, vector<1x1x32x32xf32>
    %218 = vector.shape_cast %217 : vector<1x1x32x32xf32> to vector<32x32xf32>
    %cst_207 = arith.constant dense<0.000000e+00> : vector<32x32xf32>
    %219 = tpu.matmul %216, %218, %cst_207 {dimension_numbers = #tpu.dot_dimension_numbers<[1], [0], [0], [1], [0, 0, 1, 1], [], []>} : vector<32x32xf32>, vector<32x32xf32>, vector<32x32xf32> -> vector<32x32xf32>
    %220 = arith.addf %214, %219 : vector<32x32xf32>
    %c3_208 = arith.constant 3 : index
    %c0_209 = arith.constant 0 : index
    %221 = vector.load %arg3[%c3_208, %c0_209] : memref<6x32xf32, #tpu.memory_space<vmem>>, vector<1x32xf32>
    %222 = vector.broadcast %221 : vector<1x32xf32> to vector<32x32xf32>
    %223 = arith.addf %220, %222 : vector<32x32xf32>
    %cst_210 = arith.constant 0.000000e+00 : f32
    %224 = vector.broadcast %cst_210 : f32 to vector<32x32xf32>
    %225 = arith.maximumf %223, %224 : vector<32x32xf32>
    %cst_211 = arith.constant dense<0.000000e+00> : vector<32xf32>
    %226 = vector.multi_reduction <add>, %225, %cst_211 [0] : vector<32x32xf32> to vector<32xf32>
    %227 = vector.shape_cast %226 : vector<32xf32> to vector<1x32xf32>
    %cst_212 = arith.constant 3.200000e+01 : f32
    %228 = vector.broadcast %cst_212 : f32 to vector<1x32xf32>
    %229 = arith.divf %227, %228 : vector<1x32xf32>
    %230 = arith.mulf %225, %225 : vector<32x32xf32>
    %cst_213 = arith.constant dense<0.000000e+00> : vector<32xf32>
    %231 = vector.multi_reduction <add>, %230, %cst_213 [0] : vector<32x32xf32> to vector<32xf32>
    %232 = vector.shape_cast %231 : vector<32xf32> to vector<1x32xf32>
    %cst_214 = arith.constant 3.200000e+01 : f32
    %233 = vector.broadcast %cst_214 : f32 to vector<1x32xf32>
    %234 = arith.divf %232, %233 : vector<1x32xf32>
    %235 = arith.mulf %229, %229 : vector<1x32xf32>
    %236 = arith.subf %234, %235 : vector<1x32xf32>
    %237 = vector.broadcast %229 : vector<1x32xf32> to vector<32x32xf32>
    %238 = arith.subf %225, %237 : vector<32x32xf32>
    %cst_215 = arith.constant 9.99999974E-6 : f32
    %239 = vector.broadcast %cst_215 : f32 to vector<1x32xf32>
    %240 = arith.addf %236, %239 : vector<1x32xf32>
    %241 = math.rsqrt %240 : vector<1x32xf32>
    %242 = vector.broadcast %241 : vector<1x32xf32> to vector<32x32xf32>
    %243 = arith.mulf %238, %242 : vector<32x32xf32>
    %c3_216 = arith.constant 3 : index
    %c0_217 = arith.constant 0 : index
    %244 = vector.load %arg4[%c3_216, %c0_217] : memref<6x32xf32, #tpu.memory_space<vmem>>, vector<1x32xf32>
    %245 = vector.broadcast %244 : vector<1x32xf32> to vector<32x32xf32>
    %246 = arith.mulf %243, %245 : vector<32x32xf32>
    %c3_218 = arith.constant 3 : index
    %c0_219 = arith.constant 0 : index
    %247 = vector.load %arg5[%c3_218, %c0_219] : memref<6x32xf32, #tpu.memory_space<vmem>>, vector<1x32xf32>
    %248 = vector.broadcast %247 : vector<1x32xf32> to vector<32x32xf32>
    %249 = arith.addf %246, %248 : vector<32x32xf32>
    %250 = vector.shape_cast %249 : vector<32x32xf32> to vector<2x16x32xf32>
    %c0_220 = arith.constant 0 : index
    %c8_221 = arith.constant 8 : index
    %c0_222 = arith.constant 0 : index
    %251 = vector.load %arg7[%c0_220, %c8_221, %c0_222] : memref<2x32x32xf32, #tpu.memory_space<vmem>>, vector<2x16x32xf32>
    tpu.vector_store %arg7[%c0_220, %c8_221, %c0_222], %250 {strides = array<i32>} : memref<2x32x32xf32, #tpu.memory_space<vmem>>, vector<2x16x32xf32>,
    %cst_223 = arith.constant 0.000000e+00 : f32
    %252 = vector.broadcast %cst_223 : f32 to vector<32x32xf32>
    %c0_224 = arith.constant 0 : index
    %c6_225 = arith.constant 6 : index
    %c0_226 = arith.constant 0 : index
    %253 = vector.load %arg7[%c0_224, %c6_225, %c0_226] : memref<2x32x32xf32, #tpu.memory_space<vmem>>, vector<2x16x32xf32>
    %254 = vector.shape_cast %253 : vector<2x16x32xf32> to vector<32x32xf32>
    %c4_227 = arith.constant 4 : index
    %c0_228 = arith.constant 0 : index
    %c0_229 = arith.constant 0 : index
    %c0_230 = arith.constant 0 : index
    %255 = vector.load %arg2[%c4_227, %c0_228, %c0_229, %c0_230] : memref<6x5x32x32xf32, #tpu.memory_space<vmem>>, vector<1x1x32x32xf32>
    %256 = vector.shape_cast %255 : vector<1x1x32x32xf32> to vector<32x32xf32>
    %cst_231 = arith.constant dense<0.000000e+00> : vector<32x32xf32>
    %257 = tpu.matmul %254, %256, %cst_231 {dimension_numbers = #tpu.dot_dimension_numbers<[1], [0], [0], [1], [0, 0, 1, 1], [], []>} : vector<32x32xf32>, vector<32x32xf32>, vector<32x32xf32> -> vector<32x32xf32>
    %258 = arith.addf %252, %257 : vector<32x32xf32>
    %c0_232 = arith.constant 0 : index
    %c7_233 = arith.constant 7 : index
    %c0_234 = arith.constant 0 : index
    %259 = vector.load %arg7[%c0_232, %c7_233, %c0_234] : memref<2x32x32xf32, #tpu.memory_space<vmem>>, vector<2x16x32xf32>
    %260 = vector.shape_cast %259 : vector<2x16x32xf32> to vector<32x32xf32>
    %c4_235 = arith.constant 4 : index
    %c1_236 = arith.constant 1 : index
    %c0_237 = arith.constant 0 : index
    %c0_238 = arith.constant 0 : index
    %261 = vector.load %arg2[%c4_235, %c1_236, %c0_237, %c0_238] : memref<6x5x32x32xf32, #tpu.memory_space<vmem>>, vector<1x1x32x32xf32>
    %262 = vector.shape_cast %261 : vector<1x1x32x32xf32> to vector<32x32xf32>
    %cst_239 = arith.constant dense<0.000000e+00> : vector<32x32xf32>
    %263 = tpu.matmul %260, %262, %cst_239 {dimension_numbers = #tpu.dot_dimension_numbers<[1], [0], [0], [1], [0, 0, 1, 1], [], []>} : vector<32x32xf32>, vector<32x32xf32>, vector<32x32xf32> -> vector<32x32xf32>
    %264 = arith.addf %258, %263 : vector<32x32xf32>
    %c0_240 = arith.constant 0 : index
    %c8_241 = arith.constant 8 : index
    %c0_242 = arith.constant 0 : index
    %265 = vector.load %arg7[%c0_240, %c8_241, %c0_242] : memref<2x32x32xf32, #tpu.memory_space<vmem>>, vector<2x16x32xf32>
    %266 = vector.shape_cast %265 : vector<2x16x32xf32> to vector<32x32xf32>
    %c4_243 = arith.constant 4 : index
    %c2_244 = arith.constant 2 : index
    %c0_245 = arith.constant 0 : index
    %c0_246 = arith.constant 0 : index
    %267 = vector.load %arg2[%c4_243, %c2_244, %c0_245, %c0_246] : memref<6x5x32x32xf32, #tpu.memory_space<vmem>>, vector<1x1x32x32xf32>
    %268 = vector.shape_cast %267 : vector<1x1x32x32xf32> to vector<32x32xf32>
    %cst_247 = arith.constant dense<0.000000e+00> : vector<32x32xf32>
    %269 = tpu.matmul %266, %268, %cst_247 {dimension_numbers = #tpu.dot_dimension_numbers<[1], [0], [0], [1], [0, 0, 1, 1], [], []>} : vector<32x32xf32>, vector<32x32xf32>, vector<32x32xf32> -> vector<32x32xf32>
    %270 = arith.addf %264, %269 : vector<32x32xf32>
    %c0_248 = arith.constant 0 : index
    %c9_249 = arith.constant 9 : index
    %c0_250 = arith.constant 0 : index
    %271 = vector.load %arg7[%c0_248, %c9_249, %c0_250] : memref<2x32x32xf32, #tpu.memory_space<vmem>>, vector<2x16x32xf32>
    %272 = vector.shape_cast %271 : vector<2x16x32xf32> to vector<32x32xf32>
    %c4_251 = arith.constant 4 : index
    %c3_252 = arith.constant 3 : index
    %c0_253 = arith.constant 0 : index
    %c0_254 = arith.constant 0 : index
    %273 = vector.load %arg2[%c4_251, %c3_252, %c0_253, %c0_254] : memref<6x5x32x32xf32, #tpu.memory_space<vmem>>, vector<1x1x32x32xf32>
    %274 = vector.shape_cast %273 : vector<1x1x32x32xf32> to vector<32x32xf32>
    %cst_255 = arith.constant dense<0.000000e+00> : vector<32x32xf32>
    %275 = tpu.matmul %272, %274, %cst_255 {dimension_numbers = #tpu.dot_dimension_numbers<[1], [0], [0], [1], [0, 0, 1, 1], [], []>} : vector<32x32xf32>, vector<32x32xf32>, vector<32x32xf32> -> vector<32x32xf32>
    %276 = arith.addf %270, %275 : vector<32x32xf32>
    %c0_256 = arith.constant 0 : index
    %c10_257 = arith.constant 10 : index
    %c0_258 = arith.constant 0 : index
    %277 = vector.load %arg7[%c0_256, %c10_257, %c0_258] : memref<2x32x32xf32, #tpu.memory_space<vmem>>, vector<2x16x32xf32>
    %278 = vector.shape_cast %277 : vector<2x16x32xf32> to vector<32x32xf32>
    %c4_259 = arith.constant 4 : index
    %c4_260 = arith.constant 4 : index
    %c0_261 = arith.constant 0 : index
    %c0_262 = arith.constant 0 : index
    %279 = vector.load %arg2[%c4_259, %c4_260, %c0_261, %c0_262] : memref<6x5x32x32xf32, #tpu.memory_space<vmem>>, vector<1x1x32x32xf32>
    %280 = vector.shape_cast %279 : vector<1x1x32x32xf32> to vector<32x32xf32>
    %cst_263 = arith.constant dense<0.000000e+00> : vector<32x32xf32>
    %281 = tpu.matmul %278, %280, %cst_263 {dimension_numbers = #tpu.dot_dimension_numbers<[1], [0], [0], [1], [0, 0, 1, 1], [], []>} : vector<32x32xf32>, vector<32x32xf32>, vector<32x32xf32> -> vector<32x32xf32>
    %282 = arith.addf %276, %281 : vector<32x32xf32>
    %c4_264 = arith.constant 4 : index
    %c0_265 = arith.constant 0 : index
    %283 = vector.load %arg3[%c4_264, %c0_265] : memref<6x32xf32, #tpu.memory_space<vmem>>, vector<1x32xf32>
    %284 = vector.broadcast %283 : vector<1x32xf32> to vector<32x32xf32>
    %285 = arith.addf %282, %284 : vector<32x32xf32>
    %cst_266 = arith.constant 0.000000e+00 : f32
    %286 = vector.broadcast %cst_266 : f32 to vector<32x32xf32>
    %287 = arith.maximumf %285, %286 : vector<32x32xf32>
    %cst_267 = arith.constant dense<0.000000e+00> : vector<32xf32>
    %288 = vector.multi_reduction <add>, %287, %cst_267 [0] : vector<32x32xf32> to vector<32xf32>
    %289 = vector.shape_cast %288 : vector<32xf32> to vector<1x32xf32>
    %cst_268 = arith.constant 3.200000e+01 : f32
    %290 = vector.broadcast %cst_268 : f32 to vector<1x32xf32>
    %291 = arith.divf %289, %290 : vector<1x32xf32>
    %292 = arith.mulf %287, %287 : vector<32x32xf32>
    %cst_269 = arith.constant dense<0.000000e+00> : vector<32xf32>
    %293 = vector.multi_reduction <add>, %292, %cst_269 [0] : vector<32x32xf32> to vector<32xf32>
    %294 = vector.shape_cast %293 : vector<32xf32> to vector<1x32xf32>
    %cst_270 = arith.constant 3.200000e+01 : f32
    %295 = vector.broadcast %cst_270 : f32 to vector<1x32xf32>
    %296 = arith.divf %294, %295 : vector<1x32xf32>
    %297 = arith.mulf %291, %291 : vector<1x32xf32>
    %298 = arith.subf %296, %297 : vector<1x32xf32>
    %299 = vector.broadcast %291 : vector<1x32xf32> to vector<32x32xf32>
    %300 = arith.subf %287, %299 : vector<32x32xf32>
    %cst_271 = arith.constant 9.99999974E-6 : f32
    %301 = vector.broadcast %cst_271 : f32 to vector<1x32xf32>
    %302 = arith.addf %298, %301 : vector<1x32xf32>
    %303 = math.rsqrt %302 : vector<1x32xf32>
    %304 = vector.broadcast %303 : vector<1x32xf32> to vector<32x32xf32>
    %305 = arith.mulf %300, %304 : vector<32x32xf32>
    %c4_272 = arith.constant 4 : index
    %c0_273 = arith.constant 0 : index
    %306 = vector.load %arg4[%c4_272, %c0_273] : memref<6x32xf32, #tpu.memory_space<vmem>>, vector<1x32xf32>
    %307 = vector.broadcast %306 : vector<1x32xf32> to vector<32x32xf32>
    %308 = arith.mulf %305, %307 : vector<32x32xf32>
    %c4_274 = arith.constant 4 : index
    %c0_275 = arith.constant 0 : index
    %309 = vector.load %arg5[%c4_274, %c0_275] : memref<6x32xf32, #tpu.memory_space<vmem>>, vector<1x32xf32>
    %310 = vector.broadcast %309 : vector<1x32xf32> to vector<32x32xf32>
    %311 = arith.addf %308, %310 : vector<32x32xf32>
    %312 = vector.shape_cast %311 : vector<32x32xf32> to vector<2x16x32xf32>
    %c0_276 = arith.constant 0 : index
    %c8_277 = arith.constant 8 : index
    %c0_278 = arith.constant 0 : index
    %313 = vector.load %arg7[%c0_276, %c8_277, %c0_278] : memref<2x32x32xf32, #tpu.memory_space<vmem>>, vector<2x16x32xf32>
    tpu.vector_store %arg7[%c0_276, %c8_277, %c0_278], %312 {strides = array<i32>} : memref<2x32x32xf32, #tpu.memory_space<vmem>>, vector<2x16x32xf32>,
    %cst_279 = arith.constant 0.000000e+00 : f32
    %314 = vector.broadcast %cst_279 : f32 to vector<32x32xf32>
    %c0_280 = arith.constant 0 : index
    %c6_281 = arith.constant 6 : index
    %c0_282 = arith.constant 0 : index
    %315 = vector.load %arg7[%c0_280, %c6_281, %c0_282] : memref<2x32x32xf32, #tpu.memory_space<vmem>>, vector<2x16x32xf32>
    %316 = vector.shape_cast %315 : vector<2x16x32xf32> to vector<32x32xf32>
    %c5 = arith.constant 5 : index
    %c0_283 = arith.constant 0 : index
    %c0_284 = arith.constant 0 : index
    %c0_285 = arith.constant 0 : index
    %317 = vector.load %arg2[%c5, %c0_283, %c0_284, %c0_285] : memref<6x5x32x32xf32, #tpu.memory_space<vmem>>, vector<1x1x32x32xf32>
    %318 = vector.shape_cast %317 : vector<1x1x32x32xf32> to vector<32x32xf32>
    %cst_286 = arith.constant dense<0.000000e+00> : vector<32x32xf32>
    %319 = tpu.matmul %316, %318, %cst_286 {dimension_numbers = #tpu.dot_dimension_numbers<[1], [0], [0], [1], [0, 0, 1, 1], [], []>} : vector<32x32xf32>, vector<32x32xf32>, vector<32x32xf32> -> vector<32x32xf32>
    %320 = arith.addf %314, %319 : vector<32x32xf32>
    %c0_287 = arith.constant 0 : index
    %c7_288 = arith.constant 7 : index
    %c0_289 = arith.constant 0 : index
    %321 = vector.load %arg7[%c0_287, %c7_288, %c0_289] : memref<2x32x32xf32, #tpu.memory_space<vmem>>, vector<2x16x32xf32>
    %322 = vector.shape_cast %321 : vector<2x16x32xf32> to vector<32x32xf32>
    %c5_290 = arith.constant 5 : index
    %c1_291 = arith.constant 1 : index
    %c0_292 = arith.constant 0 : index
    %c0_293 = arith.constant 0 : index
    %323 = vector.load %arg2[%c5_290, %c1_291, %c0_292, %c0_293] : memref<6x5x32x32xf32, #tpu.memory_space<vmem>>, vector<1x1x32x32xf32>
    %324 = vector.shape_cast %323 : vector<1x1x32x32xf32> to vector<32x32xf32>
    %cst_294 = arith.constant dense<0.000000e+00> : vector<32x32xf32>
    %325 = tpu.matmul %322, %324, %cst_294 {dimension_numbers = #tpu.dot_dimension_numbers<[1], [0], [0], [1], [0, 0, 1, 1], [], []>} : vector<32x32xf32>, vector<32x32xf32>, vector<32x32xf32> -> vector<32x32xf32>
    %326 = arith.addf %320, %325 : vector<32x32xf32>
    %c0_295 = arith.constant 0 : index
    %c8_296 = arith.constant 8 : index
    %c0_297 = arith.constant 0 : index
    %327 = vector.load %arg7[%c0_295, %c8_296, %c0_297] : memref<2x32x32xf32, #tpu.memory_space<vmem>>, vector<2x16x32xf32>
    %328 = vector.shape_cast %327 : vector<2x16x32xf32> to vector<32x32xf32>
    %c5_298 = arith.constant 5 : index
    %c2_299 = arith.constant 2 : index
    %c0_300 = arith.constant 0 : index
    %c0_301 = arith.constant 0 : index
    %329 = vector.load %arg2[%c5_298, %c2_299, %c0_300, %c0_301] : memref<6x5x32x32xf32, #tpu.memory_space<vmem>>, vector<1x1x32x32xf32>
    %330 = vector.shape_cast %329 : vector<1x1x32x32xf32> to vector<32x32xf32>
    %cst_302 = arith.constant dense<0.000000e+00> : vector<32x32xf32>
    %331 = tpu.matmul %328, %330, %cst_302 {dimension_numbers = #tpu.dot_dimension_numbers<[1], [0], [0], [1], [0, 0, 1, 1], [], []>} : vector<32x32xf32>, vector<32x32xf32>, vector<32x32xf32> -> vector<32x32xf32>
    %332 = arith.addf %326, %331 : vector<32x32xf32>
    %c0_303 = arith.constant 0 : index
    %c9_304 = arith.constant 9 : index
    %c0_305 = arith.constant 0 : index
    %333 = vector.load %arg7[%c0_303, %c9_304, %c0_305] : memref<2x32x32xf32, #tpu.memory_space<vmem>>, vector<2x16x32xf32>
    %334 = vector.shape_cast %333 : vector<2x16x32xf32> to vector<32x32xf32>
    %c5_306 = arith.constant 5 : index
    %c3_307 = arith.constant 3 : index
    %c0_308 = arith.constant 0 : index
    %c0_309 = arith.constant 0 : index
    %335 = vector.load %arg2[%c5_306, %c3_307, %c0_308, %c0_309] : memref<6x5x32x32xf32, #tpu.memory_space<vmem>>, vector<1x1x32x32xf32>
    %336 = vector.shape_cast %335 : vector<1x1x32x32xf32> to vector<32x32xf32>
    %cst_310 = arith.constant dense<0.000000e+00> : vector<32x32xf32>
    %337 = tpu.matmul %334, %336, %cst_310 {dimension_numbers = #tpu.dot_dimension_numbers<[1], [0], [0], [1], [0, 0, 1, 1], [], []>} : vector<32x32xf32>, vector<32x32xf32>, vector<32x32xf32> -> vector<32x32xf32>
    %338 = arith.addf %332, %337 : vector<32x32xf32>
    %c0_311 = arith.constant 0 : index
    %c10_312 = arith.constant 10 : index
    %c0_313 = arith.constant 0 : index
    %339 = vector.load %arg7[%c0_311, %c10_312, %c0_313] : memref<2x32x32xf32, #tpu.memory_space<vmem>>, vector<2x16x32xf32>
    %340 = vector.shape_cast %339 : vector<2x16x32xf32> to vector<32x32xf32>
    %c5_314 = arith.constant 5 : index
    %c4_315 = arith.constant 4 : index
    %c0_316 = arith.constant 0 : index
    %c0_317 = arith.constant 0 : index
    %341 = vector.load %arg2[%c5_314, %c4_315, %c0_316, %c0_317] : memref<6x5x32x32xf32, #tpu.memory_space<vmem>>, vector<1x1x32x32xf32>
    %342 = vector.shape_cast %341 : vector<1x1x32x32xf32> to vector<32x32xf32>
    %cst_318 = arith.constant dense<0.000000e+00> : vector<32x32xf32>
    %343 = tpu.matmul %340, %342, %cst_318 {dimension_numbers = #tpu.dot_dimension_numbers<[1], [0], [0], [1], [0, 0, 1, 1], [], []>} : vector<32x32xf32>, vector<32x32xf32>, vector<32x32xf32> -> vector<32x32xf32>
    %344 = arith.addf %338, %343 : vector<32x32xf32>
    %c5_319 = arith.constant 5 : index
    %c0_320 = arith.constant 0 : index
    %345 = vector.load %arg3[%c5_319, %c0_320] : memref<6x32xf32, #tpu.memory_space<vmem>>, vector<1x32xf32>
    %346 = vector.broadcast %345 : vector<1x32xf32> to vector<32x32xf32>
    %347 = arith.addf %344, %346 : vector<32x32xf32>
    %c0_321 = arith.constant 0 : index
    %c0_322 = arith.constant 0 : index
    %c0_323 = arith.constant 0 : index
    %348 = vector.load %arg1[%c0_321, %c0_322, %c0_323] : memref<2x16x32xf32, #tpu.memory_space<vmem>>, vector<2x16x32xf32>
    %349 = vector.shape_cast %348 : vector<2x16x32xf32> to vector<32x32xf32>
    %350 = arith.addf %347, %349 : vector<32x32xf32>
    %cst_324 = arith.constant 0.000000e+00 : f32
    %351 = vector.broadcast %cst_324 : f32 to vector<32x32xf32>
    %352 = arith.subf %351, %350 : vector<32x32xf32>
    %353 = math.exp %352 : vector<32x32xf32>
    %cst_325 = arith.constant 1.000000e+00 : f32
    %354 = vector.broadcast %cst_325 : f32 to vector<32x32xf32>
    %355 = arith.addf %354, %353 : vector<32x32xf32>
    %cst_326 = arith.constant 1.000000e+00 : f32
    %356 = vector.broadcast %cst_326 : f32 to vector<32x32xf32>
    %357 = arith.divf %356, %355 : vector<32x32xf32>
    %358 = vector.extract_strided_slice %357 {offsets = [0, 0], sizes = [32, 4], strides = [1, 1]} : vector<32x32xf32> to vector<32x4xf32>
    %c0_327 = arith.constant 0 : index
    %c0_328 = arith.constant 0 : index
    %359 = vector.load %arg6[%c0_327, %c0_328] : memref<32x4xf32, #tpu.memory_space<vmem>>, vector<32x4xf32>
    tpu.vector_store %arg6[%c0_327, %c0_328], %358 {strides = array<i32>} : memref<32x4xf32, #tpu.memory_space<vmem>>, vector<32x4xf32>,
    return
  }
  func.func @transform_0(%arg0: i32) -> (i32, i32, i32) {
    %c0_i32 = arith.constant 0 : i32
    %c0_i32_0 = arith.constant 0 : i32
    %c0_i32_1 = arith.constant 0 : i32
    %c0_i32_2 = arith.constant 0 : i32
    return %c0_i32, %c0_i32_0, %c0_i32_1 : i32, i32, i32
  }
  func.func @transform_1(%arg0: i32) -> (i32, i32, i32, i32) {
    %c0_i32 = arith.constant 0 : i32
    %c0_i32_0 = arith.constant 0 : i32
    %c0_i32_1 = arith.constant 0 : i32
    %c0_i32_2 = arith.constant 0 : i32
    %c0_i32_3 = arith.constant 0 : i32
    return %c0_i32, %c0_i32_0, %c0_i32_1, %c0_i32_2 : i32, i32, i32, i32
  }
  func.func @transform_2(%arg0: i32) -> (i32, i32) {
    %c0_i32 = arith.constant 0 : i32
    %c0_i32_0 = arith.constant 0 : i32
    %c0_i32_1 = arith.constant 0 : i32
    return %c0_i32, %c0_i32_0 : i32, i32
  }
  func.func @transform_3(%arg0: i32) -> (i32, i32) {
    %c0_i32 = arith.constant 0 : i32
    %c0_i32_0 = arith.constant 0 : i32
    %c0_i32_1 = arith.constant 0 : i32
    return %c0_i32, %c0_i32_0 : i32, i32
  }
  func.func @transform_4(%arg0: i32) -> (i32, i32) {
    %c0_i32 = arith.constant 0 : i32
    %c0_i32_0 = arith.constant 0 : i32
    %c0_i32_1 = arith.constant 0 : i32
    return %c0_i32, %c0_i32_0 : i32, i32
  }
  func.func @transform_5(%arg0: i32) -> (i32, i32) {
    %c0_i32 = arith.constant 0 : i32
    %c0_i32_0 = arith.constant 0 : i32
    %c0_i32_1 = arith.constant 0 : i32
    return %c0_i32, %c0_i32_0 : i32, i32
  }
}

</mosaic_0001>

<llo_original>
// kernel: cnn_1d_forward.1
$region0: #{cnn_1d_forward.1}
  #allocation0 [shape = 'u32[]', space=smem, size = 0x4, offset = 0x4, fixed_abs, tag = 'smem constant byte address 0x4 - core index']
  #allocation1 [shape = 'u32[144,128]{1,0:T(1,128)}', space=vmem, size = 0x12000, scoped, tag = 'internal scratch']
  #allocation2 [shape = 'f32[2,32,32]{2,1,0:T(8,128)}', space=vmem, size = 0x8000, scoped, tag = 'scratch operand']
  %s0 = inlined_call_operand.vmem [shape: f32[2,16,32], index: 0, kind: input, shape index: {}]
  %s1 = inlined_call_operand.vmem [shape: f32[6,5,32,32], index: 1, kind: input, shape index: {}]
  %s2 = inlined_call_operand.vmem [shape: f32[6,32], index: 2, kind: input, shape index: {}]
  %s3 = inlined_call_operand.vmem [shape: f32[6,32], index: 3, kind: input, shape index: {}]
  %s4 = inlined_call_operand.vmem [shape: f32[6,32], index: 4, kind: input, shape index: {}]
  %s5 = inlined_call_operand.vmem [shape: f32[32,4], index: 5, kind: output, shape index: {}]
  %s6 = sld [smem:[#allocation0]]
  $region30: #{cnn_1d_forward.1} parent=0
    _
  %s8 = ssub.s32 1, %s6
  %s9 = scalar_select 0, %s8, %s6
  // Predicated region
  $region2: #{cnn_1d_forward.1} parent=0 // pred_check
    _
  $region3: #{cnn_1d_forward.1} parent=0 // pred_check_branch
    %11 = sbr.rel (0) target = $region5
  $region4: #{cnn_1d_forward.1} parent=0 // pred_region
    _
  $region5: #{cnn_1d_forward.1} parent=0 // pred_fallthru
    _
  // Predicated region
  $region6: #{cnn_1d_forward.1} parent=0 // pred_check
    _
  $region7: #{cnn_1d_forward.1} parent=0 // pred_check_branch
    %13 = sbr.rel (0) target = $region9
  $region8: #{cnn_1d_forward.1} parent=0 // pred_region
    _
  $region9: #{cnn_1d_forward.1} parent=0 // pred_fallthru
    _
  // Predicated region
  $region10: #{cnn_1d_forward.1} parent=0 // pred_check
    _
  $region11: #{cnn_1d_forward.1} parent=0 // pred_check_branch
    %15 = sbr.rel (0) target = $region13
  $region12: #{cnn_1d_forward.1} parent=0 // pred_region
    _
  $region13: #{cnn_1d_forward.1} parent=0 // pred_fallthru
    _
  // Predicated region
  $region14: #{cnn_1d_forward.1} parent=0 // pred_check
    _
  $region15: #{cnn_1d_forward.1} parent=0 // pred_check_branch
    %17 = sbr.rel (0) target = $region17
  $region16: #{cnn_1d_forward.1} parent=0 // pred_region
    _
  $region17: #{cnn_1d_forward.1} parent=0 // pred_fallthru
    _
  // Predicated region
  $region18: #{cnn_1d_forward.1} parent=0 // pred_check
    _
  $region19: #{cnn_1d_forward.1} parent=0 // pred_check_branch
    %19 = sbr.rel (0) target = $region21
  $region20: #{cnn_1d_forward.1} parent=0 // pred_region
    _
  $region21: #{cnn_1d_forward.1} parent=0 // pred_fallthru
    _
  %vm20 = vcmask 261120
  %21 = vst.msk [vmem:[#allocation2] sm:$0xff] %vm20, 0.0
  %22 = vst.msk [vmem:[#allocation2 + $0x8] sm:$0xff] %vm20, 0.0
  %23 = vst.msk [vmem:[#allocation2 + $0x10] sm:$0xff] %vm20, 0.0
  %24 = vst.msk [vmem:[#allocation2 + $0x18] sm:$0xff] %vm20, 0.0
  %25 = vst.msk [vmem:[#allocation2 + $0x20] sm:$0xff] %vm20, 0.0
  %26 = vst.msk [vmem:[#allocation2 + $0x28] sm:$0xff] %vm20, 0.0
  %27 = vst.msk [vmem:[#allocation2 + $0x30] sm:$0xff] %vm20, 0.0
  %28 = vst.msk [vmem:[#allocation2 + $0x38] sm:$0xff] %vm20, 0.0
  %v29 = vld [vmem:[%s0] sm:$0xff]
  %v30 = vld [vmem:[%s0 + $0x8] sm:$0xff]
  %v31 = vld [vmem:[%s0 + $0x10] sm:$0xff]
  %v32 = vld [vmem:[%s0 + $0x18] sm:$0xff]
  %33 = vst.msk [vmem:[#allocation2 + $0x8] sm:$0xff] %vm20, %v29
  %34 = vst.msk [vmem:[#allocation2 + $0x10] sm:$0xff] %vm20, %v30
  %35 = vst.msk [vmem:[#allocation2 + $0x28] sm:$0xff] %vm20, %v31
  %36 = vst.msk [vmem:[#allocation2 + $0x30] sm:$0xff] %vm20, %v32
  %v37 = vld [vmem:[#allocation2 + $0x6] sm:$0xff]
  %v38 = vld [vmem:[#allocation2 + $0xe] sm:$0xff]
  %v39 = vld [vmem:[#allocation2 + $0x26] sm:$0xff]
  %v40 = vld [vmem:[#allocation2 + $0x2e] sm:$0xff]
  %v41 = vld [vmem:[%s1] sm:$0xff]
  %v42 = vld [vmem:[%s1 + $0x8] sm:$0xff]
  %v43 = vld [vmem:[%s1 + $0x10] sm:$0xff]
  %v44 = vld [vmem:[%s1 + $0x18] sm:$0xff]
  %v45 = vld [vmem:[#allocation2 + $0x7] sm:$0xff]
  %v46 = vld [vmem:[#allocation2 + $0xf] sm:$0xff]
  %v47 = vld [vmem:[#allocation2 + $0x27] sm:$0xff]
  %v48 = vld [vmem:[#allocation2 + $0x2f] sm:$0xff]
  %s49 = scalar_lea.vmem %s1, 32
  %v50 = vld [vmem:[%s49] sm:$0xff]
  %v51 = vld [vmem:[%s49 + $0x8] sm:$0xff]
  %v52 = vld [vmem:[%s49 + $0x10] sm:$0xff]
  %v53 = vld [vmem:[%s49 + $0x18] sm:$0xff]
  %v55 = vsel %vm20, %v45, 0
  %v58 = vsel %vm20, %v46, 0
  %v61 = vsel %vm20, %v47, 0
  %v64 = vsel %vm20, %v48, 0
  %66 = vmatprep.subr.mxu0 0.0
  %67 = vmatpush1.msra.mxu0 %v50
  %68 = vmatprep.subr.mxu0 0.0
  %69 = vmatpush1.msra.mxu0 %v51
  %70 = vmatprep.subr.mxu0 0.0
  %71 = vmatpush1.msra.mxu0 %v52
  %72 = vmatprep.subr.mxu0 0.0
  %73 = vmatpush1.msra.mxu0 %v53
  %74 = vmatprep.subr.mxu0 0.0
  %75 = vmatpush1.msra.mxu0 0.0
  %76 = vmatprep.subr.mxu0 0.0
  %77 = vmatpush1.msra.mxu0 0.0
  %78 = vmatprep.subr.mxu0 0.0
  %79 = vmatpush1.msra.mxu0 0.0
  %80 = vmatprep.subr.mxu0 0.0
  %81 = vmatpush1.msra.mxu0 0.0
  %82 = vmatprep.subr.mxu0 0.0
  %83 = vmatpush1.msra.mxu0 0.0
  %84 = vmatprep.subr.mxu0 0.0
  %85 = vmatpush1.msra.mxu0 0.0
  %86 = vmatprep.subr.mxu0 0.0
  %87 = vmatpush1.msra.mxu0 0.0
  %88 = vmatprep.subr.mxu0 0.0
  %89 = vmatpush1.msra.mxu0 0.0
  %90 = vmatprep.subr.mxu0 0.0
  %91 = vmatpush1.msra.mxu0 0.0
  %92 = vmatprep.subr.mxu0 0.0
  %93 = vmatpush1.msra.mxu0 0.0
  %94 = vmatprep.subr.mxu0 0.0
  %95 = vmatpush1.msra.mxu0 0.0
  %96 = vmatprep.subr.mxu0 0.0
  %97 = vmatpush1.msra.mxu0 0.0
  %98 = vmatprep.subr.mxu0 0.0
  %99 = vmatpush1.msra.mxu0 0.0
  %100 = vmatprep.subr.mxu0 0.0
  %101 = vmatpush1.msra.mxu0 0.0
  %102 = vmatprep.subr.mxu0 0.0
  %103 = vmatpush1.msra.mxu0 0.0
  %104 = vmatprep.subr.mxu0 0.0
  %105 = vmatpush1.msra.mxu0 0.0
  %106 = vmatprep.subr.mxu0 0.0
  %107 = vmatpush1.msra.mxu0 0.0
  %108 = vmatprep.subr.mxu0 0.0
  %109 = vmatpush1.msra.mxu0 0.0
  %110 = vmatprep.subr.mxu0 0.0
  %111 = vmatpush1.msra.mxu0 0.0
  %112 = vmatprep.subr.mxu0 0.0
  %113 = vmatpush1.msra.mxu0 0.0
  %114 = vmatprep.subr.mxu0 0.0
  %115 = vmatpush1.msra.mxu0 0.0
  %116 = vmatprep.subr.mxu0 0.0
  %117 = vmatpush1.msra.mxu0 0.0
  %118 = vmatprep.subr.mxu0 0.0
  %119 = vmatpush1.msra.mxu0 0.0
  %120 = vmatprep.subr.mxu0 0.0
  %121 = vmatpush1.msra.mxu0 0.0
  %122 = vmatprep.subr.mxu0 0.0
  %123 = vmatpush1.msra.mxu0 0.0
  %124 = vmatprep.subr.mxu0 0.0
  %125 = vmatpush1.msra.mxu0 0.0
  %126 = vmatprep.subr.mxu0 0.0
  %127 = vmatpush1.msra.mxu0 0.0
  %128 = vmatprep.subr.mxu0 0.0
  %129 = vmatpush1.msra.mxu0 0.0
  %130 = vmatprep.mubr.f32.mxu0 0.0
  %131 = vmatmul.mubr.f32.gmra.mrb[0].mxu0 %v55
  %v132 = vpop.f32.mrb[0].mxu0
  %v133 = vadd.f32 0.0, %v132
  %v134 = vpop.f32.mrb[0].mxu0
  %135 = vmatprep.mubr.f32.mxu0 0.0
  %136 = vmatmul.mubr.f32.gmra.mrb[0].mxu0 %v58
  %v137 = vpop.f32.mrb[0].mxu0
  %v138 = vadd.f32 0.0, %v137
  %v139 = vpop.f32.mrb[0].mxu0
  %140 = vmatprep.mubr.f32.mxu0 0.0
  %141 = vmatmul.mubr.f32.gmra.mrb[0].mxu0 %v61
  %v142 = vpop.f32.mrb[0].mxu0
  %v143 = vadd.f32 0.0, %v142
  %v144 = vpop.f32.mrb[0].mxu0
  %145 = vmatprep.mubr.f32.mxu0 0.0
  %146 = vmatmul.mubr.f32.gmra.mrb[0].mxu0 %v64
  %v147 = vpop.f32.mrb[0].mxu0
  %v148 = vadd.f32 0.0, %v147
  %v149 = vpop.f32.mrb[0].mxu0
  %150 = vdwg.mxu0
  %v152 = vsel %vm20, %v37, 0
  %v155 = vsel %vm20, %v38, 0
  %v158 = vsel %vm20, %v39, 0
  %v161 = vsel %vm20, %v40, 0
  %163 = vmatprep.subr.mxu0 0.0
  %164 = vmatpush1.msra.mxu0 %v41
  %165 = vmatprep.subr.mxu0 0.0
  %166 = vmatpush1.msra.mxu0 %v42
  %167 = vmatprep.subr.mxu0 0.0
  %168 = vmatpush1.msra.mxu0 %v43
  %169 = vmatprep.subr.mxu0 0.0
  %170 = vmatpush1.msra.mxu0 %v44
  %171 = vmatprep.subr.mxu0 0.0
  %172 = vmatpush1.msra.mxu0 0.0
  %173 = vmatprep.subr.mxu0 0.0
  %174 = vmatpush1.msra.mxu0 0.0
  %175 = vmatprep.subr.mxu0 0.0
  %176 = vmatpush1.msra.mxu0 0.0
  %177 = vmatprep.subr.mxu0 0.0
  %178 = vmatpush1.msra.mxu0 0.0
  %179 = vmatprep.subr.mxu0 0.0
  %180 = vmatpush1.msra.mxu0 0.0
  %181 = vmatprep.subr.mxu0 0.0
  %182 = vmatpush1.msra.mxu0 0.0
  %183 = vmatprep.subr.mxu0 0.0
  %184 = vmatpush1.msra.mxu0 0.0
  %185 = vmatprep.subr.mxu0 0.0
  %186 = vmatpush1.msra.mxu0 0.0
  %187 = vmatprep.subr.mxu0 0.0
  %188 = vmatpush1.msra.mxu0 0.0
  %189 = vmatprep.subr.mxu0 0.0
  %190 = vmatpush1.msra.mxu0 0.0
  %191 = vmatprep.subr.mxu0 0.0
  %192 = vmatpush1.msra.mxu0 0.0
  %193 = vmatprep.subr.mxu0 0.0
  %194 = vmatpush1.msra.mxu0 0.0
  %195 = vmatprep.subr.mxu0 0.0
  %196 = vmatpush1.msra.mxu0 0.0
  %197 = vmatprep.subr.mxu0 0.0
  %198 = vmatpush1.msra.mxu0 0.0
  %199 = vmatprep.subr.mxu0 0.0
  %200 = vmatpush1.msra.mxu0 0.0
  %201 = vmatprep.subr.mxu0 0.0
  %202 = vmatpush1.msra.mxu0 0.0
  %203 = vmatprep.subr.mxu0 0.0
  %204 = vmatpush1.msra.mxu0 0.0
  %205 = vmatprep.subr.mxu0 0.0
  %206 = vmatpush1.msra.mxu0 0.0
  %207 = vmatprep.subr.mxu0 0.0
  %208 = vmatpush1.msra.mxu0 0.0
  %209 = vmatprep.subr.mxu0 0.0
  %210 = vmatpush1.msra.mxu0 0.0
  %211 = vmatprep.subr.mxu0 0.0
  %212 = vmatpush1.msra.mxu0 0.0
  %213 = vmatprep.subr.mxu0 0.0
  %214 = vmatpush1.msra.mxu0 0.0
  %215 = vmatprep.subr.mxu0 0.0
  %216 = vmatpush1.msra.mxu0 0.0
  %217 = vmatprep.subr.mxu0 0.0
  %218 = vmatpush1.msra.mxu0 0.0
  %219 = vmatprep.subr.mxu0 0.0
  %220 = vmatpush1.msra.mxu0 0.0
  %221 = vmatprep.subr.mxu0 0.0
  %222 = vmatpush1.msra.mxu0 0.0
  %223 = vmatprep.subr.mxu0 0.0
  %224 = vmatpush1.msra.mxu0 0.0
  %225 = vmatprep.subr.mxu0 0.0
  %226 = vmatpush1.msra.mxu0 0.0
  %227 = vmatprep.mubr.f32.mxu0 0.0
  %228 = vmatmul.mubr.f32.gmra.mrb[0].mxu0 %v152
  %v229 = vpop.f32.mrb[0].mxu0
  %v230 = vadd.f32 %v133, %v229
  %v231 = vpop.f32.mrb[0].mxu0
  %232 = vmatprep.mubr.f32.mxu0 0.0
  %233 = vmatmul.mubr.f32.gmra.mrb[0].mxu0 %v155
  %v234 = vpop.f32.mrb[0].mxu0
  %v235 = vadd.f32 %v138, %v234
  %v236 = vpop.f32.mrb[0].mxu0
  %237 = vmatprep.mubr.f32.mxu0 0.0
  %238 = vmatmul.mubr.f32.gmra.mrb[0].mxu0 %v158
  %v239 = vpop.f32.mrb[0].mxu0
  %v240 = vadd.f32 %v143, %v239
  %v241 = vpop.f32.mrb[0].mxu0
  %242 = vmatprep.mubr.f32.mxu0 0.0
  %243 = vmatmul.mubr.f32.gmra.mrb[0].mxu0 %v161
  %v244 = vpop.f32.mrb[0].mxu0
  %v245 = vadd.f32 %v148, %v244
  %v246 = vpop.f32.mrb[0].mxu0
  %247 = vdwg.mxu0
  %v248 = vld [vmem:[#allocation2 + $0x8] sm:$0xff]
  %v249 = vld [vmem:[#allocation2 + $0x10] sm:$0xff]
  %v250 = vld [vmem:[#allocation2 + $0x28] sm:$0xff]
  %v251 = vld [vmem:[#allocation2 + $0x30] sm:$0xff]
  %s252 = scalar_lea.vmem %s1, 64
  %v253 = vld [vmem:[%s252] sm:$0xff]
  %v254 = vld [vmem:[%s252 + $0x8] sm:$0xff]
  %v255 = vld [vmem:[%s252 + $0x10] sm:$0xff]
  %v256 = vld [vmem:[%s252 + $0x18] sm:$0xff]
  %v258 = vsel %vm20, %v248, 0
  %v261 = vsel %vm20, %v249, 0
  %v264 = vsel %vm20, %v250, 0
  %v267 = vsel %vm20, %v251, 0
  %269 = vmatprep.subr.mxu0 0.0
  %270 = vmatpush1.msra.mxu0 %v253
  %271 = vmatprep.subr.mxu0 0.0
  %272 = vmatpush1.msra.mxu0 %v254
  %273 = vmatprep.subr.mxu0 0.0
  %274 = vmatpush1.msra.mxu0 %v255
  %275 = vmatprep.subr.mxu0 0.0
  %276 = vmatpush1.msra.mxu0 %v256
  %277 = vmatprep.subr.mxu0 0.0
  %278 = vmatpush1.msra.mxu0 0.0
  %279 = vmatprep.subr.mxu0 0.0
  %280 = vmatpush1.msra.mxu0 0.0
  %281 = vmatprep.subr.mxu0 0.0
  %282 = vmatpush1.msra.mxu0 0.0
  %283 = vmatprep.subr.mxu0 0.0
  %284 = vmatpush1.msra.mxu0 0.0
  %285 = vmatprep.subr.mxu0 0.0
  %286 = vmatpush1.msra.mxu0 0.0
  %287 = vmatprep.subr.mxu0 0.0
  %288 = vmatpush1.msra.mxu0 0.0
  %289 = vmatprep.subr.mxu0 0.0
  %290 = vmatpush1.msra.mxu0 0.0
  %291 = vmatprep.subr.mxu0 0.0
  %292 = vmatpush1.msra.mxu0 0.0
  %293 = vmatprep.subr.mxu0 0.0
  %294 = vmatpush1.msra.mxu0 0.0
  %295 = vmatprep.subr.mxu0 0.0
  %296 = vmatpush1.msra.mxu0 0.0
  %297 = vmatprep.subr.mxu0 0.0
  %298 = vmatpush1.msra.mxu0 0.0
  %299 = vmatprep.subr.mxu0 0.0
  %300 = vmatpush1.msra.mxu0 0.0
  %301 = vmatprep.subr.mxu0 0.0
  %302 = vmatpush1.msra.mxu0 0.0
  %303 = vmatprep.subr.mxu0 0.0
  %304 = vmatpush1.msra.mxu0 0.0
  %305 = vmatprep.subr.mxu0 0.0
  %306 = vmatpush1.msra.mxu0 0.0
  %307 = vmatprep.subr.mxu0 0.0
  %308 = vmatpush1.msra.mxu0 0.0
  %309 = vmatprep.subr.mxu0 0.0
  %310 = vmatpush1.msra.mxu0 0.0
  %311 = vmatprep.subr.mxu0 0.0
  %312 = vmatpush1.msra.mxu0 0.0
  %313 = vmatprep.subr.mxu0 0.0
  %314 = vmatpush1.msra.mxu0 0.0
  %315 = vmatprep.subr.mxu0 0.0
  %316 = vmatpush1.msra.mxu0 0.0
  %317 = vmatprep.subr.mxu0 0.0
  %318 = vmatpush1.msra.mxu0 0.0
  %319 = vmatprep.subr.mxu0 0.0
  %320 = vmatpush1.msra.mxu0 0.0
  %321 = vmatprep.subr.mxu0 0.0
  %322 = vmatpush1.msra.mxu0 0.0
  %323 = vmatprep.subr.mxu0 0.0
  %324 = vmatpush1.msra.mxu0 0.0
  %325 = vmatprep.subr.mxu0 0.0
  %326 = vmatpush1.msra.mxu0 0.0
  %327 = vmatprep.subr.mxu0 0.0
  %328 = vmatpush1.msra.mxu0 0.0
  %329 = vmatprep.subr.mxu0 0.0
  %330 = vmatpush1.msra.mxu0 0.0
  %331 = vmatprep.subr.mxu0 0.0
  %332 = vmatpush1.msra.mxu0 0.0
  %333 = vmatprep.mubr.f32.mxu0 0.0
  %334 = vmatmul.mubr.f32.gmra.mrb[0].mxu0 %v258
  %v335 = vpop.f32.mrb[0].mxu0
  %v336 = vadd.f32 0.0, %v335
  %v337 = vpop.f32.mrb[0].mxu0
  %338 = vmatprep.mubr.f32.mxu0 0.0
  %339 = vmatmul.mubr.f32.gmra.mrb[0].mxu0 %v261
  %v340 = vpop.f32.mrb[0].mxu0
  %v341 = vadd.f32 0.0, %v340
  %v342 = vpop.f32.mrb[0].mxu0
  %343 = vmatprep.mubr.f32.mxu0 0.0
  %344 = vmatmul.mubr.f32.gmra.mrb[0].mxu0 %v264
  %v345 = vpop.f32.mrb[0].mxu0
  %v346 = vadd.f32 0.0, %v345
  %v347 = vpop.f32.mrb[0].mxu0
  %348 = vmatprep.mubr.f32.mxu0 0.0
  %349 = vmatmul.mubr.f32.gmra.mrb[0].mxu0 %v267
  %v350 = vpop.f32.mrb[0].mxu0
  %v351 = vadd.f32 0.0, %v350
  %v352 = vpop.f32.mrb[0].mxu0
  %353 = vdwg.mxu0
  %v354 = vadd.f32 %v230, %v336
  %v355 = vadd.f32 %v235, %v341
  %v356 = vadd.f32 %v240, %v346
  %v357 = vadd.f32 %v245, %v351
  %v358 = vld [vmem:[#allocation2 + $0x9] sm:$0xff]
  %v359 = vld [vmem:[#allocation2 + $0x11] sm:$0xff]
  %v360 = vld [vmem:[#allocation2 + $0x29] sm:$0xff]
  %v361 = vld [vmem:[#allocation2 + $0x31] sm:$0xff]
  %s362 = scalar_lea.vmem %s1, 96
  %v363 = vld [vmem:[%s362] sm:$0xff]
  %v364 = vld [vmem:[%s362 + $0x8] sm:$0xff]
  %v365 = vld [vmem:[%s362 + $0x10] sm:$0xff]
  %v366 = vld [vmem:[%s362 + $0x18] sm:$0xff]
  %v368 = vsel %vm20, %v358, 0
  %v371 = vsel %vm20, %v359, 0
  %v374 = vsel %vm20, %v360, 0
  %v377 = vsel %vm20, %v361, 0
  %379 = vmatprep.subr.mxu0 0.0
  %380 = vmatpush1.msra.mxu0 %v363
  %381 = vmatprep.subr.mxu0 0.0
  %382 = vmatpush1.msra.mxu0 %v364
  %383 = vmatprep.subr.mxu0 0.0
  %384 = vmatpush1.msra.mxu0 %v365
  %385 = vmatprep.subr.mxu0 0.0
  %386 = vmatpush1.msra.mxu0 %v366
  %387 = vmatprep.subr.mxu0 0.0
  %388 = vmatpush1.msra.mxu0 0.0
  %389 = vmatprep.subr.mxu0 0.0
  %390 = vmatpush1.msra.mxu0 0.0
  %391 = vmatprep.subr.mxu0 0.0
  %392 = vmatpush1.msra.mxu0 0.0
  %393 = vmatprep.subr.mxu0 0.0
  %394 = vmatpush1.msra.mxu0 0.0
  %395 = vmatprep.subr.mxu0 0.0
  %396 = vmatpush1.msra.mxu0 0.0
  %397 = vmatprep.subr.mxu0 0.0
  %398 = vmatpush1.msra.mxu0 0.0
  %399 = vmatprep.subr.mxu0 0.0
  %400 = vmatpush1.msra.mxu0 0.0
  %401 = vmatprep.subr.mxu0 0.0
  %402 = vmatpush1.msra.mxu0 0.0
  %403 = vmatprep.subr.mxu0 0.0
  %404 = vmatpush1.msra.mxu0 0.0
  %405 = vmatprep.subr.mxu0 0.0
  %406 = vmatpush1.msra.mxu0 0.0
  %407 = vmatprep.subr.mxu0 0.0
  %408 = vmatpush1.msra.mxu0 0.0
  %409 = vmatprep.subr.mxu0 0.0
  %410 = vmatpush1.msra.mxu0 0.0
  %411 = vmatprep.subr.mxu0 0.0
  %412 = vmatpush1.msra.mxu0 0.0
  %413 = vmatprep.subr.mxu0 0.0
  %414 = vmatpush1.msra.mxu0 0.0
  %415 = vmatprep.subr.mxu0 0.0
  %416 = vmatpush1.msra.mxu0 0.0
  %417 = vmatprep.subr.mxu0 0.0
  %418 = vmatpush1.msra.mxu0 0.0
  %419 = vmatprep.subr.mxu0 0.0
  %420 = vmatpush1.msra.mxu0 0.0
  %421 = vmatprep.subr.mxu0 0.0
  %422 = vmatpush1.msra.mxu0 0.0
  %423 = vmatprep.subr.mxu0 0.0
  %424 = vmatpush1.msra.mxu0 0.0
  %425 = vmatprep.subr.mxu0 0.0
  %426 = vmatpush1.msra.mxu0 0.0
  %427 = vmatprep.subr.mxu0 0.0
  %428 = vmatpush1.msra.mxu0 0.0
  %429 = vmatprep.subr.mxu0 0.0
  %430 = vmatpush1.msra.mxu0 0.0
  %431 = vmatprep.subr.mxu0 0.0
  %432 = vmatpush1.msra.mxu0 0.0
  %433 = vmatprep.subr.mxu0 0.0
  %434 = vmatpush1.msra.mxu0 0.0
  %435 = vmatprep.subr.mxu0 0.0
  %436 = vmatpush1.msra.mxu0 0.0
  %437 = vmatprep.subr.mxu0 0.0
  %438 = vmatpush1.msra.mxu0 0.0
  %439 = vmatprep.subr.mxu0 0.0
  %440 = vmatpush1.msra.mxu0 0.0
  %441 = vmatprep.subr.mxu0 0.0
  %442 = vmatpush1.msra.mxu0 0.0
  %443 = vmatprep.mubr.f32.mxu0 0.0
  %444 = vmatmul.mubr.f32.gmra.mrb[0].mxu0 %v368
  %v445 = vpop.f32.mrb[0].mxu0
  %v446 = vadd.f32 0.0, %v445
  %v447 = vpop.f32.mrb[0].mxu0
  %448 = vmatprep.mubr.f32.mxu0 0.0
  %449 = vmatmul.mubr.f32.gmra.mrb[0].mxu0 %v371
  %v450 = vpop.f32.mrb[0].mxu0
  %v451 = vadd.f32 0.0, %v450
  %v452 = vpop.f32.mrb[0].mxu0
  %453 = vmatprep.mubr.f32.mxu0 0.0
  %454 = vmatmul.mubr.f32.gmra.mrb[0].mxu0 %v374
  %v455 = vpop.f32.mrb[0].mxu0
  %v456 = vadd.f32 0.0, %v455
  %v457 = vpop.f32.mrb[0].mxu0
  %458 = vmatprep.mubr.f32.mxu0 0.0
  %459 = vmatmul.mubr.f32.gmra.mrb[0].mxu0 %v377
  %v460 = vpop.f32.mrb[0].mxu0
  %v461 = vadd.f32 0.0, %v460
  %v462 = vpop.f32.mrb[0].mxu0
  %463 = vdwg.mxu0
  %v464 = vadd.f32 %v354, %v446
  %v465 = vadd.f32 %v355, %v451
  %v466 = vadd.f32 %v356, %v456
  %v467 = vadd.f32 %v357, %v461
  %v468 = vld [vmem:[#allocation2 + $0xa] sm:$0xff]
  %v469 = vld [vmem:[#allocation2 + $0x12] sm:$0xff]
  %v470 = vld [vmem:[#allocation2 + $0x2a] sm:$0xff]
  %v471 = vld [vmem:[#allocation2 + $0x32] sm:$0xff]
  %s472 = scalar_lea.vmem %s1, 128
  %v473 = vld [vmem:[%s472] sm:$0xff]
  %v474 = vld [vmem:[%s472 + $0x8] sm:$0xff]
  %v475 = vld [vmem:[%s472 + $0x10] sm:$0xff]
  %v476 = vld [vmem:[%s472 + $0x18] sm:$0xff]
  %v478 = vsel %vm20, %v468, 0
  %v481 = vsel %vm20, %v469, 0
  %v484 = vsel %vm20, %v470, 0
  %v487 = vsel %vm20, %v471, 0
  %489 = vmatprep.subr.mxu0 0.0
  %490 = vmatpush1.msra.mxu0 %v473
  %491 = vmatprep.subr.mxu0 0.0
  %492 = vmatpush1.msra.mxu0 %v474
  %493 = vmatprep.subr.mxu0 0.0
  %494 = vmatpush1.msra.mxu0 %v475
  %495 = vmatprep.subr.mxu0 0.0
  %496 = vmatpush1.msra.mxu0 %v476
  %497 = vmatprep.subr.mxu0 0.0
  %498 = vmatpush1.msra.mxu0 0.0
  %499 = vmatprep.subr.mxu0 0.0
  %500 = vmatpush1.msra.mxu0 0.0
  %501 = vmatprep.subr.mxu0 0.0
  %502 = vmatpush1.msra.mxu0 0.0
  %503 = vmatprep.subr.mxu0 0.0
  %504 = vmatpush1.msra.mxu0 0.0
  %505 = vmatprep.subr.mxu0 0.0
  %506 = vmatpush1.msra.mxu0 0.0
  %507 = vmatprep.subr.mxu0 0.0
  %508 = vmatpush1.msra.mxu0 0.0
  %509 = vmatprep.subr.mxu0 0.0
  %510 = vmatpush1.msra.mxu0 0.0
  %511 = vmatprep.subr.mxu0 0.0
  %512 = vmatpush1.msra.mxu0 0.0
  %513 = vmatprep.subr.mxu0 0.0
  %514 = vmatpush1.msra.mxu0 0.0
  %515 = vmatprep.subr.mxu0 0.0
  %516 = vmatpush1.msra.mxu0 0.0
  %517 = vmatprep.subr.mxu0 0.0
  %518 = vmatpush1.msra.mxu0 0.0
  %519 = vmatprep.subr.mxu0 0.0
  %520 = vmatpush1.msra.mxu0 0.0
  %521 = vmatprep.subr.mxu0 0.0
  %522 = vmatpush1.msra.mxu0 0.0
  %523 = vmatprep.subr.mxu0 0.0
  %524 = vmatpush1.msra.mxu0 0.0
  %525 = vmatprep.subr.mxu0 0.0
  %526 = vmatpush1.msra.mxu0 0.0
  %527 = vmatprep.subr.mxu0 0.0
  %528 = vmatpush1.msra.mxu0 0.0
  %529 = vmatprep.subr.mxu0 0.0
  %530 = vmatpush1.msra.mxu0 0.0
  %531 = vmatprep.subr.mxu0 0.0
  %532 = vmatpush1.msra.mxu0 0.0
  %533 = vmatprep.subr.mxu0 0.0
  %534 = vmatpush1.msra.mxu0 0.0
  %535 = vmatprep.subr.mxu0 0.0
  %536 = vmatpush1.msra.mxu0 0.0
  %537 = vmatprep.subr.mxu0 0.0
  %538 = vmatpush1.msra.mxu0 0.0
  %539 = vmatprep.subr.mxu0 0.0
  %540 = vmatpush1.msra.mxu0 0.0
  %541 = vmatprep.subr.mxu0 0.0
  %542 = vmatpush1.msra.mxu0 0.0
  %543 = vmatprep.subr.mxu0 0.0
  %544 = vmatpush1.msra.mxu0 0.0
  %545 = vmatprep.subr.mxu0 0.0
  %546 = vmatpush1.msra.mxu0 0.0
  %547 = vmatprep.subr.mxu0 0.0
  %548 = vmatpush1.msra.mxu0 0.0
  %549 = vmatprep.subr.mxu0 0.0
  %550 = vmatpush1.msra.mxu0 0.0
  %551 = vmatprep.subr.mxu0 0.0
  %552 = vmatpush1.msra.mxu0 0.0
  %553 = vmatprep.mubr.f32.mxu0 0.0
  %554 = vmatmul.mubr.f32.gmra.mrb[0].mxu0 %v478
  %v555 = vpop.f32.mrb[0].mxu0
  %v556 = vadd.f32 0.0, %v555
  %v557 = vpop.f32.mrb[0].mxu0
  %558 = vmatprep.mubr.f32.mxu0 0.0
  %559 = vmatmul.mubr.f32.gmra.mrb[0].mxu0 %v481
  %v560 = vpop.f32.mrb[0].mxu0
  %v561 = vadd.f32 0.0, %v560
  %v562 = vpop.f32.mrb[0].mxu0
  %563 = vmatprep.mubr.f32.mxu0 0.0
  %564 = vmatmul.mubr.f32.gmra.mrb[0].mxu0 %v484
  %v565 = vpop.f32.mrb[0].mxu0
  %v566 = vadd.f32 0.0, %v565
  %v567 = vpop.f32.mrb[0].mxu0
  %568 = vmatprep.mubr.f32.mxu0 0.0
  %569 = vmatmul.mubr.f32.gmra.mrb[0].mxu0 %v487
  %v570 = vpop.f32.mrb[0].mxu0
  %v571 = vadd.f32 0.0, %v570
  %v572 = vpop.f32.mrb[0].mxu0
  %573 = vdwg.mxu0
  %v574 = vadd.f32 %v464, %v556
  %v575 = vadd.f32 %v465, %v561
  %v576 = vadd.f32 %v466, %v566
  %v577 = vadd.f32 %v467, %v571
  %v578 = vld [vmem:[%s2] sm:$0x1]
  %v579 = vlaneseq
  %v580 = vshrl.u32 %v579, 7
  %v581 = vsub.s32 0, %v580
  %v582 = vrot.slane %v578, %v581
  %v583 = vadd.f32 %v574, %v582
  %v584 = vadd.f32 %v575, %v582
  %v585 = vadd.f32 %v576, %v582
  %v586 = vadd.f32 %v577, %v582
  %v587 = vmax.f32 %v583, 0.0
  %v588 = vmax.f32 %v584, 0.0
  %v589 = vmax.f32 %v585, 0.0
  %v590 = vmax.f32 %v586, 0.0
  %v591 = vsel %vm20, %v587, 0.0
  %v592 = vsel %vm20, %v588, 0.0
  %v593 = vadd.f32 %v591, %v592
  %v594 = vsel %vm20, %v589, 0.0
  %v595 = vadd.f32 %v593, %v594
  %v596 = vsel %vm20, %v590, 0.0
  %v597 = vadd.f32 %v595, %v596
  %v598 = vrot.slane %v597, 4
  %v599 = vadd.f32 %v597, %v598
  %v600 = vrot.slane %v599, 2
  %v601 = vadd.f32 %v599, %v600
  %v602 = vrot.slane %v601, 1
  %v603 = vadd.f32 %v601, %v602
  %v604 = vrcp.pop 32.0
  %v605 = vmul.f32 %v603, %v604
  %v606 = vmul.f32 %v587, %v587
  %v607 = vmul.f32 %v588, %v588
  %v608 = vmul.f32 %v589, %v589
  %v609 = vmul.f32 %v590, %v590
  %v610 = vsel %vm20, %v606, 0.0
  %v611 = vsel %vm20, %v607, 0.0
  %v612 = vadd.f32 %v610, %v611
  %v613 = vsel %vm20, %v608, 0.0
  %v614 = vadd.f32 %v612, %v613
  %v615 = vsel %vm20, %v609, 0.0
  %v616 = vadd.f32 %v614, %v615
  %v617 = vrot.slane %v616, 4
  %v618 = vadd.f32 %v616, %v617
  %v619 = vrot.slane %v618, 2
  %v620 = vadd.f32 %v618, %v619
  %v621 = vrot.slane %v620, 1
  %v622 = vadd.f32 %v620, %v621
  %v623 = vmul.f32 %v622, %v604
  %v624 = vmul.f32 %v605, %v605
  %v625 = vsub.f32 %v623, %v624
  %v626 = vsub.f32 %v587, %v605
  %v627 = vsub.f32 %v588, %v605
  %v628 = vsub.f32 %v589, %v605
  %v629 = vsub.f32 %v590, %v605
  %v630 = vadd.f32 %v625, 1e-05
  %v631 = vrsqrt.pop %v630
  %v632 = vmul.f32 %v626, %v631
  %v633 = vmul.f32 %v627, %v631
  %v634 = vmul.f32 %v628, %v631
  %v635 = vmul.f32 %v629, %v631
  %v636 = vld [vmem:[%s3] sm:$0x1]
  %v637 = vlaneseq
  %v638 = vshrl.u32 %v637, 7
  %v639 = vsub.s32 0, %v638
  %v640 = vrot.slane %v636, %v639
  %v641 = vmul.f32 %v632, %v640
  %v642 = vmul.f32 %v633, %v640
  %v643 = vmul.f32 %v634, %v640
  %v644 = vmul.f32 %v635, %v640
  %v645 = vld [vmem:[%s4] sm:$0x1]
  %v646 = vlaneseq
  %v647 = vshrl.u32 %v646, 7
  %v648 = vsub.s32 0, %v647
  %v649 = vrot.slane %v645, %v648
  %v650 = vadd.f32 %v641, %v649
  %v651 = vadd.f32 %v642, %v649
  %v652 = vadd.f32 %v643, %v649
  %v653 = vadd.f32 %v644, %v649
  %654 = vst.msk [vmem:[#allocation2 + $0x8] sm:$0xff] %vm20, %v650
  %655 = vst.msk [vmem:[#allocation2 + $0x10] sm:$0xff] %vm20, %v651
  %656 = vst.msk [vmem:[#allocation2 + $0x28] sm:$0xff] %vm20, %v652
  %657 = vst.msk [vmem:[#allocation2 + $0x30] sm:$0xff] %vm20, %v653
  %v658 = vld [vmem:[#allocation2 + $0x6] sm:$0xff]
  %v659 = vld [vmem:[#allocation2 + $0xe] sm:$0xff]
  %v660 = vld [vmem:[#allocation2 + $0x26] sm:$0xff]
  %v661 = vld [vmem:[#allocation2 + $0x2e] sm:$0xff]
  %s662 = scalar_lea.vmem %s1, 160
  %v663 = vld [vmem:[%s662] sm:$0xff]
  %v664 = vld [vmem:[%s662 + $0x8] sm:$0xff]
  %v665 = vld [vmem:[%s662 + $0x10] sm:$0xff]
  %v666 = vld [vmem:[%s662 + $0x18] sm:$0xff]
  %v667 = vld [vmem:[#allocation2 + $0x7] sm:$0xff]
  %v668 = vld [vmem:[#allocation2 + $0xf] sm:$0xff]
  %v669 = vld [vmem:[#allocation2 + $0x27] sm:$0xff]
  %v670 = vld [vmem:[#allocation2 + $0x2f] sm:$0xff]
  %s671 = scalar_lea.vmem %s1, 192
  %v672 = vld [vmem:[%s671] sm:$0xff]
  %v673 = vld [vmem:[%s671 + $0x8] sm:$0xff]
  %v674 = vld [vmem:[%s671 + $0x10] sm:$0xff]
  %v675 = vld [vmem:[%s671 + $0x18] sm:$0xff]
  %v677 = vsel %vm20, %v667, 0
  %v680 = vsel %vm20, %v668, 0
  %v683 = vsel %vm20, %v669, 0
  %v686 = vsel %vm20, %v670, 0
  %688 = vmatprep.subr.mxu0 0.0
  %689 = vmatpush1.msra.mxu0 %v672
  %690 = vmatprep.subr.mxu0 0.0
  %691 = vmatpush1.msra.mxu0 %v673
  %692 = vmatprep.subr.mxu0 0.0
  %693 = vmatpush1.msra.mxu0 %v674
  %694 = vmatprep.subr.mxu0 0.0
  %695 = vmatpush1.msra.mxu0 %v675
  %696 = vmatprep.subr.mxu0 0.0
  %697 = vmatpush1.msra.mxu0 0.0
  %698 = vmatprep.subr.mxu0 0.0
  %699 = vmatpush1.msra.mxu0 0.0
  %700 = vmatprep.subr.mxu0 0.0
  %701 = vmatpush1.msra.mxu0 0.0
  %702 = vmatprep.subr.mxu0 0.0
  %703 = vmatpush1.msra.mxu0 0.0
  %704 = vmatprep.subr.mxu0 0.0
  %705 = vmatpush1.msra.mxu0 0.0
  %706 = vmatprep.subr.mxu0 0.0
  %707 = vmatpush1.msra.mxu0 0.0
  %708 = vmatprep.subr.mxu0 0.0
  %709 = vmatpush1.msra.mxu0 0.0
  %710 = vmatprep.subr.mxu0 0.0
  %711 = vmatpush1.msra.mxu0 0.0
  %712 = vmatprep.subr.mxu0 0.0
  %713 = vmatpush1.msra.mxu0 0.0
  %714 = vmatprep.subr.mxu0 0.0
  %715 = vmatpush1.msra.mxu0 0.0
  %716 = vmatprep.subr.mxu0 0.0
  %717 = vmatpush1.msra.mxu0 0.0
  %718 = vmatprep.subr.mxu0 0.0
  %719 = vmatpush1.msra.mxu0 0.0
  %720 = vmatprep.subr.mxu0 0.0
  %721 = vmatpush1.msra.mxu0 0.0
  %722 = vmatprep.subr.mxu0 0.0
  %723 = vmatpush1.msra.mxu0 0.0
  %724 = vmatprep.subr.mxu0 0.0
  %725 = vmatpush1.msra.mxu0 0.0
  %726 = vmatprep.subr.mxu0 0.0
  %727 = vmatpush1.msra.mxu0 0.0
  %728 = vmatprep.subr.mxu0 0.0
  %729 = vmatpush1.msra.mxu0 0.0
  %730 = vmatprep.subr.mxu0 0.0
  %731 = vmatpush1.msra.mxu0 0.0
  %732 = vmatprep.subr.mxu0 0.0
  %733 = vmatpush1.msra.mxu0 0.0
  %734 = vmatprep.subr.mxu0 0.0
  %735 = vmatpush1.msra.mxu0 0.0
  %736 = vmatprep.subr.mxu0 0.0
  %737 = vmatpush1.msra.mxu0 0.0
  %738 = vmatprep.subr.mxu0 0.0
  %739 = vmatpush1.msra.mxu0 0.0
  %740 = vmatprep.subr.mxu0 0.0
  %741 = vmatpush1.msra.mxu0 0.0
  %742 = vmatprep.subr.mxu0 0.0
  %743 = vmatpush1.msra.mxu0 0.0
  %744 = vmatprep.subr.mxu0 0.0
  %745 = vmatpush1.msra.mxu0 0.0
  %746 = vmatprep.subr.mxu0 0.0
  %747 = vmatpush1.msra.mxu0 0.0
  %748 = vmatprep.subr.mxu0 0.0
  %749 = vmatpush1.msra.mxu0 0.0
  %750 = vmatprep.subr.mxu0 0.0
  %751 = vmatpush1.msra.mxu0 0.0
  %752 = vmatprep.mubr.f32.mxu0 0.0
  %753 = vmatmul.mubr.f32.gmra.mrb[0].mxu0 %v677
  %v754 = vpop.f32.mrb[0].mxu0
  %v755 = vadd.f32 0.0, %v754
  %v756 = vpop.f32.mrb[0].mxu0
  %757 = vmatprep.mubr.f32.mxu0 0.0
  %758 = vmatmul.mubr.f32.gmra.mrb[0].mxu0 %v680
  %v759 = vpop.f32.mrb[0].mxu0
  %v760 = vadd.f32 0.0, %v759
  %v761 = vpop.f32.mrb[0].mxu0
  %762 = vmatprep.mubr.f32.mxu0 0.0
  %763 = vmatmul.mubr.f32.gmra.mrb[0].mxu0 %v683
  %v764 = vpop.f32.mrb[0].mxu0
  %v765 = vadd.f32 0.0, %v764
  %v766 = vpop.f32.mrb[0].mxu0
  %767 = vmatprep.mubr.f32.mxu0 0.0
  %768 = vmatmul.mubr.f32.gmra.mrb[0].mxu0 %v686
  %v769 = vpop.f32.mrb[0].mxu0
  %v770 = vadd.f32 0.0, %v769
  %v771 = vpop.f32.mrb[0].mxu0
  %772 = vdwg.mxu0
  %v774 = vsel %vm20, %v658, 0
  %v777 = vsel %vm20, %v659, 0
  %v780 = vsel %vm20, %v660, 0
  %v783 = vsel %vm20, %v661, 0
  %785 = vmatprep.subr.mxu0 0.0
  %786 = vmatpush1.msra.mxu0 %v663
  %787 = vmatprep.subr.mxu0 0.0
  %788 = vmatpush1.msra.mxu0 %v664
  %789 = vmatprep.subr.mxu0 0.0
  %790 = vmatpush1.msra.mxu0 %v665
  %791 = vmatprep.subr.mxu0 0.0
  %792 = vmatpush1.msra.mxu0 %v666
  %793 = vmatprep.subr.mxu0 0.0
  %794 = vmatpush1.msra.mxu0 0.0
  %795 = vmatprep.subr.mxu0 0.0
  %796 = vmatpush1.msra.mxu0 0.0
  %797 = vmatprep.subr.mxu0 0.0
  %798 = vmatpush1.msra.mxu0 0.0
  %799 = vmatprep.subr.mxu0 0.0
  %800 = vmatpush1.msra.mxu0 0.0
  %801 = vmatprep.subr.mxu0 0.0
  %802 = vmatpush1.msra.mxu0 0.0
  %803 = vmatprep.subr.mxu0 0.0
  %804 = vmatpush1.msra.mxu0 0.0
  %805 = vmatprep.subr.mxu0 0.0
  %806 = vmatpush1.msra.mxu0 0.0
  %807 = vmatprep.subr.mxu0 0.0
  %808 = vmatpush1.msra.mxu0 0.0
  %809 = vmatprep.subr.mxu0 0.0
  %810 = vmatpush1.msra.mxu0 0.0
  %811 = vmatprep.subr.mxu0 0.0
  %812 = vmatpush1.msra.mxu0 0.0
  %813 = vmatprep.subr.mxu0 0.0
  %814 = vmatpush1.msra.mxu0 0.0
  %815 = vmatprep.subr.mxu0 0.0
  %816 = vmatpush1.msra.mxu0 0.0
  %817 = vmatprep.subr.mxu0 0.0
  %818 = vmatpush1.msra.mxu0 0.0
  %819 = vmatprep.subr.mxu0 0.0
  %820 = vmatpush1.msra.mxu0 0.0
  %821 = vmatprep.subr.mxu0 0.0
  %822 = vmatpush1.msra.mxu0 0.0
  %823 = vmatprep.subr.mxu0 0.0
  %824 = vmatpush1.msra.mxu0 0.0
  %825 = vmatprep.subr.mxu0 0.0
  %826 = vmatpush1.msra.mxu0 0.0
  %827 = vmatprep.subr.mxu0 0.0
  %828 = vmatpush1.msra.mxu0 0.0
  %829 = vmatprep.subr.mxu0 0.0
  %830 = vmatpush1.msra.mxu0 0.0
  %831 = vmatprep.subr.mxu0 0.0
  %832 = vmatpush1.msra.mxu0 0.0
  %833 = vmatprep.subr.mxu0 0.0
  %834 = vmatpush1.msra.mxu0 0.0
  %835 = vmatprep.subr.mxu0 0.0
  %836 = vmatpush1.msra.mxu0 0.0
  %837 = vmatprep.subr.mxu0 0.0
  %838 = vmatpush1.msra.mxu0 0.0
  %839 = vmatprep.subr.mxu0 0.0
  %840 = vmatpush1.msra.mxu0 0.0
  %841 = vmatprep.subr.mxu0 0.0
  %842 = vmatpush1.msra.mxu0 0.0
  %843 = vmatprep.subr.mxu0 0.0
  %844 = vmatpush1.msra.mxu0 0.0
  %845 = vmatprep.subr.mxu0 0.0
  %846 = vmatpush1.msra.mxu0 0.0
  %847 = vmatprep.subr.mxu0 0.0
  %848 = vmatpush1.msra.mxu0 0.0
  %849 = vmatprep.mubr.f32.mxu0 0.0
  %850 = vmatmul.mubr.f32.gmra.mrb[0].mxu0 %v774
  %v851 = vpop.f32.mrb[0].mxu0
  %v852 = vadd.f32 %v755, %v851
  %v853 = vpop.f32.mrb[0].mxu0
  %854 = vmatprep.mubr.f32.mxu0 0.0
  %855 = vmatmul.mubr.f32.gmra.mrb[0].mxu0 %v777
  %v856 = vpop.f32.mrb[0].mxu0
  %v857 = vadd.f32 %v760, %v856
  %v858 = vpop.f32.mrb[0].mxu0
  %859 = vmatprep.mubr.f32.mxu0 0.0
  %860 = vmatmul.mubr.f32.gmra.mrb[0].mxu0 %v780
  %v861 = vpop.f32.mrb[0].mxu0
  %v862 = vadd.f32 %v765, %v861
  %v863 = vpop.f32.mrb[0].mxu0
  %864 = vmatprep.mubr.f32.mxu0 0.0
  %865 = vmatmul.mubr.f32.gmra.mrb[0].mxu0 %v783
  %v866 = vpop.f32.mrb[0].mxu0
  %v867 = vadd.f32 %v770, %v866
  %v868 = vpop.f32.mrb[0].mxu0
  %869 = vdwg.mxu0
  %v870 = vld [vmem:[#allocation2 + $0x8] sm:$0xff]
  %v871 = vld [vmem:[#allocation2 + $0x10] sm:$0xff]
  %v872 = vld [vmem:[#allocation2 + $0x28] sm:$0xff]
  %v873 = vld [vmem:[#allocation2 + $0x30] sm:$0xff]
  %s874 = scalar_lea.vmem %s1, 224
  %v875 = vld [vmem:[%s874] sm:$0xff]
  %v876 = vld [vmem:[%s874 + $0x8] sm:$0xff]
  %v877 = vld [vmem:[%s874 + $0x10] sm:$0xff]
  %v878 = vld [vmem:[%s874 + $0x18] sm:$0xff]
  %v880 = vsel %vm20, %v870, 0
  %v883 = vsel %vm20, %v871, 0
  %v886 = vsel %vm20, %v872, 0
  %v889 = vsel %vm20, %v873, 0
  %891 = vmatprep.subr.mxu0 0.0
  %892 = vmatpush1.msra.mxu0 %v875
  %893 = vmatprep.subr.mxu0 0.0
  %894 = vmatpush1.msra.mxu0 %v876
  %895 = vmatprep.subr.mxu0 0.0
  %896 = vmatpush1.msra.mxu0 %v877
  %897 = vmatprep.subr.mxu0 0.0
  %898 = vmatpush1.msra.mxu0 %v878
  %899 = vmatprep.subr.mxu0 0.0
  %900 = vmatpush1.msra.mxu0 0.0
  %901 = vmatprep.subr.mxu0 0.0
  %902 = vmatpush1.msra.mxu0 0.0
  %903 = vmatprep.subr.mxu0 0.0
  %904 = vmatpush1.msra.mxu0 0.0
  %905 = vmatprep.subr.mxu0 0.0
  %906 = vmatpush1.msra.mxu0 0.0
  %907 = vmatprep.subr.mxu0 0.0
  %908 = vmatpush1.msra.mxu0 0.0
  %909 = vmatprep.subr.mxu0 0.0
  %910 = vmatpush1.msra.mxu0 0.0
  %911 = vmatprep.subr.mxu0 0.0
  %912 = vmatpush1.msra.mxu0 0.0
  %913 = vmatprep.subr.mxu0 0.0
  %914 = vmatpush1.msra.mxu0 0.0
  %915 = vmatprep.subr.mxu0 0.0
  %916 = vmatpush1.msra.mxu0 0.0
  %917 = vmatprep.subr.mxu0 0.0
  %918 = vmatpush1.msra.mxu0 0.0
  %919 = vmatprep.subr.mxu0 0.0
  %920 = vmatpush1.msra.mxu0 0.0
  %921 = vmatprep.subr.mxu0 0.0
  %922 = vmatpush1.msra.mxu0 0.0
  %923 = vmatprep.subr.mxu0 0.0
  %924 = vmatpush1.msra.mxu0 0.0
  %925 = vmatprep.subr.mxu0 0.0
  %926 = vmatpush1.msra.mxu0 0.0
  %927 = vmatprep.subr.mxu0 0.0
  %928 = vmatpush1.msra.mxu0 0.0
  %929 = vmatprep.subr.mxu0 0.0
  %930 = vmatpush1.msra.mxu0 0.0
  %931 = vmatprep.subr.mxu0 0.0
  %932 = vmatpush1.msra.mxu0 0.0
  %933 = vmatprep.subr.mxu0 0.0
  %934 = vmatpush1.msra.mxu0 0.0
  %935 = vmatprep.subr.mxu0 0.0
  %936 = vmatpush1.msra.mxu0 0.0
  %937 = vmatprep.subr.mxu0 0.0
  %938 = vmatpush1.msra.mxu0 0.0
  %939 = vmatprep.subr.mxu0 0.0
  %940 = vmatpush1.msra.mxu0 0.0
  %941 = vmatprep.subr.mxu0 0.0
  %942 = vmatpush1.msra.mxu0 0.0
  %943 = vmatprep.subr.mxu0 0.0
  %944 = vmatpush1.msra.mxu0 0.0
  %945 = vmatprep.subr.mxu0 0.0
  %946 = vmatpush1.msra.mxu0 0.0
  %947 = vmatprep.subr.mxu0 0.0
  %948 = vmatpush1.msra.mxu0 0.0
  %949 = vmatprep.subr.mxu0 0.0
  %950 = vmatpush1.msra.mxu0 0.0
  %951 = vmatprep.subr.mxu0 0.0
  %952 = vmatpush1.msra.mxu0 0.0
  %953 = vmatprep.subr.mxu0 0.0
  %954 = vmatpush1.msra.mxu0 0.0
  %955 = vmatprep.mubr.f32.mxu0 0.0
  %956 = vmatmul.mubr.f32.gmra.mrb[0].mxu0 %v880
  %v957 = vpop.f32.mrb[0].mxu0
  %v958 = vadd.f32 0.0, %v957
  %v959 = vpop.f32.mrb[0].mxu0
  %960 = vmatprep.mubr.f32.mxu0 0.0
  %961 = vmatmul.mubr.f32.gmra.mrb[0].mxu0 %v883
  %v962 = vpop.f32.mrb[0].mxu0
  %v963 = vadd.f32 0.0, %v962
  %v964 = vpop.f32.mrb[0].mxu0
  %965 = vmatprep.mubr.f32.mxu0 0.0
  %966 = vmatmul.mubr.f32.gmra.mrb[0].mxu0 %v886
  %v967 = vpop.f32.mrb[0].mxu0
  %v968 = vadd.f32 0.0, %v967
  %v969 = vpop.f32.mrb[0].mxu0
  %970 = vmatprep.mubr.f32.mxu0 0.0
  %971 = vmatmul.mubr.f32.gmra.mrb[0].mxu0 %v889
  %v972 = vpop.f32.mrb[0].mxu0
  %v973 = vadd.f32 0.0, %v972
  %v974 = vpop.f32.mrb[0].mxu0
  %975 = vdwg.mxu0
  %v976 = vadd.f32 %v852, %v958
  %v977 = vadd.f32 %v857, %v963
  %v978 = vadd.f32 %v862, %v968
  %v979 = vadd.f32 %v867, %v973
  %v980 = vld [vmem:[#allocation2 + $0x9] sm:$0xff]
  %v981 = vld [vmem:[#allocation2 + $0x11] sm:$0xff]
  %v982 = vld [vmem:[#allocation2 + $0x29] sm:$0xff]
  %v983 = vld [vmem:[#allocation2 + $0x31] sm:$0xff]
  %s984 = scalar_lea.vmem %s1, 256
  %v985 = vld [vmem:[%s984] sm:$0xff]
  %v986 = vld [vmem:[%s984 + $0x8] sm:$0xff]
  %v987 = vld [vmem:[%s984 + $0x10] sm:$0xff]
  %v988 = vld [vmem:[%s984 + $0x18] sm:$0xff]
  %v990 = vsel %vm20, %v980, 0
  %v993 = vsel %vm20, %v981, 0
  %v996 = vsel %vm20, %v982, 0
  %v999 = vsel %vm20, %v983, 0
  %1001 = vmatprep.subr.mxu0 0.0
  %1002 = vmatpush1.msra.mxu0 %v985
  %1003 = vmatprep.subr.mxu0 0.0
  %1004 = vmatpush1.msra.mxu0 %v986
  %1005 = vmatprep.subr.mxu0 0.0
  %1006 = vmatpush1.msra.mxu0 %v987
  %1007 = vmatprep.subr.mxu0 0.0
  %1008 = vmatpush1.msra.mxu0 %v988
  %1009 = vmatprep.subr.mxu0 0.0
  %1010 = vmatpush1.msra.mxu0 0.0
  %1011 = vmatprep.subr.mxu0 0.0
  %1012 = vmatpush1.msra.mxu0 0.0
  %1013 = vmatprep.subr.mxu0 0.0
  %1014 = vmatpush1.msra.mxu0 0.0
  %1015 = vmatprep.subr.mxu0 0.0
  %1016 = vmatpush1.msra.mxu0 0.0
  %1017 = vmatprep.subr.mxu0 0.0
  %1018 = vmatpush1.msra.mxu0 0.0
  %1019 = vmatprep.subr.mxu0 0.0
  %1020 = vmatpush1.msra.mxu0 0.0
  %1021 = vmatprep.subr.mxu0 0.0
  %1022 = vmatpush1.msra.mxu0 0.0
  %1023 = vmatprep.subr.mxu0 0.0
  %1024 = vmatpush1.msra.mxu0 0.0
  %1025 = vmatprep.subr.mxu0 0.0
  %1026 = vmatpush1.msra.mxu0 0.0
  %1027 = vmatprep.subr.mxu0 0.0
  %1028 = vmatpush1.msra.mxu0 0.0
  %1029 = vmatprep.subr.mxu0 0.0
  %1030 = vmatpush1.msra.mxu0 0.0
  %1031 = vmatprep.subr.mxu0 0.0
  %1032 = vmatpush1.msra.mxu0 0.0
  %1033 = vmatprep.subr.mxu0 0.0
  %1034 = vmatpush1.msra.mxu0 0.0
  %1035 = vmatprep.subr.mxu0 0.0
  %1036 = vmatpush1.msra.mxu0 0.0
  %1037 = vmatprep.subr.mxu0 0.0
  %1038 = vmatpush1.msra.mxu0 0.0
  %1039 = vmatprep.subr.mxu0 0.0
  %1040 = vmatpush1.msra.mxu0 0.0
  %1041 = vmatprep.subr.mxu0 0.0
  %1042 = vmatpush1.msra.mxu0 0.0
  %1043 = vmatprep.subr.mxu0 0.0
  %1044 = vmatpush1.msra.mxu0 0.0
  %1045 = vmatprep.subr.mxu0 0.0
  %1046 = vmatpush1.msra.mxu0 0.0
  %1047 = vmatprep.subr.mxu0 0.0
  %1048 = vmatpush1.msra.mxu0 0.0
  %1049 = vmatprep.subr.mxu0 0.0
  %1050 = vmatpush1.msra.mxu0 0.0
  %1051 = vmatprep.subr.mxu0 0.0
  %1052 = vmatpush1.msra.mxu0 0.0
  %1053 = vmatprep.subr.mxu0 0.0
  %1054 = vmatpush1.msra.mxu0 0.0
  %1055 = vmatprep.subr.mxu0 0.0
  %1056 = vmatpush1.msra.mxu0 0.0
  %1057 = vmatprep.subr.mxu0 0.0
  %1058 = vmatpush1.msra.mxu0 0.0
  %1059 = vmatprep.subr.mxu0 0.0
  %1060 = vmatpush1.msra.mxu0 0.0
  %1061 = vmatprep.subr.mxu0 0.0
  %1062 = vmatpush1.msra.mxu0 0.0
  %1063 = vmatprep.subr.mxu0 0.0
  %1064 = vmatpush1.msra.mxu0 0.0
  %1065 = vmatprep.mubr.f32.mxu0 0.0
  %1066 = vmatmul.mubr.f32.gmra.mrb[0].mxu0 %v990
  %v1067 = vpop.f32.mrb[0].mxu0
  %v1068 = vadd.f32 0.0, %v1067
  %v1069 = vpop.f32.mrb[0].mxu0
  %1070 = vmatprep.mubr.f32.mxu0 0.0
  %1071 = vmatmul.mubr.f32.gmra.mrb[0].mxu0 %v993
  %v1072 = vpop.f32.mrb[0].mxu0
  %v1073 = vadd.f32 0.0, %v1072
  %v1074 = vpop.f32.mrb[0].mxu0
  %1075 = vmatprep.mubr.f32.mxu0 0.0
  %1076 = vmatmul.mubr.f32.gmra.mrb[0].mxu0 %v996
  %v1077 = vpop.f32.mrb[0].mxu0
  %v1078 = vadd.f32 0.0, %v1077
  %v1079 = vpop.f32.mrb[0].mxu0
  %1080 = vmatprep.mubr.f32.mxu0 0.0
  %1081 = vmatmul.mubr.f32.gmra.mrb[0].mxu0 %v999
  %v1082 = vpop.f32.mrb[0].mxu0
  %v1083 = vadd.f32 0.0, %v1082
  %v1084 = vpop.f32.mrb[0].mxu0
  %1085 = vdwg.mxu0
  %v1086 = vadd.f32 %v976, %v1068
  %v1087 = vadd.f32 %v977, %v1073
  %v1088 = vadd.f32 %v978, %v1078
  %v1089 = vadd.f32 %v979, %v1083
  %v1090 = vld [vmem:[#allocation2 + $0xa] sm:$0xff]
  %v1091 = vld [vmem:[#allocation2 + $0x12] sm:$0xff]
  %v1092 = vld [vmem:[#allocation2 + $0x2a] sm:$0xff]
  %v1093 = vld [vmem:[#allocation2 + $0x32] sm:$0xff]
  %s1094 = scalar_lea.vmem %s1, 288
  %v1095 = vld [vmem:[%s1094] sm:$0xff]
  %v1096 = vld [vmem:[%s1094 + $0x8] sm:$0xff]
  %v1097 = vld [vmem:[%s1094 + $0x10] sm:$0xff]
  %v1098 = vld [vmem:[%s1094 + $0x18] sm:$0xff]
  %v1100 = vsel %vm20, %v1090, 0
  %v1103 = vsel %vm20, %v1091, 0
  %v1106 = vsel %vm20, %v1092, 0
  %v1109 = vsel %vm20, %v1093, 0
  %1111 = vmatprep.subr.mxu0 0.0
  %1112 = vmatpush1.msra.mxu0 %v1095
  %1113 = vmatprep.subr.mxu0 0.0
  %1114 = vmatpush1.msra.mxu0 %v1096
  %1115 = vmatprep.subr.mxu0 0.0
  %1116 = vmatpush1.msra.mxu0 %v1097
  %1117 = vmatprep.subr.mxu0 0.0
  %1118 = vmatpush1.msra.mxu0 %v1098
  %1119 = vmatprep.subr.mxu0 0.0
  %1120 = vmatpush1.msra.mxu0 0.0
  %1121 = vmatprep.subr.mxu0 0.0
  %1122 = vmatpush1.msra.mxu0 0.0
  %1123 = vmatprep.subr.mxu0 0.0
  %1124 = vmatpush1.msra.mxu0 0.0
  %1125 = vmatprep.subr.mxu0 0.0
  %1126 = vmatpush1.msra.mxu0 0.0
  %1127 = vmatprep.subr.mxu0 0.0
  %1128 = vmatpush1.msra.mxu0 0.0
  %1129 = vmatprep.subr.mxu0 0.0
  %1130 = vmatpush1.msra.mxu0 0.0
  %1131 = vmatprep.subr.mxu0 0.0
  %1132 = vmatpush1.msra.mxu0 0.0
  %1133 = vmatprep.subr.mxu0 0.0
  %1134 = vmatpush1.msra.mxu0 0.0
  %1135 = vmatprep.subr.mxu0 0.0
  %1136 = vmatpush1.msra.mxu0 0.0
  %1137 = vmatprep.subr.mxu0 0.0
  %1138 = vmatpush1.msra.mxu0 0.0
  %1139 = vmatprep.subr.mxu0 0.0
  %1140 = vmatpush1.msra.mxu0 0.0
  %1141 = vmatprep.subr.mxu0 0.0
  %1142 = vmatpush1.msra.mxu0 0.0
  %1143 = vmatprep.subr.mxu0 0.0
  %1144 = vmatpush1.msra.mxu0 0.0
  %1145 = vmatprep.subr.mxu0 0.0
  %1146 = vmatpush1.msra.mxu0 0.0
  %1147 = vmatprep.subr.mxu0 0.0
  %1148 = vmatpush1.msra.mxu0 0.0
  %1149 = vmatprep.subr.mxu0 0.0
  %1150 = vmatpush1.msra.mxu0 0.0
  %1151 = vmatprep.subr.mxu0 0.0
  %1152 = vmatpush1.msra.mxu0 0.0
  %1153 = vmatprep.subr.mxu0 0.0
  %1154 = vmatpush1.msra.mxu0 0.0
  %1155 = vmatprep.subr.mxu0 0.0
  %1156 = vmatpush1.msra.mxu0 0.0
  %1157 = vmatprep.subr.mxu0 0.0
  %1158 = vmatpush1.msra.mxu0 0.0
  %1159 = vmatprep.subr.mxu0 0.0
  %1160 = vmatpush1.msra.mxu0 0.0
  %1161 = vmatprep.subr.mxu0 0.0
  %1162 = vmatpush1.msra.mxu0 0.0
  %1163 = vmatprep.subr.mxu0 0.0
  %1164 = vmatpush1.msra.mxu0 0.0
  %1165 = vmatprep.subr.mxu0 0.0
  %1166 = vmatpush1.msra.mxu0 0.0
  %1167 = vmatprep.subr.mxu0 0.0
  %1168 = vmatpush1.msra.mxu0 0.0
  %1169 = vmatprep.subr.mxu0 0.0
  %1170 = vmatpush1.msra.mxu0 0.0
  %1171 = vmatprep.subr.mxu0 0.0
  %1172 = vmatpush1.msra.mxu0 0.0
  %1173 = vmatprep.subr.mxu0 0.0
  %1174 = vmatpush1.msra.mxu0 0.0
  %1175 = vmatprep.mubr.f32.mxu0 0.0
  %1176 = vmatmul.mubr.f32.gmra.mrb[0].mxu0 %v1100
  %v1177 = vpop.f32.mrb[0].mxu0
  %v1178 = vadd.f32 0.0, %v1177
  %v1179 = vpop.f32.mrb[0].mxu0
  %1180 = vmatprep.mubr.f32.mxu0 0.0
  %1181 = vmatmul.mubr.f32.gmra.mrb[0].mxu0 %v1103
  %v1182 = vpop.f32.mrb[0].mxu0
  %v1183 = vadd.f32 0.0, %v1182
  %v1184 = vpop.f32.mrb[0].mxu0
  %1185 = vmatprep.mubr.f32.mxu0 0.0
  %1186 = vmatmul.mubr.f32.gmra.mrb[0].mxu0 %v1106
  %v1187 = vpop.f32.mrb[0].mxu0
  %v1188 = vadd.f32 0.0, %v1187
  %v1189 = vpop.f32.mrb[0].mxu0
  %1190 = vmatprep.mubr.f32.mxu0 0.0
  %1191 = vmatmul.mubr.f32.gmra.mrb[0].mxu0 %v1109
  %v1192 = vpop.f32.mrb[0].mxu0
  %v1193 = vadd.f32 0.0, %v1192
  %v1194 = vpop.f32.mrb[0].mxu0
  %1195 = vdwg.mxu0
  %v1196 = vadd.f32 %v1086, %v1178
  %v1197 = vadd.f32 %v1087, %v1183
  %v1198 = vadd.f32 %v1088, %v1188
  %v1199 = vadd.f32 %v1089, %v1193
  %v1200 = vld [vmem:[%s2 + $0x1] sm:$0x1]
  %v1201 = vlaneseq
  %v1202 = vshrl.u32 %v1201, 7
  %v1203 = vsub.s32 0, %v1202
  %v1204 = vrot.slane %v1200, %v1203
  %v1205 = vadd.f32 %v1196, %v1204
  %v1206 = vadd.f32 %v1197, %v1204
  %v1207 = vadd.f32 %v1198, %v1204
  %v1208 = vadd.f32 %v1199, %v1204
  %v1209 = vmax.f32 %v1205, 0.0
  %v1210 = vmax.f32 %v1206, 0.0
  %v1211 = vmax.f32 %v1207, 0.0
  %v1212 = vmax.f32 %v1208, 0.0
  %v1213 = vsel %vm20, %v1209, 0.0
  %v1214 = vsel %vm20, %v1210, 0.0
  %v1215 = vadd.f32 %v1213, %v1214
  %v1216 = vsel %vm20, %v1211, 0.0
  %v1217 = vadd.f32 %v1215, %v1216
  %v1218 = vsel %vm20, %v1212, 0.0
  %v1219 = vadd.f32 %v1217, %v1218
  %v1220 = vrot.slane %v1219, 4
  %v1221 = vadd.f32 %v1219, %v1220
  %v1222 = vrot.slane %v1221, 2
  %v1223 = vadd.f32 %v1221, %v1222
  %v1224 = vrot.slane %v1223, 1
  %v1225 = vadd.f32 %v1223, %v1224
  %v1226 = vmul.f32 %v1225, %v604
  %v1227 = vmul.f32 %v1209, %v1209
  %v1228 = vmul.f32 %v1210, %v1210
  %v1229 = vmul.f32 %v1211, %v1211
  %v1230 = vmul.f32 %v1212, %v1212
  %v1231 = vsel %vm20, %v1227, 0.0
  %v1232 = vsel %vm20, %v1228, 0.0
  %v1233 = vadd.f32 %v1231, %v1232
  %v1234 = vsel %vm20, %v1229, 0.0
  %v1235 = vadd.f32 %v1233, %v1234
  %v1236 = vsel %vm20, %v1230, 0.0
  %v1237 = vadd.f32 %v1235, %v1236
  %v1238 = vrot.slane %v1237, 4
  %v1239 = vadd.f32 %v1237, %v1238
  %v1240 = vrot.slane %v1239, 2
  %v1241 = vadd.f32 %v1239, %v1240
  %v1242 = vrot.slane %v1241, 1
  %v1243 = vadd.f32 %v1241, %v1242
  %v1244 = vmul.f32 %v1243, %v604
  %v1245 = vmul.f32 %v1226, %v1226
  %v1246 = vsub.f32 %v1244, %v1245
  %v1247 = vsub.f32 %v1209, %v1226
  %v1248 = vsub.f32 %v1210, %v1226
  %v1249 = vsub.f32 %v1211, %v1226
  %v1250 = vsub.f32 %v1212, %v1226
  %v1251 = vadd.f32 %v1246, 1e-05
  %v1252 = vrsqrt.pop %v1251
  %v1253 = vmul.f32 %v1247, %v1252
  %v1254 = vmul.f32 %v1248, %v1252
  %v1255 = vmul.f32 %v1249, %v1252
  %v1256 = vmul.f32 %v1250, %v1252
  %v1257 = vld [vmem:[%s3 + $0x1] sm:$0x1]
  %v1258 = vlaneseq
  %v1259 = vshrl.u32 %v1258, 7
  %v1260 = vsub.s32 0, %v1259
  %v1261 = vrot.slane %v1257, %v1260
  %v1262 = vmul.f32 %v1253, %v1261
  %v1263 = vmul.f32 %v1254, %v1261
  %v1264 = vmul.f32 %v1255, %v1261
  %v1265 = vmul.f32 %v1256, %v1261
  %v1266 = vld [vmem:[%s4 + $0x1] sm:$0x1]
  %v1267 = vlaneseq
  %v1268 = vshrl.u32 %v1267, 7
  %v1269 = vsub.s32 0, %v1268
  %v1270 = vrot.slane %v1266, %v1269
  %v1271 = vadd.f32 %v1262, %v1270
  %v1272 = vadd.f32 %v1263, %v1270
  %v1273 = vadd.f32 %v1264, %v1270
  %v1274 = vadd.f32 %v1265, %v1270
  %1275 = vst.msk [vmem:[#allocation2 + $0x8] sm:$0xff] %vm20, %v1271
  %1276 = vst.msk [vmem:[#allocation2 + $0x10] sm:$0xff] %vm20, %v1272
  %1277 = vst.msk [vmem:[#allocation2 + $0x28] sm:$0xff] %vm20, %v1273
  %1278 = vst.msk [vmem:[#allocation2 + $0x30] sm:$0xff] %vm20, %v1274
  %v1279 = vld [vmem:[#allocation2 + $0x6] sm:$0xff]
  %v1280 = vld [vmem:[#allocation2 + $0xe] sm:$0xff]
  %v1281 = vld [vmem:[#allocation2 + $0x26] sm:$0xff]
  %v1282 = vld [vmem:[#allocation2 + $0x2e] sm:$0xff]
  %s1283 = scalar_lea.vmem %s1, 320
  %v1284 = vld [vmem:[%s1283] sm:$0xff]
  %v1285 = vld [vmem:[%s1283 + $0x8] sm:$0xff]
  %v1286 = vld [vmem:[%s1283 + $0x10] sm:$0xff]
  %v1287 = vld [vmem:[%s1283 + $0x18] sm:$0xff]
  %v1288 = vld [vmem:[#allocation2 + $0x7] sm:$0xff]
  %v1289 = vld [vmem:[#allocation2 + $0xf] sm:$0xff]
  %v1290 = vld [vmem:[#allocation2 + $0x27] sm:$0xff]
  %v1291 = vld [vmem:[#allocation2 + $0x2f] sm:$0xff]
  %s1292 = scalar_lea.vmem %s1, 352
  %v1293 = vld [vmem:[%s1292] sm:$0xff]
  %v1294 = vld [vmem:[%s1292 + $0x8] sm:$0xff]
  %v1295 = vld [vmem:[%s1292 + $0x10] sm:$0xff]
  %v1296 = vld [vmem:[%s1292 + $0x18] sm:$0xff]
  %v1298 = vsel %vm20, %v1288, 0
  %v1301 = vsel %vm20, %v1289, 0
  %v1304 = vsel %vm20, %v1290, 0
  %v1307 = vsel %vm20, %v1291, 0
  %1309 = vmatprep.subr.mxu0 0.0
  %1310 = vmatpush1.msra.mxu0 %v1293
  %1311 = vmatprep.subr.mxu0 0.0
  %1312 = vmatpush1.msra.mxu0 %v1294
  %1313 = vmatprep.subr.mxu0 0.0
  %1314 = vmatpush1.msra.mxu0 %v1295
  %1315 = vmatprep.subr.mxu0 0.0
  %1316 = vmatpush1.msra.mxu0 %v1296
  %1317 = vmatprep.subr.mxu0 0.0
  %1318 = vmatpush1.msra.mxu0 0.0
  %1319 = vmatprep.subr.mxu0 0.0
  %1320 = vmatpush1.msra.mxu0 0.0
  %1321 = vmatprep.subr.mxu0 0.0
  %1322 = vmatpush1.msra.mxu0 0.0
  %1323 = vmatprep.subr.mxu0 0.0
  %1324 = vmatpush1.msra.mxu0 0.0
  %1325 = vmatprep.subr.mxu0 0.0
  %1326 = vmatpush1.msra.mxu0 0.0
  %1327 = vmatprep.subr.mxu0 0.0
  %1328 = vmatpush1.msra.mxu0 0.0
  %1329 = vmatprep.subr.mxu0 0.0
  %1330 = vmatpush1.msra.mxu0 0.0
  %1331 = vmatprep.subr.mxu0 0.0
  %1332 = vmatpush1.msra.mxu0 0.0
  %1333 = vmatprep.subr.mxu0 0.0
  %1334 = vmatpush1.msra.mxu0 0.0
  %1335 = vmatprep.subr.mxu0 0.0
  %1336 = vmatpush1.msra.mxu0 0.0
  %1337 = vmatprep.subr.mxu0 0.0
  %1338 = vmatpush1.msra.mxu0 0.0
  %1339 = vmatprep.subr.mxu0 0.0
  %1340 = vmatpush1.msra.mxu0 0.0
  %1341 = vmatprep.subr.mxu0 0.0
  %1342 = vmatpush1.msra.mxu0 0.0
  %1343 = vmatprep.subr.mxu0 0.0
  %1344 = vmatpush1.msra.mxu0 0.0
  %1345 = vmatprep.subr.mxu0 0.0
  %1346 = vmatpush1.msra.mxu0 0.0
  %1347 = vmatprep.subr.mxu0 0.0
  %1348 = vmatpush1.msra.mxu0 0.0
  %1349 = vmatprep.subr.mxu0 0.0
  %1350 = vmatpush1.msra.mxu0 0.0
  %1351 = vmatprep.subr.mxu0 0.0
  %1352 = vmatpush1.msra.mxu0 0.0
  %1353 = vmatprep.subr.mxu0 0.0
  %1354 = vmatpush1.msra.mxu0 0.0
  %1355 = vmatprep.subr.mxu0 0.0
  %1356 = vmatpush1.msra.mxu0 0.0
  %1357 = vmatprep.subr.mxu0 0.0
  %1358 = vmatpush1.msra.mxu0 0.0
  %1359 = vmatprep.subr.mxu0 0.0
  %1360 = vmatpush1.msra.mxu0 0.0
  %1361 = vmatprep.subr.mxu0 0.0
  %1362 = vmatpush1.msra.mxu0 0.0
  %1363 = vmatprep.subr.mxu0 0.0
  %1364 = vmatpush1.msra.mxu0 0.0
  %1365 = vmatprep.subr.mxu0 0.0
  %1366 = vmatpush1.msra.mxu0 0.0
  %1367 = vmatprep.subr.mxu0 0.0
  %1368 = vmatpush1.msra.mxu0 0.0
  %1369 = vmatprep.subr.mxu0 0.0
  %1370 = vmatpush1.msra.mxu0 0.0
  %1371 = vmatprep.subr.mxu0 0.0
  %1372 = vmatpush1.msra.mxu0 0.0
  %1373 = vmatprep.mubr.f32.mxu0 0.0
  %1374 = vmatmul.mubr.f32.gmra.mrb[0].mxu0 %v1298
  %v1375 = vpop.f32.mrb[0].mxu0
  %v1376 = vadd.f32 0.0, %v1375
  %v1377 = vpop.f32.mrb[0].mxu0
  %1378 = vmatprep.mubr.f32.mxu0 0.0
  %1379 = vmatmul.mubr.f32.gmra.mrb[0].mxu0 %v1301
  %v1380 = vpop.f32.mrb[0].mxu0
  %v1381 = vadd.f32 0.0, %v1380
  %v1382 = vpop.f32.mrb[0].mxu0
  %1383 = vmatprep.mubr.f32.mxu0 0.0
  %1384 = vmatmul.mubr.f32.gmra.mrb[0].mxu0 %v1304
  %v1385 = vpop.f32.mrb[0].mxu0
  %v1386 = vadd.f32 0.0, %v1385
  %v1387 = vpop.f32.mrb[0].mxu0
  %1388 = vmatprep.mubr.f32.mxu0 0.0
  %1389 = vmatmul.mubr.f32.gmra.mrb[0].mxu0 %v1307
  %v1390 = vpop.f32.mrb[0].mxu0
  %v1391 = vadd.f32 0.0, %v1390
  %v1392 = vpop.f32.mrb[0].mxu0
  %1393 = vdwg.mxu0
  %v1395 = vsel %vm20, %v1279, 0
  %v1398 = vsel %vm20, %v1280, 0
  %v1401 = vsel %vm20, %v1281, 0
  %v1404 = vsel %vm20, %v1282, 0
  %1406 = vmatprep.subr.mxu0 0.0
  %1407 = vmatpush1.msra.mxu0 %v1284
  %1408 = vmatprep.subr.mxu0 0.0
  %1409 = vmatpush1.msra.mxu0 %v1285
  %1410 = vmatprep.subr.mxu0 0.0
  %1411 = vmatpush1.msra.mxu0 %v1286
  %1412 = vmatprep.subr.mxu0 0.0
  %1413 = vmatpush1.msra.mxu0 %v1287
  %1414 = vmatprep.subr.mxu0 0.0
  %1415 = vmatpush1.msra.mxu0 0.0
  %1416 = vmatprep.subr.mxu0 0.0
  %1417 = vmatpush1.msra.mxu0 0.0
  %1418 = vmatprep.subr.mxu0 0.0
  %1419 = vmatpush1.msra.mxu0 0.0
  %1420 = vmatprep.subr.mxu0 0.0
  %1421 = vmatpush1.msra.mxu0 0.0
  %1422 = vmatprep.subr.mxu0 0.0
  %1423 = vmatpush1.msra.mxu0 0.0
  %1424 = vmatprep.subr.mxu0 0.0
  %1425 = vmatpush1.msra.mxu0 0.0
  %1426 = vmatprep.subr.mxu0 0.0
  %1427 = vmatpush1.msra.mxu0 0.0
  %1428 = vmatprep.subr.mxu0 0.0
  %1429 = vmatpush1.msra.mxu0 0.0
  %1430 = vmatprep.subr.mxu0 0.0
  %1431 = vmatpush1.msra.mxu0 0.0
  %1432 = vmatprep.subr.mxu0 0.0
  %1433 = vmatpush1.msra.mxu0 0.0
  %1434 = vmatprep.subr.mxu0 0.0
  %1435 = vmatpush1.msra.mxu0 0.0
  %1436 = vmatprep.subr.mxu0 0.0
  %1437 = vmatpush1.msra.mxu0 0.0
  %1438 = vmatprep.subr.mxu0 0.0
  %1439 = vmatpush1.msra.mxu0 0.0
  %1440 = vmatprep.subr.mxu0 0.0
  %1441 = vmatpush1.msra.mxu0 0.0
  %1442 = vmatprep.subr.mxu0 0.0
  %1443 = vmatpush1.msra.mxu0 0.0
  %1444 = vmatprep.subr.mxu0 0.0
  %1445 = vmatpush1.msra.mxu0 0.0
  %1446 = vmatprep.subr.mxu0 0.0
  %1447 = vmatpush1.msra.mxu0 0.0
  %1448 = vmatprep.subr.mxu0 0.0
  %1449 = vmatpush1.msra.mxu0 0.0
  %1450 = vmatprep.subr.mxu0 0.0
  %1451 = vmatpush1.msra.mxu0 0.0
  %1452 = vmatprep.subr.mxu0 0.0
  %1453 = vmatpush1.msra.mxu0 0.0
  %1454 = vmatprep.subr.mxu0 0.0
  %1455 = vmatpush1.msra.mxu0 0.0
  %1456 = vmatprep.subr.mxu0 0.0
  %1457 = vmatpush1.msra.mxu0 0.0
  %1458 = vmatprep.subr.mxu0 0.0
  %1459 = vmatpush1.msra.mxu0 0.0
  %1460 = vmatprep.subr.mxu0 0.0
  %1461 = vmatpush1.msra.mxu0 0.0
  %1462 = vmatprep.subr.mxu0 0.0
  %1463 = vmatpush1.msra.mxu0 0.0
  %1464 = vmatprep.subr.mxu0 0.0
  %1465 = vmatpush1.msra.mxu0 0.0
  %1466 = vmatprep.subr.mxu0 0.0
  %1467 = vmatpush1.msra.mxu0 0.0
  %1468 = vmatprep.subr.mxu0 0.0
  %1469 = vmatpush1.msra.mxu0 0.0
  %1470 = vmatprep.mubr.f32.mxu0 0.0
  %1471 = vmatmul.mubr.f32.gmra.mrb[0].mxu0 %v1395
  %v1472 = vpop.f32.mrb[0].mxu0
  %v1473 = vadd.f32 %v1376, %v1472
  %v1474 = vpop.f32.mrb[0].mxu0
  %1475 = vmatprep.mubr.f32.mxu0 0.0
  %1476 = vmatmul.mubr.f32.gmra.mrb[0].mxu0 %v1398
  %v1477 = vpop.f32.mrb[0].mxu0
  %v1478 = vadd.f32 %v1381, %v1477
  %v1479 = vpop.f32.mrb[0].mxu0
  %1480 = vmatprep.mubr.f32.mxu0 0.0
  %1481 = vmatmul.mubr.f32.gmra.mrb[0].mxu0 %v1401
  %v1482 = vpop.f32.mrb[0].mxu0
  %v1483 = vadd.f32 %v1386, %v1482
  %v1484 = vpop.f32.mrb[0].mxu0
  %1485 = vmatprep.mubr.f32.mxu0 0.0
  %1486 = vmatmul.mubr.f32.gmra.mrb[0].mxu0 %v1404
  %v1487 = vpop.f32.mrb[0].mxu0
  %v1488 = vadd.f32 %v1391, %v1487
  %v1489 = vpop.f32.mrb[0].mxu0
  %1490 = vdwg.mxu0
  %v1491 = vld [vmem:[#allocation2 + $0x8] sm:$0xff]
  %v1492 = vld [vmem:[#allocation2 + $0x10] sm:$0xff]
  %v1493 = vld [vmem:[#allocation2 + $0x28] sm:$0xff]
  %v1494 = vld [vmem:[#allocation2 + $0x30] sm:$0xff]
  %s1495 = scalar_lea.vmem %s1, 384
  %v1496 = vld [vmem:[%s1495] sm:$0xff]
  %v1497 = vld [vmem:[%s1495 + $0x8] sm:$0xff]
  %v1498 = vld [vmem:[%s1495 + $0x10] sm:$0xff]
  %v1499 = vld [vmem:[%s1495 + $0x18] sm:$0xff]
  %v1501 = vsel %vm20, %v1491, 0
  %v1504 = vsel %vm20, %v1492, 0
  %v1507 = vsel %vm20, %v1493, 0
  %v1510 = vsel %vm20, %v1494, 0
  %1512 = vmatprep.subr.mxu0 0.0
  %1513 = vmatpush1.msra.mxu0 %v1496
  %1514 = vmatprep.subr.mxu0 0.0
  %1515 = vmatpush1.msra.mxu0 %v1497
  %1516 = vmatprep.subr.mxu0 0.0
  %1517 = vmatpush1.msra.mxu0 %v1498
  %1518 = vmatprep.subr.mxu0 0.0
  %1519 = vmatpush1.msra.mxu0 %v1499
  %1520 = vmatprep.subr.mxu0 0.0
  %1521 = vmatpush1.msra.mxu0 0.0
  %1522 = vmatprep.subr.mxu0 0.0
  %1523 = vmatpush1.msra.mxu0 0.0
  %1524 = vmatprep.subr.mxu0 0.0
  %1525 = vmatpush1.msra.mxu0 0.0
  %1526 = vmatprep.subr.mxu0 0.0
  %1527 = vmatpush1.msra.mxu0 0.0
  %1528 = vmatprep.subr.mxu0 0.0
  %1529 = vmatpush1.msra.mxu0 0.0
  %1530 = vmatprep.subr.mxu0 0.0
  %1531 = vmatpush1.msra.mxu0 0.0
  %1532 = vmatprep.subr.mxu0 0.0
  %1533 = vmatpush1.msra.mxu0 0.0
  %1534 = vmatprep.subr.mxu0 0.0
  %1535 = vmatpush1.msra.mxu0 0.0
  %1536 = vmatprep.subr.mxu0 0.0
  %1537 = vmatpush1.msra.mxu0 0.0
  %1538 = vmatprep.subr.mxu0 0.0
  %1539 = vmatpush1.msra.mxu0 0.0
  %1540 = vmatprep.subr.mxu0 0.0
  %1541 = vmatpush1.msra.mxu0 0.0
  %1542 = vmatprep.subr.mxu0 0.0
  %1543 = vmatpush1.msra.mxu0 0.0
  %1544 = vmatprep.subr.mxu0 0.0
  %1545 = vmatpush1.msra.mxu0 0.0
  %1546 = vmatprep.subr.mxu0 0.0
  %1547 = vmatpush1.msra.mxu0 0.0
  %1548 = vmatprep.subr.mxu0 0.0
  %1549 = vmatpush1.msra.mxu0 0.0
  %1550 = vmatprep.subr.mxu0 0.0
  %1551 = vmatpush1.msra.mxu0 0.0
  %1552 = vmatprep.subr.mxu0 0.0
  %1553 = vmatpush1.msra.mxu0 0.0
  %1554 = vmatprep.subr.mxu0 0.0
  %1555 = vmatpush1.msra.mxu0 0.0
  %1556 = vmatprep.subr.mxu0 0.0
  %1557 = vmatpush1.msra.mxu0 0.0
  %1558 = vmatprep.subr.mxu0 0.0
  %1559 = vmatpush1.msra.mxu0 0.0
  %1560 = vmatprep.subr.mxu0 0.0
  %1561 = vmatpush1.msra.mxu0 0.0
  %1562 = vmatprep.subr.mxu0 0.0
  %1563 = vmatpush1.msra.mxu0 0.0
  %1564 = vmatprep.subr.mxu0 0.0
  %1565 = vmatpush1.msra.mxu0 0.0
  %1566 = vmatprep.subr.mxu0 0.0
  %1567 = vmatpush1.msra.mxu0 0.0
  %1568 = vmatprep.subr.mxu0 0.0
  %1569 = vmatpush1.msra.mxu0 0.0
  %1570 = vmatprep.subr.mxu0 0.0
  %1571 = vmatpush1.msra.mxu0 0.0
  %1572 = vmatprep.subr.mxu0 0.0
  %1573 = vmatpush1.msra.mxu0 0.0
  %1574 = vmatprep.subr.mxu0 0.0
  %1575 = vmatpush1.msra.mxu0 0.0
  %1576 = vmatprep.mubr.f32.mxu0 0.0
  %1577 = vmatmul.mubr.f32.gmra.mrb[0].mxu0 %v1501
  %v1578 = vpop.f32.mrb[0].mxu0
  %v1579 = vadd.f32 0.0, %v1578
  %v1580 = vpop.f32.mrb[0].mxu0
  %1581 = vmatprep.mubr.f32.mxu0 0.0
  %1582 = vmatmul.mubr.f32.gmra.mrb[0].mxu0 %v1504
  %v1583 = vpop.f32.mrb[0].mxu0
  %v1584 = vadd.f32 0.0, %v1583
  %v1585 = vpop.f32.mrb[0].mxu0
  %1586 = vmatprep.mubr.f32.mxu0 0.0
  %1587 = vmatmul.mubr.f32.gmra.mrb[0].mxu0 %v1507
  %v1588 = vpop.f32.mrb[0].mxu0
  %v1589 = vadd.f32 0.0, %v1588
  %v1590 = vpop.f32.mrb[0].mxu0
  %1591 = vmatprep.mubr.f32.mxu0 0.0
  %1592 = vmatmul.mubr.f32.gmra.mrb[0].mxu0 %v1510
  %v1593 = vpop.f32.mrb[0].mxu0
  %v1594 = vadd.f32 0.0, %v1593
  %v1595 = vpop.f32.mrb[0].mxu0
  %1596 = vdwg.mxu0
  %v1597 = vadd.f32 %v1473, %v1579
  %v1598 = vadd.f32 %v1478, %v1584
  %v1599 = vadd.f32 %v1483, %v1589
  %v1600 = vadd.f32 %v1488, %v1594
  %v1601 = vld [vmem:[#allocation2 + $0x9] sm:$0xff]
  %v1602 = vld [vmem:[#allocation2 + $0x11] sm:$0xff]
  %v1603 = vld [vmem:[#allocation2 + $0x29] sm:$0xff]
  %v1604 = vld [vmem:[#allocation2 + $0x31] sm:$0xff]
  %s1605 = scalar_lea.vmem %s1, 416
  %v1606 = vld [vmem:[%s1605] sm:$0xff]
  %v1607 = vld [vmem:[%s1605 + $0x8] sm:$0xff]
  %v1608 = vld [vmem:[%s1605 + $0x10] sm:$0xff]
  %v1609 = vld [vmem:[%s1605 + $0x18] sm:$0xff]
  %v1611 = vsel %vm20, %v1601, 0
  %v1614 = vsel %vm20, %v1602, 0
  %v1617 = vsel %vm20, %v1603, 0
  %v1620 = vsel %vm20, %v1604, 0
  %1622 = vmatprep.subr.mxu0 0.0
  %1623 = vmatpush1.msra.mxu0 %v1606
  %1624 = vmatprep.subr.mxu0 0.0
  %1625 = vmatpush1.msra.mxu0 %v1607
  %1626 = vmatprep.subr.mxu0 0.0
  %1627 = vmatpush1.msra.mxu0 %v1608
  %1628 = vmatprep.subr.mxu0 0.0
  %1629 = vmatpush1.msra.mxu0 %v1609
  %1630 = vmatprep.subr.mxu0 0.0
  %1631 = vmatpush1.msra.mxu0 0.0
  %1632 = vmatprep.subr.mxu0 0.0
  %1633 = vmatpush1.msra.mxu0 0.0
  %1634 = vmatprep.subr.mxu0 0.0
  %1635 = vmatpush1.msra.mxu0 0.0
  %1636 = vmatprep.subr.mxu0 0.0
  %1637 = vmatpush1.msra.mxu0 0.0
  %1638 = vmatprep.subr.mxu0 0.0
  %1639 = vmatpush1.msra.mxu0 0.0
  %1640 = vmatprep.subr.mxu0 0.0
  %1641 = vmatpush1.msra.mxu0 0.0
  %1642 = vmatprep.subr.mxu0 0.0
  %1643 = vmatpush1.msra.mxu0 0.0
  %1644 = vmatprep.subr.mxu0 0.0
  %1645 = vmatpush1.msra.mxu0 0.0
  %1646 = vmatprep.subr.mxu0 0.0
  %1647 = vmatpush1.msra.mxu0 0.0
  %1648 = vmatprep.subr.mxu0 0.0
  %1649 = vmatpush1.msra.mxu0 0.0
  %1650 = vmatprep.subr.mxu0 0.0
  %1651 = vmatpush1.msra.mxu0 0.0
  %1652 = vmatprep.subr.mxu0 0.0
  %1653 = vmatpush1.msra.mxu0 0.0
  %1654 = vmatprep.subr.mxu0 0.0
  %1655 = vmatpush1.msra.mxu0 0.0
  %1656 = vmatprep.subr.mxu0 0.0
  %1657 = vmatpush1.msra.mxu0 0.0
  %1658 = vmatprep.subr.mxu0 0.0
  %1659 = vmatpush1.msra.mxu0 0.0
  %1660 = vmatprep.subr.mxu0 0.0
  %1661 = vmatpush1.msra.mxu0 0.0
  %1662 = vmatprep.subr.mxu0 0.0
  %1663 = vmatpush1.msra.mxu0 0.0
  %1664 = vmatprep.subr.mxu0 0.0
  %1665 = vmatpush1.msra.mxu0 0.0
  %1666 = vmatprep.subr.mxu0 0.0
  %1667 = vmatpush1.msra.mxu0 0.0
  %1668 = vmatprep.subr.mxu0 0.0
  %1669 = vmatpush1.msra.mxu0 0.0
  %1670 = vmatprep.subr.mxu0 0.0
  %1671 = vmatpush1.msra.mxu0 0.0
  %1672 = vmatprep.subr.mxu0 0.0
  %1673 = vmatpush1.msra.mxu0 0.0
  %1674 = vmatprep.subr.mxu0 0.0
  %1675 = vmatpush1.msra.mxu0 0.0
  %1676 = vmatprep.subr.mxu0 0.0
  %1677 = vmatpush1.msra.mxu0 0.0
  %1678 = vmatprep.subr.mxu0 0.0
  %1679 = vmatpush1.msra.mxu0 0.0
  %1680 = vmatprep.subr.mxu0 0.0
  %1681 = vmatpush1.msra.mxu0 0.0
  %1682 = vmatprep.subr.mxu0 0.0
  %1683 = vmatpush1.msra.mxu0 0.0
  %1684 = vmatprep.subr.mxu0 0.0
  %1685 = vmatpush1.msra.mxu0 0.0
  %1686 = vmatprep.mubr.f32.mxu0 0.0
  %1687 = vmatmul.mubr.f32.gmra.mrb[0].mxu0 %v1611
  %v1688 = vpop.f32.mrb[0].mxu0
  %v1689 = vadd.f32 0.0, %v1688
  %v1690 = vpop.f32.mrb[0].mxu0
  %1691 = vmatprep.mubr.f32.mxu0 0.0
  %1692 = vmatmul.mubr.f32.gmra.mrb[0].mxu0 %v1614
  %v1693 = vpop.f32.mrb[0].mxu0
  %v1694 = vadd.f32 0.0, %v1693
  %v1695 = vpop.f32.mrb[0].mxu0
  %1696 = vmatprep.mubr.f32.mxu0 0.0
  %1697 = vmatmul.mubr.f32.gmra.mrb[0].mxu0 %v1617
  %v1698 = vpop.f32.mrb[0].mxu0
  %v1699 = vadd.f32 0.0, %v1698
  %v1700 = vpop.f32.mrb[0].mxu0
  %1701 = vmatprep.mubr.f32.mxu0 0.0
  %1702 = vmatmul.mubr.f32.gmra.mrb[0].mxu0 %v1620
  %v1703 = vpop.f32.mrb[0].mxu0
  %v1704 = vadd.f32 0.0, %v1703
  %v1705 = vpop.f32.mrb[0].mxu0
  %1706 = vdwg.mxu0
  %v1707 = vadd.f32 %v1597, %v1689
  %v1708 = vadd.f32 %v1598, %v1694
  %v1709 = vadd.f32 %v1599, %v1699
  %v1710 = vadd.f32 %v1600, %v1704
  %v1711 = vld [vmem:[#allocation2 + $0xa] sm:$0xff]
  %v1712 = vld [vmem:[#allocation2 + $0x12] sm:$0xff]
  %v1713 = vld [vmem:[#allocation2 + $0x2a] sm:$0xff]
  %v1714 = vld [vmem:[#allocation2 + $0x32] sm:$0xff]
  %s1715 = scalar_lea.vmem %s1, 448
  %v1716 = vld [vmem:[%s1715] sm:$0xff]
  %v1717 = vld [vmem:[%s1715 + $0x8] sm:$0xff]
  %v1718 = vld [vmem:[%s1715 + $0x10] sm:$0xff]
  %v1719 = vld [vmem:[%s1715 + $0x18] sm:$0xff]
  %v1721 = vsel %vm20, %v1711, 0
  %v1724 = vsel %vm20, %v1712, 0
  %v1727 = vsel %vm20, %v1713, 0
  %v1730 = vsel %vm20, %v1714, 0
  %1732 = vmatprep.subr.mxu0 0.0
  %1733 = vmatpush1.msra.mxu0 %v1716
  %1734 = vmatprep.subr.mxu0 0.0
  %1735 = vmatpush1.msra.mxu0 %v1717
  %1736 = vmatprep.subr.mxu0 0.0
  %1737 = vmatpush1.msra.mxu0 %v1718
  %1738 = vmatprep.subr.mxu0 0.0
  %1739 = vmatpush1.msra.mxu0 %v1719
  %1740 = vmatprep.subr.mxu0 0.0
  %1741 = vmatpush1.msra.mxu0 0.0
  %1742 = vmatprep.subr.mxu0 0.0
  %1743 = vmatpush1.msra.mxu0 0.0
  %1744 = vmatprep.subr.mxu0 0.0
  %1745 = vmatpush1.msra.mxu0 0.0
  %1746 = vmatprep.subr.mxu0 0.0
  %1747 = vmatpush1.msra.mxu0 0.0
  %1748 = vmatprep.subr.mxu0 0.0
  %1749 = vmatpush1.msra.mxu0 0.0
  %1750 = vmatprep.subr.mxu0 0.0
  %1751 = vmatpush1.msra.mxu0 0.0
  %1752 = vmatprep.subr.mxu0 0.0
  %1753 = vmatpush1.msra.mxu0 0.0
  %1754 = vmatprep.subr.mxu0 0.0
  %1755 = vmatpush1.msra.mxu0 0.0
  %1756 = vmatprep.subr.mxu0 0.0
  %1757 = vmatpush1.msra.mxu0 0.0
  %1758 = vmatprep.subr.mxu0 0.0
  %1759 = vmatpush1.msra.mxu0 0.0
  %1760 = vmatprep.subr.mxu0 0.0
  %1761 = vmatpush1.msra.mxu0 0.0
  %1762 = vmatprep.subr.mxu0 0.0
  %1763 = vmatpush1.msra.mxu0 0.0
  %1764 = vmatprep.subr.mxu0 0.0
  %1765 = vmatpush1.msra.mxu0 0.0
  %1766 = vmatprep.subr.mxu0 0.0
  %1767 = vmatpush1.msra.mxu0 0.0
  %1768 = vmatprep.subr.mxu0 0.0
  %1769 = vmatpush1.msra.mxu0 0.0
  %1770 = vmatprep.subr.mxu0 0.0
  %1771 = vmatpush1.msra.mxu0 0.0
  %1772 = vmatprep.subr.mxu0 0.0
  %1773 = vmatpush1.msra.mxu0 0.0
  %1774 = vmatprep.subr.mxu0 0.0
  %1775 = vmatpush1.msra.mxu0 0.0
  %1776 = vmatprep.subr.mxu0 0.0
  %1777 = vmatpush1.msra.mxu0 0.0
  %1778 = vmatprep.subr.mxu0 0.0
  %1779 = vmatpush1.msra.mxu0 0.0
  %1780 = vmatprep.subr.mxu0 0.0
  %1781 = vmatpush1.msra.mxu0 0.0
  %1782 = vmatprep.subr.mxu0 0.0
  %1783 = vmatpush1.msra.mxu0 0.0
  %1784 = vmatprep.subr.mxu0 0.0
  %1785 = vmatpush1.msra.mxu0 0.0
  %1786 = vmatprep.subr.mxu0 0.0
  %1787 = vmatpush1.msra.mxu0 0.0
  %1788 = vmatprep.subr.mxu0 0.0
  %1789 = vmatpush1.msra.mxu0 0.0
  %1790 = vmatprep.subr.mxu0 0.0
  %1791 = vmatpush1.msra.mxu0 0.0
  %1792 = vmatprep.subr.mxu0 0.0
  %1793 = vmatpush1.msra.mxu0 0.0
  %1794 = vmatprep.subr.mxu0 0.0
  %1795 = vmatpush1.msra.mxu0 0.0
  %1796 = vmatprep.mubr.f32.mxu0 0.0
  %1797 = vmatmul.mubr.f32.gmra.mrb[0].mxu0 %v1721
  %v1798 = vpop.f32.mrb[0].mxu0
  %v1799 = vadd.f32 0.0, %v1798
  %v1800 = vpop.f32.mrb[0].mxu0
  %1801 = vmatprep.mubr.f32.mxu0 0.0
  %1802 = vmatmul.mubr.f32.gmra.mrb[0].mxu0 %v1724
  %v1803 = vpop.f32.mrb[0].mxu0
  %v1804 = vadd.f32 0.0, %v1803
  %v1805 = vpop.f32.mrb[0].mxu0
  %1806 = vmatprep.mubr.f32.mxu0 0.0
  %1807 = vmatmul.mubr.f32.gmra.mrb[0].mxu0 %v1727
  %v1808 = vpop.f32.mrb[0].mxu0
  %v1809 = vadd.f32 0.0, %v1808
  %v1810 = vpop.f32.mrb[0].mxu0
  %1811 = vmatprep.mubr.f32.mxu0 0.0
  %1812 = vmatmul.mubr.f32.gmra.mrb[0].mxu0 %v1730
  %v1813 = vpop.f32.mrb[0].mxu0
  %v1814 = vadd.f32 0.0, %v1813
  %v1815 = vpop.f32.mrb[0].mxu0
  %1816 = vdwg.mxu0
  %v1817 = vadd.f32 %v1707, %v1799
  %v1818 = vadd.f32 %v1708, %v1804
  %v1819 = vadd.f32 %v1709, %v1809
  %v1820 = vadd.f32 %v1710, %v1814
  %v1821 = vld [vmem:[%s2 + $0x2] sm:$0x1]
  %v1822 = vlaneseq
  %v1823 = vshrl.u32 %v1822, 7
  %v1824 = vsub.s32 0, %v1823
  %v1825 = vrot.slane %v1821, %v1824
  %v1826 = vadd.f32 %v1817, %v1825
  %v1827 = vadd.f32 %v1818, %v1825
  %v1828 = vadd.f32 %v1819, %v1825
  %v1829 = vadd.f32 %v1820, %v1825
  %v1830 = vmax.f32 %v1826, 0.0
  %v1831 = vmax.f32 %v1827, 0.0
  %v1832 = vmax.f32 %v1828, 0.0
  %v1833 = vmax.f32 %v1829, 0.0
  %v1834 = vsel %vm20, %v1830, 0.0
  %v1835 = vsel %vm20, %v1831, 0.0
  %v1836 = vadd.f32 %v1834, %v1835
  %v1837 = vsel %vm20, %v1832, 0.0
  %v1838 = vadd.f32 %v1836, %v1837
  %v1839 = vsel %vm20, %v1833, 0.0
  %v1840 = vadd.f32 %v1838, %v1839
  %v1841 = vrot.slane %v1840, 4
  %v1842 = vadd.f32 %v1840, %v1841
  %v1843 = vrot.slane %v1842, 2
  %v1844 = vadd.f32 %v1842, %v1843
  %v1845 = vrot.slane %v1844, 1
  %v1846 = vadd.f32 %v1844, %v1845
  %v1847 = vmul.f32 %v1846, %v604
  %v1848 = vmul.f32 %v1830, %v1830
  %v1849 = vmul.f32 %v1831, %v1831
  %v1850 = vmul.f32 %v1832, %v1832
  %v1851 = vmul.f32 %v1833, %v1833
  %v1852 = vsel %vm20, %v1848, 0.0
  %v1853 = vsel %vm20, %v1849, 0.0
  %v1854 = vadd.f32 %v1852, %v1853
  %v1855 = vsel %vm20, %v1850, 0.0
  %v1856 = vadd.f32 %v1854, %v1855
  %v1857 = vsel %vm20, %v1851, 0.0
  %v1858 = vadd.f32 %v1856, %v1857
  %v1859 = vrot.slane %v1858, 4
  %v1860 = vadd.f32 %v1858, %v1859
  %v1861 = vrot.slane %v1860, 2
  %v1862 = vadd.f32 %v1860, %v1861
  %v1863 = vrot.slane %v1862, 1
  %v1864 = vadd.f32 %v1862, %v1863
  %v1865 = vmul.f32 %v1864, %v604
  %v1866 = vmul.f32 %v1847, %v1847
  %v1867 = vsub.f32 %v1865, %v1866
  %v1868 = vsub.f32 %v1830, %v1847
  %v1869 = vsub.f32 %v1831, %v1847
  %v1870 = vsub.f32 %v1832, %v1847
  %v1871 = vsub.f32 %v1833, %v1847
  %v1872 = vadd.f32 %v1867, 1e-05
  %v1873 = vrsqrt.pop %v1872
  %v1874 = vmul.f32 %v1868, %v1873
  %v1875 = vmul.f32 %v1869, %v1873
  %v1876 = vmul.f32 %v1870, %v1873
  %v1877 = vmul.f32 %v1871, %v1873
  %v1878 = vld [vmem:[%s3 + $0x2] sm:$0x1]
  %v1879 = vlaneseq
  %v1880 = vshrl.u32 %v1879, 7
  %v1881 = vsub.s32 0, %v1880
  %v1882 = vrot.slane %v1878, %v1881
  %v1883 = vmul.f32 %v1874, %v1882
  %v1884 = vmul.f32 %v1875, %v1882
  %v1885 = vmul.f32 %v1876, %v1882
  %v1886 = vmul.f32 %v1877, %v1882
  %v1887 = vld [vmem:[%s4 + $0x2] sm:$0x1]
  %v1888 = vlaneseq
  %v1889 = vshrl.u32 %v1888, 7
  %v1890 = vsub.s32 0, %v1889
  %v1891 = vrot.slane %v1887, %v1890
  %v1892 = vadd.f32 %v1883, %v1891
  %v1893 = vadd.f32 %v1884, %v1891
  %v1894 = vadd.f32 %v1885, %v1891
  %v1895 = vadd.f32 %v1886, %v1891
  %1896 = vst.msk [vmem:[#allocation2 + $0x8] sm:$0xff] %vm20, %v1892
  %1897 = vst.msk [vmem:[#allocation2 + $0x10] sm:$0xff] %vm20, %v1893
  %1898 = vst.msk [vmem:[#allocation2 + $0x28] sm:$0xff] %vm20, %v1894
  %1899 = vst.msk [vmem:[#allocation2 + $0x30] sm:$0xff] %vm20, %v1895
  %v1900 = vld [vmem:[#allocation2 + $0x6] sm:$0xff]
  %v1901 = vld [vmem:[#allocation2 + $0xe] sm:$0xff]
  %v1902 = vld [vmem:[#allocation2 + $0x26] sm:$0xff]
  %v1903 = vld [vmem:[#allocation2 + $0x2e] sm:$0xff]
  %s1904 = scalar_lea.vmem %s1, 480
  %v1905 = vld [vmem:[%s1904] sm:$0xff]
  %v1906 = vld [vmem:[%s1904 + $0x8] sm:$0xff]
  %v1907 = vld [vmem:[%s1904 + $0x10] sm:$0xff]
  %v1908 = vld [vmem:[%s1904 + $0x18] sm:$0xff]
  %v1909 = vld [vmem:[#allocation2 + $0x7] sm:$0xff]
  %v1910 = vld [vmem:[#allocation2 + $0xf] sm:$0xff]
  %v1911 = vld [vmem:[#allocation2 + $0x27] sm:$0xff]
  %v1912 = vld [vmem:[#allocation2 + $0x2f] sm:$0xff]
  %s1913 = scalar_lea.vmem %s1, 512
  %v1914 = vld [vmem:[%s1913] sm:$0xff]
  %v1915 = vld [vmem:[%s1913 + $0x8] sm:$0xff]
  %v1916 = vld [vmem:[%s1913 + $0x10] sm:$0xff]
  %v1917 = vld [vmem:[%s1913 + $0x18] sm:$0xff]
  %v1919 = vsel %vm20, %v1909, 0
  %v1922 = vsel %vm20, %v1910, 0
  %v1925 = vsel %vm20, %v1911, 0
  %v1928 = vsel %vm20, %v1912, 0
  %1930 = vmatprep.subr.mxu0 0.0
  %1931 = vmatpush1.msra.mxu0 %v1914
  %1932 = vmatprep.subr.mxu0 0.0
  %1933 = vmatpush1.msra.mxu0 %v1915
  %1934 = vmatprep.subr.mxu0 0.0
  %1935 = vmatpush1.msra.mxu0 %v1916
  %1936 = vmatprep.subr.mxu0 0.0
  %1937 = vmatpush1.msra.mxu0 %v1917
  %1938 = vmatprep.subr.mxu0 0.0
  %1939 = vmatpush1.msra.mxu0 0.0
  %1940 = vmatprep.subr.mxu0 0.0
  %1941 = vmatpush1.msra.mxu0 0.0
  %1942 = vmatprep.subr.mxu0 0.0
  %1943 = vmatpush1.msra.mxu0 0.0
  %1944 = vmatprep.subr.mxu0 0.0
  %1945 = vmatpush1.msra.mxu0 0.0
  %1946 = vmatprep.subr.mxu0 0.0
  %1947 = vmatpush1.msra.mxu0 0.0
  %1948 = vmatprep.subr.mxu0 0.0
  %1949 = vmatpush1.msra.mxu0 0.0
  %1950 = vmatprep.subr.mxu0 0.0
  %1951 = vmatpush1.msra.mxu0 0.0
  %1952 = vmatprep.subr.mxu0 0.0
  %1953 = vmatpush1.msra.mxu0 0.0
  %1954 = vmatprep.subr.mxu0 0.0
  %1955 = vmatpush1.msra.mxu0 0.0
  %1956 = vmatprep.subr.mxu0 0.0
  %1957 = vmatpush1.msra.mxu0 0.0
  %1958 = vmatprep.subr.mxu0 0.0
  %1959 = vmatpush1.msra.mxu0 0.0
  %1960 = vmatprep.subr.mxu0 0.0
  %1961 = vmatpush1.msra.mxu0 0.0
  %1962 = vmatprep.subr.mxu0 0.0
  %1963 = vmatpush1.msra.mxu0 0.0
  %1964 = vmatprep.subr.mxu0 0.0
  %1965 = vmatpush1.msra.mxu0 0.0
  %1966 = vmatprep.subr.mxu0 0.0
  %1967 = vmatpush1.msra.mxu0 0.0
  %1968 = vmatprep.subr.mxu0 0.0
  %1969 = vmatpush1.msra.mxu0 0.0
  %1970 = vmatprep.subr.mxu0 0.0
  %1971 = vmatpush1.msra.mxu0 0.0
  %1972 = vmatprep.subr.mxu0 0.0
  %1973 = vmatpush1.msra.mxu0 0.0
  %1974 = vmatprep.subr.mxu0 0.0
  %1975 = vmatpush1.msra.mxu0 0.0
  %1976 = vmatprep.subr.mxu0 0.0
  %1977 = vmatpush1.msra.mxu0 0.0
  %1978 = vmatprep.subr.mxu0 0.0
  %1979 = vmatpush1.msra.mxu0 0.0
  %1980 = vmatprep.subr.mxu0 0.0
  %1981 = vmatpush1.msra.mxu0 0.0
  %1982 = vmatprep.subr.mxu0 0.0
  %1983 = vmatpush1.msra.mxu0 0.0
  %1984 = vmatprep.subr.mxu0 0.0
  %1985 = vmatpush1.msra.mxu0 0.0
  %1986 = vmatprep.subr.mxu0 0.0
  %1987 = vmatpush1.msra.mxu0 0.0
  %1988 = vmatprep.subr.mxu0 0.0
  %1989 = vmatpush1.msra.mxu0 0.0
  %1990 = vmatprep.subr.mxu0 0.0
  %1991 = vmatpush1.msra.mxu0 0.0
  %1992 = vmatprep.subr.mxu0 0.0
  %1993 = vmatpush1.msra.mxu0 0.0
  %1994 = vmatprep.mubr.f32.mxu0 0.0
  %1995 = vmatmul.mubr.f32.gmra.mrb[0].mxu0 %v1919
  %v1996 = vpop.f32.mrb[0].mxu0
  %v1997 = vadd.f32 0.0, %v1996
  %v1998 = vpop.f32.mrb[0].mxu0
  %1999 = vmatprep.mubr.f32.mxu0 0.0
  %2000 = vmatmul.mubr.f32.gmra.mrb[0].mxu0 %v1922
  %v2001 = vpop.f32.mrb[0].mxu0
  %v2002 = vadd.f32 0.0, %v2001
  %v2003 = vpop.f32.mrb[0].mxu0
  %2004 = vmatprep.mubr.f32.mxu0 0.0
  %2005 = vmatmul.mubr.f32.gmra.mrb[0].mxu0 %v1925
  %v2006 = vpop.f32.mrb[0].mxu0
  %v2007 = vadd.f32 0.0, %v2006
  %v2008 = vpop.f32.mrb[0].mxu0
  %2009 = vmatprep.mubr.f32.mxu0 0.0
  %2010 = vmatmul.mubr.f32.gmra.mrb[0].mxu0 %v1928
  %v2011 = vpop.f32.mrb[0].mxu0
  %v2012 = vadd.f32 0.0, %v2011
  %v2013 = vpop.f32.mrb[0].mxu0
  %2014 = vdwg.mxu0
  %v2016 = vsel %vm20, %v1900, 0
  %v2019 = vsel %vm20, %v1901, 0
  %v2022 = vsel %vm20, %v1902, 0
  %v2025 = vsel %vm20, %v1903, 0
  %2027 = vmatprep.subr.mxu0 0.0
  %2028 = vmatpush1.msra.mxu0 %v1905
  %2029 = vmatprep.subr.mxu0 0.0
  %2030 = vmatpush1.msra.mxu0 %v1906
  %2031 = vmatprep.subr.mxu0 0.0
  %2032 = vmatpush1.msra.mxu0 %v1907
  %2033 = vmatprep.subr.mxu0 0.0
  %2034 = vmatpush1.msra.mxu0 %v1908
  %2035 = vmatprep.subr.mxu0 0.0
  %2036 = vmatpush1.msra.mxu0 0.0
  %2037 = vmatprep.subr.mxu0 0.0
  %2038 = vmatpush1.msra.mxu0 0.0
  %2039 = vmatprep.subr.mxu0 0.0
  %2040 = vmatpush1.msra.mxu0 0.0
  %2041 = vmatprep.subr.mxu0 0.0
  %2042 = vmatpush1.msra.mxu0 0.0
  %2043 = vmatprep.subr.mxu0 0.0
  %2044 = vmatpush1.msra.mxu0 0.0
  %2045 = vmatprep.subr.mxu0 0.0
  %2046 = vmatpush1.msra.mxu0 0.0
  %2047 = vmatprep.subr.mxu0 0.0
  %2048 = vmatpush1.msra.mxu0 0.0
  %2049 = vmatprep.subr.mxu0 0.0
  %2050 = vmatpush1.msra.mxu0 0.0
  %2051 = vmatprep.subr.mxu0 0.0
  %2052 = vmatpush1.msra.mxu0 0.0
  %2053 = vmatprep.subr.mxu0 0.0
  %2054 = vmatpush1.msra.mxu0 0.0
  %2055 = vmatprep.subr.mxu0 0.0
  %2056 = vmatpush1.msra.mxu0 0.0
  %2057 = vmatprep.subr.mxu0 0.0
  %2058 = vmatpush1.msra.mxu0 0.0
  %2059 = vmatprep.subr.mxu0 0.0
  %2060 = vmatpush1.msra.mxu0 0.0
  %2061 = vmatprep.subr.mxu0 0.0
  %2062 = vmatpush1.msra.mxu0 0.0
  %2063 = vmatprep.subr.mxu0 0.0
  %2064 = vmatpush1.msra.mxu0 0.0
  %2065 = vmatprep.subr.mxu0 0.0
  %2066 = vmatpush1.msra.mxu0 0.0
  %2067 = vmatprep.subr.mxu0 0.0
  %2068 = vmatpush1.msra.mxu0 0.0
  %2069 = vmatprep.subr.mxu0 0.0
  %2070 = vmatpush1.msra.mxu0 0.0
  %2071 = vmatprep.subr.mxu0 0.0
  %2072 = vmatpush1.msra.mxu0 0.0
  %2073 = vmatprep.subr.mxu0 0.0
  %2074 = vmatpush1.msra.mxu0 0.0
  %2075 = vmatprep.subr.mxu0 0.0
  %2076 = vmatpush1.msra.mxu0 0.0
  %2077 = vmatprep.subr.mxu0 0.0
  %2078 = vmatpush1.msra.mxu0 0.0
  %2079 = vmatprep.subr.mxu0 0.0
  %2080 = vmatpush1.msra.mxu0 0.0
  %2081 = vmatprep.subr.mxu0 0.0
  %2082 = vmatpush1.msra.mxu0 0.0
  %2083 = vmatprep.subr.mxu0 0.0
  %2084 = vmatpush1.msra.mxu0 0.0
  %2085 = vmatprep.subr.mxu0 0.0
  %2086 = vmatpush1.msra.mxu0 0.0
  %2087 = vmatprep.subr.mxu0 0.0
  %2088 = vmatpush1.msra.mxu0 0.0
  %2089 = vmatprep.subr.mxu0 0.0
  %2090 = vmatpush1.msra.mxu0 0.0
  %2091 = vmatprep.mubr.f32.mxu0 0.0
  %2092 = vmatmul.mubr.f32.gmra.mrb[0].mxu0 %v2016
  %v2093 = vpop.f32.mrb[0].mxu0
  %v2094 = vadd.f32 %v1997, %v2093
  %v2095 = vpop.f32.mrb[0].mxu0
  %2096 = vmatprep.mubr.f32.mxu0 0.0
  %2097 = vmatmul.mubr.f32.gmra.mrb[0].mxu0 %v2019
  %v2098 = vpop.f32.mrb[0].mxu0
  %v2099 = vadd.f32 %v2002, %v2098
  %v2100 = vpop.f32.mrb[0].mxu0
  %2101 = vmatprep.mubr.f32.mxu0 0.0
  %2102 = vmatmul.mubr.f32.gmra.mrb[0].mxu0 %v2022
  %v2103 = vpop.f32.mrb[0].mxu0
  %v2104 = vadd.f32 %v2007, %v2103
  %v2105 = vpop.f32.mrb[0].mxu0
  %2106 = vmatprep.mubr.f32.mxu0 0.0
  %2107 = vmatmul.mubr.f32.gmra.mrb[0].mxu0 %v2025
  %v2108 = vpop.f32.mrb[0].mxu0
  %v2109 = vadd.f32 %v2012, %v2108
  %v2110 = vpop.f32.mrb[0].mxu0
  %2111 = vdwg.mxu0
  %v2112 = vld [vmem:[#allocation2 + $0x8] sm:$0xff]
  %v2113 = vld [vmem:[#allocation2 + $0x10] sm:$0xff]
  %v2114 = vld [vmem:[#allocation2 + $0x28] sm:$0xff]
  %v2115 = vld [vmem:[#allocation2 + $0x30] sm:$0xff]
  %s2116 = scalar_lea.vmem %s1, 544
  %v2117 = vld [vmem:[%s2116] sm:$0xff]
  %v2118 = vld [vmem:[%s2116 + $0x8] sm:$0xff]
  %v2119 = vld [vmem:[%s2116 + $0x10] sm:$0xff]
  %v2120 = vld [vmem:[%s2116 + $0x18] sm:$0xff]
  %v2122 = vsel %vm20, %v2112, 0
  %v2125 = vsel %vm20, %v2113, 0
  %v2128 = vsel %vm20, %v2114, 0
  %v2131 = vsel %vm20, %v2115, 0
  %2133 = vmatprep.subr.mxu0 0.0
  %2134 = vmatpush1.msra.mxu0 %v2117
  %2135 = vmatprep.subr.mxu0 0.0
  %2136 = vmatpush1.msra.mxu0 %v2118
  %2137 = vmatprep.subr.mxu0 0.0
  %2138 = vmatpush1.msra.mxu0 %v2119
  %2139 = vmatprep.subr.mxu0 0.0
  %2140 = vmatpush1.msra.mxu0 %v2120
  %2141 = vmatprep.subr.mxu0 0.0
  %2142 = vmatpush1.msra.mxu0 0.0
  %2143 = vmatprep.subr.mxu0 0.0
  %2144 = vmatpush1.msra.mxu0 0.0
  %2145 = vmatprep.subr.mxu0 0.0
  %2146 = vmatpush1.msra.mxu0 0.0
  %2147 = vmatprep.subr.mxu0 0.0
  %2148 = vmatpush1.msra.mxu0 0.0
  %2149 = vmatprep.subr.mxu0 0.0
  %2150 = vmatpush1.msra.mxu0 0.0
  %2151 = vmatprep.subr.mxu0 0.0
  %2152 = vmatpush1.msra.mxu0 0.0
  %2153 = vmatprep.subr.mxu0 0.0
  %2154 = vmatpush1.msra.mxu0 0.0
  %2155 = vmatprep.subr.mxu0 0.0
  %2156 = vmatpush1.msra.mxu0 0.0
  %2157 = vmatprep.subr.mxu0 0.0
  %2158 = vmatpush1.msra.mxu0 0.0
  %2159 = vmatprep.subr.mxu0 0.0
  %2160 = vmatpush1.msra.mxu0 0.0
  %2161 = vmatprep.subr.mxu0 0.0
  %2162 = vmatpush1.msra.mxu0 0.0
  %2163 = vmatprep.subr.mxu0 0.0
  %2164 = vmatpush1.msra.mxu0 0.0
  %2165 = vmatprep.subr.mxu0 0.0
  %2166 = vmatpush1.msra.mxu0 0.0
  %2167 = vmatprep.subr.mxu0 0.0
  %2168 = vmatpush1.msra.mxu0 0.0
  %2169 = vmatprep.subr.mxu0 0.0
  %2170 = vmatpush1.msra.mxu0 0.0
  %2171 = vmatprep.subr.mxu0 0.0
  %2172 = vmatpush1.msra.mxu0 0.0
  %2173 = vmatprep.subr.mxu0 0.0
  %2174 = vmatpush1.msra.mxu0 0.0
  %2175 = vmatprep.subr.mxu0 0.0
  %2176 = vmatpush1.msra.mxu0 0.0
  %2177 = vmatprep.subr.mxu0 0.0
  %2178 = vmatpush1.msra.mxu0 0.0
  %2179 = vmatprep.subr.mxu0 0.0
  %2180 = vmatpush1.msra.mxu0 0.0
  %2181 = vmatprep.subr.mxu0 0.0
  %2182 = vmatpush1.msra.mxu0 0.0
  %2183 = vmatprep.subr.mxu0 0.0
  %2184 = vmatpush1.msra.mxu0 0.0
  %2185 = vmatprep.subr.mxu0 0.0
  %2186 = vmatpush1.msra.mxu0 0.0
  %2187 = vmatprep.subr.mxu0 0.0
  %2188 = vmatpush1.msra.mxu0 0.0
  %2189 = vmatprep.subr.mxu0 0.0
  %2190 = vmatpush1.msra.mxu0 0.0
  %2191 = vmatprep.subr.mxu0 0.0
  %2192 = vmatpush1.msra.mxu0 0.0
  %2193 = vmatprep.subr.mxu0 0.0
  %2194 = vmatpush1.msra.mxu0 0.0
  %2195 = vmatprep.subr.mxu0 0.0
  %2196 = vmatpush1.msra.mxu0 0.0
  %2197 = vmatprep.mubr.f32.mxu0 0.0
  %2198 = vmatmul.mubr.f32.gmra.mrb[0].mxu0 %v2122
  %v2199 = vpop.f32.mrb[0].mxu0
  %v2200 = vadd.f32 0.0, %v2199
  %v2201 = vpop.f32.mrb[0].mxu0
  %2202 = vmatprep.mubr.f32.mxu0 0.0
  %2203 = vmatmul.mubr.f32.gmra.mrb[0].mxu0 %v2125
  %v2204 = vpop.f32.mrb[0].mxu0
  %v2205 = vadd.f32 0.0, %v2204
  %v2206 = vpop.f32.mrb[0].mxu0
  %2207 = vmatprep.mubr.f32.mxu0 0.0
  %2208 = vmatmul.mubr.f32.gmra.mrb[0].mxu0 %v2128
  %v2209 = vpop.f32.mrb[0].mxu0
  %v2210 = vadd.f32 0.0, %v2209
  %v2211 = vpop.f32.mrb[0].mxu0
  %2212 = vmatprep.mubr.f32.mxu0 0.0
  %2213 = vmatmul.mubr.f32.gmra.mrb[0].mxu0 %v2131
  %v2214 = vpop.f32.mrb[0].mxu0
  %v2215 = vadd.f32 0.0, %v2214
  %v2216 = vpop.f32.mrb[0].mxu0
  %2217 = vdwg.mxu0
  %v2218 = vadd.f32 %v2094, %v2200
  %v2219 = vadd.f32 %v2099, %v2205
  %v2220 = vadd.f32 %v2104, %v2210
  %v2221 = vadd.f32 %v2109, %v2215
  %v2222 = vld [vmem:[#allocation2 + $0x9] sm:$0xff]
  %v2223 = vld [vmem:[#allocation2 + $0x11] sm:$0xff]
  %v2224 = vld [vmem:[#allocation2 + $0x29] sm:$0xff]
  %v2225 = vld [vmem:[#allocation2 + $0x31] sm:$0xff]
  %s2226 = scalar_lea.vmem %s1, 576
  %v2227 = vld [vmem:[%s2226] sm:$0xff]
  %v2228 = vld [vmem:[%s2226 + $0x8] sm:$0xff]
  %v2229 = vld [vmem:[%s2226 + $0x10] sm:$0xff]
  %v2230 = vld [vmem:[%s2226 + $0x18] sm:$0xff]
  %v2232 = vsel %vm20, %v2222, 0
  %v2235 = vsel %vm20, %v2223, 0
  %v2238 = vsel %vm20, %v2224, 0
  %v2241 = vsel %vm20, %v2225, 0
  %2243 = vmatprep.subr.mxu0 0.0
  %2244 = vmatpush1.msra.mxu0 %v2227
  %2245 = vmatprep.subr.mxu0 0.0
  %2246 = vmatpush1.msra.mxu0 %v2228
  %2247 = vmatprep.subr.mxu0 0.0
  %2248 = vmatpush1.msra.mxu0 %v2229
  %2249 = vmatprep.subr.mxu0 0.0
  %2250 = vmatpush1.msra.mxu0 %v2230
  %2251 = vmatprep.subr.mxu0 0.0
  %2252 = vmatpush1.msra.mxu0 0.0
  %2253 = vmatprep.subr.mxu0 0.0
  %2254 = vmatpush1.msra.mxu0 0.0
  %2255 = vmatprep.subr.mxu0 0.0
  %2256 = vmatpush1.msra.mxu0 0.0
  %2257 = vmatprep.subr.mxu0 0.0
  %2258 = vmatpush1.msra.mxu0 0.0
  %2259 = vmatprep.subr.mxu0 0.0
  %2260 = vmatpush1.msra.mxu0 0.0
  %2261 = vmatprep.subr.mxu0 0.0
  %2262 = vmatpush1.msra.mxu0 0.0
  %2263 = vmatprep.subr.mxu0 0.0
  %2264 = vmatpush1.msra.mxu0 0.0
  %2265 = vmatprep.subr.mxu0 0.0
  %2266 = vmatpush1.msra.mxu0 0.0
  %2267 = vmatprep.subr.mxu0 0.0
  %2268 = vmatpush1.msra.mxu0 0.0
  %2269 = vmatprep.subr.mxu0 0.0
  %2270 = vmatpush1.msra.mxu0 0.0
  %2271 = vmatprep.subr.mxu0 0.0
  %2272 = vmatpush1.msra.mxu0 0.0
  %2273 = vmatprep.subr.mxu0 0.0
  %2274 = vmatpush1.msra.mxu0 0.0
  %2275 = vmatprep.subr.mxu0 0.0
  %2276 = vmatpush1.msra.mxu0 0.0
  %2277 = vmatprep.subr.mxu0 0.0
  %2278 = vmatpush1.msra.mxu0 0.0
  %2279 = vmatprep.subr.mxu0 0.0
  %2280 = vmatpush1.msra.mxu0 0.0
  %2281 = vmatprep.subr.mxu0 0.0
  %2282 = vmatpush1.msra.mxu0 0.0
  %2283 = vmatprep.subr.mxu0 0.0
  %2284 = vmatpush1.msra.mxu0 0.0
  %2285 = vmatprep.subr.mxu0 0.0
  %2286 = vmatpush1.msra.mxu0 0.0
  %2287 = vmatprep.subr.mxu0 0.0
  %2288 = vmatpush1.msra.mxu0 0.0
  %2289 = vmatprep.subr.mxu0 0.0
  %2290 = vmatpush1.msra.mxu0 0.0
  %2291 = vmatprep.subr.mxu0 0.0
  %2292 = vmatpush1.msra.mxu0 0.0
  %2293 = vmatprep.subr.mxu0 0.0
  %2294 = vmatpush1.msra.mxu0 0.0
  %2295 = vmatprep.subr.mxu0 0.0
  %2296 = vmatpush1.msra.mxu0 0.0
  %2297 = vmatprep.subr.mxu0 0.0
  %2298 = vmatpush1.msra.mxu0 0.0
  %2299 = vmatprep.subr.mxu0 0.0
  %2300 = vmatpush1.msra.mxu0 0.0
  %2301 = vmatprep.subr.mxu0 0.0
  %2302 = vmatpush1.msra.mxu0 0.0
  %2303 = vmatprep.subr.mxu0 0.0
  %2304 = vmatpush1.msra.mxu0 0.0
  %2305 = vmatprep.subr.mxu0 0.0
  %2306 = vmatpush1.msra.mxu0 0.0
  %2307 = vmatprep.mubr.f32.mxu0 0.0
  %2308 = vmatmul.mubr.f32.gmra.mrb[0].mxu0 %v2232
  %v2309 = vpop.f32.mrb[0].mxu0
  %v2310 = vadd.f32 0.0, %v2309
  %v2311 = vpop.f32.mrb[0].mxu0
  %2312 = vmatprep.mubr.f32.mxu0 0.0
  %2313 = vmatmul.mubr.f32.gmra.mrb[0].mxu0 %v2235
  %v2314 = vpop.f32.mrb[0].mxu0
  %v2315 = vadd.f32 0.0, %v2314
  %v2316 = vpop.f32.mrb[0].mxu0
  %2317 = vmatprep.mubr.f32.mxu0 0.0
  %2318 = vmatmul.mubr.f32.gmra.mrb[0].mxu0 %v2238
  %v2319 = vpop.f32.mrb[0].mxu0
  %v2320 = vadd.f32 0.0, %v2319
  %v2321 = vpop.f32.mrb[0].mxu0
  %2322 = vmatprep.mubr.f32.mxu0 0.0
  %2323 = vmatmul.mubr.f32.gmra.mrb[0].mxu0 %v2241
  %v2324 = vpop.f32.mrb[0].mxu0
  %v2325 = vadd.f32 0.0, %v2324
  %v2326 = vpop.f32.mrb[0].mxu0
  %2327 = vdwg.mxu0
  %v2328 = vadd.f32 %v2218, %v2310
  %v2329 = vadd.f32 %v2219, %v2315
  %v2330 = vadd.f32 %v2220, %v2320
  %v2331 = vadd.f32 %v2221, %v2325
  %v2332 = vld [vmem:[#allocation2 + $0xa] sm:$0xff]
  %v2333 = vld [vmem:[#allocation2 + $0x12] sm:$0xff]
  %v2334 = vld [vmem:[#allocation2 + $0x2a] sm:$0xff]
  %v2335 = vld [vmem:[#allocation2 + $0x32] sm:$0xff]
  %s2336 = scalar_lea.vmem %s1, 608
  %v2337 = vld [vmem:[%s2336] sm:$0xff]
  %v2338 = vld [vmem:[%s2336 + $0x8] sm:$0xff]
  %v2339 = vld [vmem:[%s2336 + $0x10] sm:$0xff]
  %v2340 = vld [vmem:[%s2336 + $0x18] sm:$0xff]
  %v2342 = vsel %vm20, %v2332, 0
  %v2345 = vsel %vm20, %v2333, 0
  %v2348 = vsel %vm20, %v2334, 0
  %v2351 = vsel %vm20, %v2335, 0
  %2353 = vmatprep.subr.mxu0 0.0
  %2354 = vmatpush1.msra.mxu0 %v2337
  %2355 = vmatprep.subr.mxu0 0.0
  %2356 = vmatpush1.msra.mxu0 %v2338
  %2357 = vmatprep.subr.mxu0 0.0
  %2358 = vmatpush1.msra.mxu0 %v2339
  %2359 = vmatprep.subr.mxu0 0.0
  %2360 = vmatpush1.msra.mxu0 %v2340
  %2361 = vmatprep.subr.mxu0 0.0
  %2362 = vmatpush1.msra.mxu0 0.0
  %2363 = vmatprep.subr.mxu0 0.0
  %2364 = vmatpush1.msra.mxu0 0.0
  %2365 = vmatprep.subr.mxu0 0.0
  %2366 = vmatpush1.msra.mxu0 0.0
  %2367 = vmatprep.subr.mxu0 0.0
  %2368 = vmatpush1.msra.mxu0 0.0
  %2369 = vmatprep.subr.mxu0 0.0
  %2370 = vmatpush1.msra.mxu0 0.0
  %2371 = vmatprep.subr.mxu0 0.0
  %2372 = vmatpush1.msra.mxu0 0.0
  %2373 = vmatprep.subr.mxu0 0.0
  %2374 = vmatpush1.msra.mxu0 0.0
  %2375 = vmatprep.subr.mxu0 0.0
  %2376 = vmatpush1.msra.mxu0 0.0
  %2377 = vmatprep.subr.mxu0 0.0
  %2378 = vmatpush1.msra.mxu0 0.0
  %2379 = vmatprep.subr.mxu0 0.0
  %2380 = vmatpush1.msra.mxu0 0.0
  %2381 = vmatprep.subr.mxu0 0.0
  %2382 = vmatpush1.msra.mxu0 0.0
  %2383 = vmatprep.subr.mxu0 0.0
  %2384 = vmatpush1.msra.mxu0 0.0
  %2385 = vmatprep.subr.mxu0 0.0
  %2386 = vmatpush1.msra.mxu0 0.0
  %2387 = vmatprep.subr.mxu0 0.0
  %2388 = vmatpush1.msra.mxu0 0.0
  %2389 = vmatprep.subr.mxu0 0.0
  %2390 = vmatpush1.msra.mxu0 0.0
  %2391 = vmatprep.subr.mxu0 0.0
  %2392 = vmatpush1.msra.mxu0 0.0
  %2393 = vmatprep.subr.mxu0 0.0
  %2394 = vmatpush1.msra.mxu0 0.0
  %2395 = vmatprep.subr.mxu0 0.0
  %2396 = vmatpush1.msra.mxu0 0.0
  %2397 = vmatprep.subr.mxu0 0.0
  %2398 = vmatpush1.msra.mxu0 0.0
  %2399 = vmatprep.subr.mxu0 0.0
  %2400 = vmatpush1.msra.mxu0 0.0
  %2401 = vmatprep.subr.mxu0 0.0
  %2402 = vmatpush1.msra.mxu0 0.0
  %2403 = vmatprep.subr.mxu0 0.0
  %2404 = vmatpush1.msra.mxu0 0.0
  %2405 = vmatprep.subr.mxu0 0.0
  %2406 = vmatpush1.msra.mxu0 0.0
  %2407 = vmatprep.subr.mxu0 0.0
  %2408 = vmatpush1.msra.mxu0 0.0
  %2409 = vmatprep.subr.mxu0 0.0
  %2410 = vmatpush1.msra.mxu0 0.0
  %2411 = vmatprep.subr.mxu0 0.0
  %2412 = vmatpush1.msra.mxu0 0.0
  %2413 = vmatprep.subr.mxu0 0.0
  %2414 = vmatpush1.msra.mxu0 0.0
  %2415 = vmatprep.subr.mxu0 0.0
  %2416 = vmatpush1.msra.mxu0 0.0
  %2417 = vmatprep.mubr.f32.mxu0 0.0
  %2418 = vmatmul.mubr.f32.gmra.mrb[0].mxu0 %v2342
  %v2419 = vpop.f32.mrb[0].mxu0
  %v2420 = vadd.f32 0.0, %v2419
  %v2421 = vpop.f32.mrb[0].mxu0
  %2422 = vmatprep.mubr.f32.mxu0 0.0
  %2423 = vmatmul.mubr.f32.gmra.mrb[0].mxu0 %v2345
  %v2424 = vpop.f32.mrb[0].mxu0
  %v2425 = vadd.f32 0.0, %v2424
  %v2426 = vpop.f32.mrb[0].mxu0
  %2427 = vmatprep.mubr.f32.mxu0 0.0
  %2428 = vmatmul.mubr.f32.gmra.mrb[0].mxu0 %v2348
  %v2429 = vpop.f32.mrb[0].mxu0
  %v2430 = vadd.f32 0.0, %v2429
  %v2431 = vpop.f32.mrb[0].mxu0
  %2432 = vmatprep.mubr.f32.mxu0 0.0
  %2433 = vmatmul.mubr.f32.gmra.mrb[0].mxu0 %v2351
  %v2434 = vpop.f32.mrb[0].mxu0
  %v2435 = vadd.f32 0.0, %v2434
  %v2436 = vpop.f32.mrb[0].mxu0
  %2437 = vdwg.mxu0
  %v2438 = vadd.f32 %v2328, %v2420
  %v2439 = vadd.f32 %v2329, %v2425
  %v2440 = vadd.f32 %v2330, %v2430
  %v2441 = vadd.f32 %v2331, %v2435
  %v2442 = vld [vmem:[%s2 + $0x3] sm:$0x1]
  %v2443 = vlaneseq
  %v2444 = vshrl.u32 %v2443, 7
  %v2445 = vsub.s32 0, %v2444
  %v2446 = vrot.slane %v2442, %v2445
  %v2447 = vadd.f32 %v2438, %v2446
  %v2448 = vadd.f32 %v2439, %v2446
  %v2449 = vadd.f32 %v2440, %v2446
  %v2450 = vadd.f32 %v2441, %v2446
  %v2451 = vmax.f32 %v2447, 0.0
  %v2452 = vmax.f32 %v2448, 0.0
  %v2453 = vmax.f32 %v2449, 0.0
  %v2454 = vmax.f32 %v2450, 0.0
  %v2455 = vsel %vm20, %v2451, 0.0
  %v2456 = vsel %vm20, %v2452, 0.0
  %v2457 = vadd.f32 %v2455, %v2456
  %v2458 = vsel %vm20, %v2453, 0.0
  %v2459 = vadd.f32 %v2457, %v2458
  %v2460 = vsel %vm20, %v2454, 0.0
  %v2461 = vadd.f32 %v2459, %v2460
  %v2462 = vrot.slane %v2461, 4
  %v2463 = vadd.f32 %v2461, %v2462
  %v2464 = vrot.slane %v2463, 2
  %v2465 = vadd.f32 %v2463, %v2464
  %v2466 = vrot.slane %v2465, 1
  %v2467 = vadd.f32 %v2465, %v2466
  %v2468 = vmul.f32 %v2467, %v604
  %v2469 = vmul.f32 %v2451, %v2451
  %v2470 = vmul.f32 %v2452, %v2452
  %v2471 = vmul.f32 %v2453, %v2453
  %v2472 = vmul.f32 %v2454, %v2454
  %v2473 = vsel %vm20, %v2469, 0.0
  %v2474 = vsel %vm20, %v2470, 0.0
  %v2475 = vadd.f32 %v2473, %v2474
  %v2476 = vsel %vm20, %v2471, 0.0
  %v2477 = vadd.f32 %v2475, %v2476
  %v2478 = vsel %vm20, %v2472, 0.0
  %v2479 = vadd.f32 %v2477, %v2478
  %v2480 = vrot.slane %v2479, 4
  %v2481 = vadd.f32 %v2479, %v2480
  %v2482 = vrot.slane %v2481, 2
  %v2483 = vadd.f32 %v2481, %v2482
  %v2484 = vrot.slane %v2483, 1
  %v2485 = vadd.f32 %v2483, %v2484
  %v2486 = vmul.f32 %v2485, %v604
  %v2487 = vmul.f32 %v2468, %v2468
  %v2488 = vsub.f32 %v2486, %v2487
  %v2489 = vsub.f32 %v2451, %v2468
  %v2490 = vsub.f32 %v2452, %v2468
  %v2491 = vsub.f32 %v2453, %v2468
  %v2492 = vsub.f32 %v2454, %v2468
  %v2493 = vadd.f32 %v2488, 1e-05
  %v2494 = vrsqrt.pop %v2493
  %v2495 = vmul.f32 %v2489, %v2494
  %v2496 = vmul.f32 %v2490, %v2494
  %v2497 = vmul.f32 %v2491, %v2494
  %v2498 = vmul.f32 %v2492, %v2494
  %v2499 = vld [vmem:[%s3 + $0x3] sm:$0x1]
  %v2500 = vlaneseq
  %v2501 = vshrl.u32 %v2500, 7
  %v2502 = vsub.s32 0, %v2501
  %v2503 = vrot.slane %v2499, %v2502
  %v2504 = vmul.f32 %v2495, %v2503
  %v2505 = vmul.f32 %v2496, %v2503
  %v2506 = vmul.f32 %v2497, %v2503
  %v2507 = vmul.f32 %v2498, %v2503
  %v2508 = vld [vmem:[%s4 + $0x3] sm:$0x1]
  %v2509 = vlaneseq
  %v2510 = vshrl.u32 %v2509, 7
  %v2511 = vsub.s32 0, %v2510
  %v2512 = vrot.slane %v2508, %v2511
  %v2513 = vadd.f32 %v2504, %v2512
  %v2514 = vadd.f32 %v2505, %v2512
  %v2515 = vadd.f32 %v2506, %v2512
  %v2516 = vadd.f32 %v2507, %v2512
  %2517 = vst.msk [vmem:[#allocation2 + $0x8] sm:$0xff] %vm20, %v2513
  %2518 = vst.msk [vmem:[#allocation2 + $0x10] sm:$0xff] %vm20, %v2514
  %2519 = vst.msk [vmem:[#allocation2 + $0x28] sm:$0xff] %vm20, %v2515
  %2520 = vst.msk [vmem:[#allocation2 + $0x30] sm:$0xff] %vm20, %v2516
  %v2521 = vld [vmem:[#allocation2 + $0x6] sm:$0xff]
  %v2522 = vld [vmem:[#allocation2 + $0xe] sm:$0xff]
  %v2523 = vld [vmem:[#allocation2 + $0x26] sm:$0xff]
  %v2524 = vld [vmem:[#allocation2 + $0x2e] sm:$0xff]
  %s2525 = scalar_lea.vmem %s1, 640
  %v2526 = vld [vmem:[%s2525] sm:$0xff]
  %v2527 = vld [vmem:[%s2525 + $0x8] sm:$0xff]
  %v2528 = vld [vmem:[%s2525 + $0x10] sm:$0xff]
  %v2529 = vld [vmem:[%s2525 + $0x18] sm:$0xff]
  %v2530 = vld [vmem:[#allocation2 + $0x7] sm:$0xff]
  %v2531 = vld [vmem:[#allocation2 + $0xf] sm:$0xff]
  %v2532 = vld [vmem:[#allocation2 + $0x27] sm:$0xff]
  %v2533 = vld [vmem:[#allocation2 + $0x2f] sm:$0xff]
  %s2534 = scalar_lea.vmem %s1, 672
  %v2535 = vld [vmem:[%s2534] sm:$0xff]
  %v2536 = vld [vmem:[%s2534 + $0x8] sm:$0xff]
  %v2537 = vld [vmem:[%s2534 + $0x10] sm:$0xff]
  %v2538 = vld [vmem:[%s2534 + $0x18] sm:$0xff]
  %v2540 = vsel %vm20, %v2530, 0
  %v2543 = vsel %vm20, %v2531, 0
  %v2546 = vsel %vm20, %v2532, 0
  %v2549 = vsel %vm20, %v2533, 0
  %2551 = vmatprep.subr.mxu0 0.0
  %2552 = vmatpush1.msra.mxu0 %v2535
  %2553 = vmatprep.subr.mxu0 0.0
  %2554 = vmatpush1.msra.mxu0 %v2536
  %2555 = vmatprep.subr.mxu0 0.0
  %2556 = vmatpush1.msra.mxu0 %v2537
  %2557 = vmatprep.subr.mxu0 0.0
  %2558 = vmatpush1.msra.mxu0 %v2538
  %2559 = vmatprep.subr.mxu0 0.0
  %2560 = vmatpush1.msra.mxu0 0.0
  %2561 = vmatprep.subr.mxu0 0.0
  %2562 = vmatpush1.msra.mxu0 0.0
  %2563 = vmatprep.subr.mxu0 0.0
  %2564 = vmatpush1.msra.mxu0 0.0
  %2565 = vmatprep.subr.mxu0 0.0
  %2566 = vmatpush1.msra.mxu0 0.0
  %2567 = vmatprep.subr.mxu0 0.0
  %2568 = vmatpush1.msra.mxu0 0.0
  %2569 = vmatprep.subr.mxu0 0.0
  %2570 = vmatpush1.msra.mxu0 0.0
  %2571 = vmatprep.subr.mxu0 0.0
  %2572 = vmatpush1.msra.mxu0 0.0
  %2573 = vmatprep.subr.mxu0 0.0
  %2574 = vmatpush1.msra.mxu0 0.0
  %2575 = vmatprep.subr.mxu0 0.0
  %2576 = vmatpush1.msra.mxu0 0.0
  %2577 = vmatprep.subr.mxu0 0.0
  %2578 = vmatpush1.msra.mxu0 0.0
  %2579 = vmatprep.subr.mxu0 0.0
  %2580 = vmatpush1.msra.mxu0 0.0
  %2581 = vmatprep.subr.mxu0 0.0
  %2582 = vmatpush1.msra.mxu0 0.0
  %2583 = vmatprep.subr.mxu0 0.0
  %2584 = vmatpush1.msra.mxu0 0.0
  %2585 = vmatprep.subr.mxu0 0.0
  %2586 = vmatpush1.msra.mxu0 0.0
  %2587 = vmatprep.subr.mxu0 0.0
  %2588 = vmatpush1.msra.mxu0 0.0
  %2589 = vmatprep.subr.mxu0 0.0
  %2590 = vmatpush1.msra.mxu0 0.0
  %2591 = vmatprep.subr.mxu0 0.0
  %2592 = vmatpush1.msra.mxu0 0.0
  %2593 = vmatprep.subr.mxu0 0.0
  %2594 = vmatpush1.msra.mxu0 0.0
  %2595 = vmatprep.subr.mxu0 0.0
  %2596 = vmatpush1.msra.mxu0 0.0
  %2597 = vmatprep.subr.mxu0 0.0
  %2598 = vmatpush1.msra.mxu0 0.0
  %2599 = vmatprep.subr.mxu0 0.0
  %2600 = vmatpush1.msra.mxu0 0.0
  %2601 = vmatprep.subr.mxu0 0.0
  %2602 = vmatpush1.msra.mxu0 0.0
  %2603 = vmatprep.subr.mxu0 0.0
  %2604 = vmatpush1.msra.mxu0 0.0
  %2605 = vmatprep.subr.mxu0 0.0
  %2606 = vmatpush1.msra.mxu0 0.0
  %2607 = vmatprep.subr.mxu0 0.0
  %2608 = vmatpush1.msra.mxu0 0.0
  %2609 = vmatprep.subr.mxu0 0.0
  %2610 = vmatpush1.msra.mxu0 0.0
  %2611 = vmatprep.subr.mxu0 0.0
  %2612 = vmatpush1.msra.mxu0 0.0
  %2613 = vmatprep.subr.mxu0 0.0
  %2614 = vmatpush1.msra.mxu0 0.0
  %2615 = vmatprep.mubr.f32.mxu0 0.0
  %2616 = vmatmul.mubr.f32.gmra.mrb[0].mxu0 %v2540
  %v2617 = vpop.f32.mrb[0].mxu0
  %v2618 = vadd.f32 0.0, %v2617
  %v2619 = vpop.f32.mrb[0].mxu0
  %2620 = vmatprep.mubr.f32.mxu0 0.0
  %2621 = vmatmul.mubr.f32.gmra.mrb[0].mxu0 %v2543
  %v2622 = vpop.f32.mrb[0].mxu0
  %v2623 = vadd.f32 0.0, %v2622
  %v2624 = vpop.f32.mrb[0].mxu0
  %2625 = vmatprep.mubr.f32.mxu0 0.0
  %2626 = vmatmul.mubr.f32.gmra.mrb[0].mxu0 %v2546
  %v2627 = vpop.f32.mrb[0].mxu0
  %v2628 = vadd.f32 0.0, %v2627
  %v2629 = vpop.f32.mrb[0].mxu0
  %2630 = vmatprep.mubr.f32.mxu0 0.0
  %2631 = vmatmul.mubr.f32.gmra.mrb[0].mxu0 %v2549
  %v2632 = vpop.f32.mrb[0].mxu0
  %v2633 = vadd.f32 0.0, %v2632
  %v2634 = vpop.f32.mrb[0].mxu0
  %2635 = vdwg.mxu0
  %v2637 = vsel %vm20, %v2521, 0
  %v2640 = vsel %vm20, %v2522, 0
  %v2643 = vsel %vm20, %v2523, 0
  %v2646 = vsel %vm20, %v2524, 0
  %2648 = vmatprep.subr.mxu0 0.0
  %2649 = vmatpush1.msra.mxu0 %v2526
  %2650 = vmatprep.subr.mxu0 0.0
  %2651 = vmatpush1.msra.mxu0 %v2527
  %2652 = vmatprep.subr.mxu0 0.0
  %2653 = vmatpush1.msra.mxu0 %v2528
  %2654 = vmatprep.subr.mxu0 0.0
  %2655 = vmatpush1.msra.mxu0 %v2529
  %2656 = vmatprep.subr.mxu0 0.0
  %2657 = vmatpush1.msra.mxu0 0.0
  %2658 = vmatprep.subr.mxu0 0.0
  %2659 = vmatpush1.msra.mxu0 0.0
  %2660 = vmatprep.subr.mxu0 0.0
  %2661 = vmatpush1.msra.mxu0 0.0
  %2662 = vmatprep.subr.mxu0 0.0
  %2663 = vmatpush1.msra.mxu0 0.0
  %2664 = vmatprep.subr.mxu0 0.0
  %2665 = vmatpush1.msra.mxu0 0.0
  %2666 = vmatprep.subr.mxu0 0.0
  %2667 = vmatpush1.msra.mxu0 0.0
  %2668 = vmatprep.subr.mxu0 0.0
  %2669 = vmatpush1.msra.mxu0 0.0
  %2670 = vmatprep.subr.mxu0 0.0
  %2671 = vmatpush1.msra.mxu0 0.0
  %2672 = vmatprep.subr.mxu0 0.0
  %2673 = vmatpush1.msra.mxu0 0.0
  %2674 = vmatprep.subr.mxu0 0.0
  %2675 = vmatpush1.msra.mxu0 0.0
  %2676 = vmatprep.subr.mxu0 0.0
  %2677 = vmatpush1.msra.mxu0 0.0
  %2678 = vmatprep.subr.mxu0 0.0
  %2679 = vmatpush1.msra.mxu0 0.0
  %2680 = vmatprep.subr.mxu0 0.0
  %2681 = vmatpush1.msra.mxu0 0.0
  %2682 = vmatprep.subr.mxu0 0.0
  %2683 = vmatpush1.msra.mxu0 0.0
  %2684 = vmatprep.subr.mxu0 0.0
  %2685 = vmatpush1.msra.mxu0 0.0
  %2686 = vmatprep.subr.mxu0 0.0
  %2687 = vmatpush1.msra.mxu0 0.0
  %2688 = vmatprep.subr.mxu0 0.0
  %2689 = vmatpush1.msra.mxu0 0.0
  %2690 = vmatprep.subr.mxu0 0.0
  %2691 = vmatpush1.msra.mxu0 0.0
  %2692 = vmatprep.subr.mxu0 0.0
  %2693 = vmatpush1.msra.mxu0 0.0
  %2694 = vmatprep.subr.mxu0 0.0
  %2695 = vmatpush1.msra.mxu0 0.0
  %2696 = vmatprep.subr.mxu0 0.0
  %2697 = vmatpush1.msra.mxu0 0.0
  %2698 = vmatprep.subr.mxu0 0.0
  %2699 = vmatpush1.msra.mxu0 0.0
  %2700 = vmatprep.subr.mxu0 0.0
  %2701 = vmatpush1.msra.mxu0 0.0
  %2702 = vmatprep.subr.mxu0 0.0
  %2703 = vmatpush1.msra.mxu0 0.0
  %2704 = vmatprep.subr.mxu0 0.0
  %2705 = vmatpush1.msra.mxu0 0.0
  %2706 = vmatprep.subr.mxu0 0.0
  %2707 = vmatpush1.msra.mxu0 0.0
  %2708 = vmatprep.subr.mxu0 0.0
  %2709 = vmatpush1.msra.mxu0 0.0
  %2710 = vmatprep.subr.mxu0 0.0
  %2711 = vmatpush1.msra.mxu0 0.0
  %2712 = vmatprep.mubr.f32.mxu0 0.0
  %2713 = vmatmul.mubr.f32.gmra.mrb[0].mxu0 %v2637
  %v2714 = vpop.f32.mrb[0].mxu0
  %v2715 = vadd.f32 %v2618, %v2714
  %v2716 = vpop.f32.mrb[0].mxu0
  %2717 = vmatprep.mubr.f32.mxu0 0.0
  %2718 = vmatmul.mubr.f32.gmra.mrb[0].mxu0 %v2640
  %v2719 = vpop.f32.mrb[0].mxu0
  %v2720 = vadd.f32 %v2623, %v2719
  %v2721 = vpop.f32.mrb[0].mxu0
  %2722 = vmatprep.mubr.f32.mxu0 0.0
  %2723 = vmatmul.mubr.f32.gmra.mrb[0].mxu0 %v2643
  %v2724 = vpop.f32.mrb[0].mxu0
  %v2725 = vadd.f32 %v2628, %v2724
  %v2726 = vpop.f32.mrb[0].mxu0
  %2727 = vmatprep.mubr.f32.mxu0 0.0
  %2728 = vmatmul.mubr.f32.gmra.mrb[0].mxu0 %v2646
  %v2729 = vpop.f32.mrb[0].mxu0
  %v2730 = vadd.f32 %v2633, %v2729
  %v2731 = vpop.f32.mrb[0].mxu0
  %2732 = vdwg.mxu0
  %v2733 = vld [vmem:[#allocation2 + $0x8] sm:$0xff]
  %v2734 = vld [vmem:[#allocation2 + $0x10] sm:$0xff]
  %v2735 = vld [vmem:[#allocation2 + $0x28] sm:$0xff]
  %v2736 = vld [vmem:[#allocation2 + $0x30] sm:$0xff]
  %s2737 = scalar_lea.vmem %s1, 704
  %v2738 = vld [vmem:[%s2737] sm:$0xff]
  %v2739 = vld [vmem:[%s2737 + $0x8] sm:$0xff]
  %v2740 = vld [vmem:[%s2737 + $0x10] sm:$0xff]
  %v2741 = vld [vmem:[%s2737 + $0x18] sm:$0xff]
  %v2743 = vsel %vm20, %v2733, 0
  %v2746 = vsel %vm20, %v2734, 0
  %v2749 = vsel %vm20, %v2735, 0
  %v2752 = vsel %vm20, %v2736, 0
  %2754 = vmatprep.subr.mxu0 0.0
  %2755 = vmatpush1.msra.mxu0 %v2738
  %2756 = vmatprep.subr.mxu0 0.0
  %2757 = vmatpush1.msra.mxu0 %v2739
  %2758 = vmatprep.subr.mxu0 0.0
  %2759 = vmatpush1.msra.mxu0 %v2740
  %2760 = vmatprep.subr.mxu0 0.0
  %2761 = vmatpush1.msra.mxu0 %v2741
  %2762 = vmatprep.subr.mxu0 0.0
  %2763 = vmatpush1.msra.mxu0 0.0
  %2764 = vmatprep.subr.mxu0 0.0
  %2765 = vmatpush1.msra.mxu0 0.0
  %2766 = vmatprep.subr.mxu0 0.0
  %2767 = vmatpush1.msra.mxu0 0.0
  %2768 = vmatprep.subr.mxu0 0.0
  %2769 = vmatpush1.msra.mxu0 0.0
  %2770 = vmatprep.subr.mxu0 0.0
  %2771 = vmatpush1.msra.mxu0 0.0
  %2772 = vmatprep.subr.mxu0 0.0
  %2773 = vmatpush1.msra.mxu0 0.0
  %2774 = vmatprep.subr.mxu0 0.0
  %2775 = vmatpush1.msra.mxu0 0.0
  %2776 = vmatprep.subr.mxu0 0.0
  %2777 = vmatpush1.msra.mxu0 0.0
  %2778 = vmatprep.subr.mxu0 0.0
  %2779 = vmatpush1.msra.mxu0 0.0
  %2780 = vmatprep.subr.mxu0 0.0
  %2781 = vmatpush1.msra.mxu0 0.0
  %2782 = vmatprep.subr.mxu0 0.0
  %2783 = vmatpush1.msra.mxu0 0.0
  %2784 = vmatprep.subr.mxu0 0.0
  %2785 = vmatpush1.msra.mxu0 0.0
  %2786 = vmatprep.subr.mxu0 0.0
  %2787 = vmatpush1.msra.mxu0 0.0
  %2788 = vmatprep.subr.mxu0 0.0
  %2789 = vmatpush1.msra.mxu0 0.0
  %2790 = vmatprep.subr.mxu0 0.0
  %2791 = vmatpush1.msra.mxu0 0.0
  %2792 = vmatprep.subr.mxu0 0.0
  %2793 = vmatpush1.msra.mxu0 0.0
  %2794 = vmatprep.subr.mxu0 0.0
  %2795 = vmatpush1.msra.mxu0 0.0
  %2796 = vmatprep.subr.mxu0 0.0
  %2797 = vmatpush1.msra.mxu0 0.0
  %2798 = vmatprep.subr.mxu0 0.0
  %2799 = vmatpush1.msra.mxu0 0.0
  %2800 = vmatprep.subr.mxu0 0.0
  %2801 = vmatpush1.msra.mxu0 0.0
  %2802 = vmatprep.subr.mxu0 0.0
  %2803 = vmatpush1.msra.mxu0 0.0
  %2804 = vmatprep.subr.mxu0 0.0
  %2805 = vmatpush1.msra.mxu0 0.0
  %2806 = vmatprep.subr.mxu0 0.0
  %2807 = vmatpush1.msra.mxu0 0.0
  %2808 = vmatprep.subr.mxu0 0.0
  %2809 = vmatpush1.msra.mxu0 0.0
  %2810 = vmatprep.subr.mxu0 0.0
  %2811 = vmatpush1.msra.mxu0 0.0
  %2812 = vmatprep.subr.mxu0 0.0
  %2813 = vmatpush1.msra.mxu0 0.0
  %2814 = vmatprep.subr.mxu0 0.0
  %2815 = vmatpush1.msra.mxu0 0.0
  %2816 = vmatprep.subr.mxu0 0.0
  %2817 = vmatpush1.msra.mxu0 0.0
  %2818 = vmatprep.mubr.f32.mxu0 0.0
  %2819 = vmatmul.mubr.f32.gmra.mrb[0].mxu0 %v2743
  %v2820 = vpop.f32.mrb[0].mxu0
  %v2821 = vadd.f32 0.0, %v2820
  %v2822 = vpop.f32.mrb[0].mxu0
  %2823 = vmatprep.mubr.f32.mxu0 0.0
  %2824 = vmatmul.mubr.f32.gmra.mrb[0].mxu0 %v2746
  %v2825 = vpop.f32.mrb[0].mxu0
  %v2826 = vadd.f32 0.0, %v2825
  %v2827 = vpop.f32.mrb[0].mxu0
  %2828 = vmatprep.mubr.f32.mxu0 0.0
  %2829 = vmatmul.mubr.f32.gmra.mrb[0].mxu0 %v2749
  %v2830 = vpop.f32.mrb[0].mxu0
  %v2831 = vadd.f32 0.0, %v2830
  %v2832 = vpop.f32.mrb[0].mxu0
  %2833 = vmatprep.mubr.f32.mxu0 0.0
  %2834 = vmatmul.mubr.f32.gmra.mrb[0].mxu0 %v2752
  %v2835 = vpop.f32.mrb[0].mxu0
  %v2836 = vadd.f32 0.0, %v2835
  %v2837 = vpop.f32.mrb[0].mxu0
  %2838 = vdwg.mxu0
  %v2839 = vadd.f32 %v2715, %v2821
  %v2840 = vadd.f32 %v2720, %v2826
  %v2841 = vadd.f32 %v2725, %v2831
  %v2842 = vadd.f32 %v2730, %v2836
  %v2843 = vld [vmem:[#allocation2 + $0x9] sm:$0xff]
  %v2844 = vld [vmem:[#allocation2 + $0x11] sm:$0xff]
  %v2845 = vld [vmem:[#allocation2 + $0x29] sm:$0xff]
  %v2846 = vld [vmem:[#allocation2 + $0x31] sm:$0xff]
  %s2847 = scalar_lea.vmem %s1, 736
  %v2848 = vld [vmem:[%s2847] sm:$0xff]
  %v2849 = vld [vmem:[%s2847 + $0x8] sm:$0xff]
  %v2850 = vld [vmem:[%s2847 + $0x10] sm:$0xff]
  %v2851 = vld [vmem:[%s2847 + $0x18] sm:$0xff]
  %v2853 = vsel %vm20, %v2843, 0
  %v2856 = vsel %vm20, %v2844, 0
  %v2859 = vsel %vm20, %v2845, 0
  %v2862 = vsel %vm20, %v2846, 0
  %2864 = vmatprep.subr.mxu0 0.0
  %2865 = vmatpush1.msra.mxu0 %v2848
  %2866 = vmatprep.subr.mxu0 0.0
  %2867 = vmatpush1.msra.mxu0 %v2849
  %2868 = vmatprep.subr.mxu0 0.0
  %2869 = vmatpush1.msra.mxu0 %v2850
  %2870 = vmatprep.subr.mxu0 0.0
  %2871 = vmatpush1.msra.mxu0 %v2851
  %2872 = vmatprep.subr.mxu0 0.0
  %2873 = vmatpush1.msra.mxu0 0.0
  %2874 = vmatprep.subr.mxu0 0.0
  %2875 = vmatpush1.msra.mxu0 0.0
  %2876 = vmatprep.subr.mxu0 0.0
  %2877 = vmatpush1.msra.mxu0 0.0
  %2878 = vmatprep.subr.mxu0 0.0
  %2879 = vmatpush1.msra.mxu0 0.0
  %2880 = vmatprep.subr.mxu0 0.0
  %2881 = vmatpush1.msra.mxu0 0.0
  %2882 = vmatprep.subr.mxu0 0.0
  %2883 = vmatpush1.msra.mxu0 0.0
  %2884 = vmatprep.subr.mxu0 0.0
  %2885 = vmatpush1.msra.mxu0 0.0
  %2886 = vmatprep.subr.mxu0 0.0
  %2887 = vmatpush1.msra.mxu0 0.0
  %2888 = vmatprep.subr.mxu0 0.0
  %2889 = vmatpush1.msra.mxu0 0.0
  %2890 = vmatprep.subr.mxu0 0.0
  %2891 = vmatpush1.msra.mxu0 0.0
  %2892 = vmatprep.subr.mxu0 0.0
  %2893 = vmatpush1.msra.mxu0 0.0
  %2894 = vmatprep.subr.mxu0 0.0
  %2895 = vmatpush1.msra.mxu0 0.0
  %2896 = vmatprep.subr.mxu0 0.0
  %2897 = vmatpush1.msra.mxu0 0.0
  %2898 = vmatprep.subr.mxu0 0.0
  %2899 = vmatpush1.msra.mxu0 0.0
  %2900 = vmatprep.subr.mxu0 0.0
  %2901 = vmatpush1.msra.mxu0 0.0
  %2902 = vmatprep.subr.mxu0 0.0
  %2903 = vmatpush1.msra.mxu0 0.0
  %2904 = vmatprep.subr.mxu0 0.0
  %2905 = vmatpush1.msra.mxu0 0.0
  %2906 = vmatprep.subr.mxu0 0.0
  %2907 = vmatpush1.msra.mxu0 0.0
  %2908 = vmatprep.subr.mxu0 0.0
  %2909 = vmatpush1.msra.mxu0 0.0
  %2910 = vmatprep.subr.mxu0 0.0
  %2911 = vmatpush1.msra.mxu0 0.0
  %2912 = vmatprep.subr.mxu0 0.0
  %2913 = vmatpush1.msra.mxu0 0.0
  %2914 = vmatprep.subr.mxu0 0.0
  %2915 = vmatpush1.msra.mxu0 0.0
  %2916 = vmatprep.subr.mxu0 0.0
  %2917 = vmatpush1.msra.mxu0 0.0
  %2918 = vmatprep.subr.mxu0 0.0
  %2919 = vmatpush1.msra.mxu0 0.0
  %2920 = vmatprep.subr.mxu0 0.0
  %2921 = vmatpush1.msra.mxu0 0.0
  %2922 = vmatprep.subr.mxu0 0.0
  %2923 = vmatpush1.msra.mxu0 0.0
  %2924 = vmatprep.subr.mxu0 0.0
  %2925 = vmatpush1.msra.mxu0 0.0
  %2926 = vmatprep.subr.mxu0 0.0
  %2927 = vmatpush1.msra.mxu0 0.0
  %2928 = vmatprep.mubr.f32.mxu0 0.0
  %2929 = vmatmul.mubr.f32.gmra.mrb[0].mxu0 %v2853
  %v2930 = vpop.f32.mrb[0].mxu0
  %v2931 = vadd.f32 0.0, %v2930
  %v2932 = vpop.f32.mrb[0].mxu0
  %2933 = vmatprep.mubr.f32.mxu0 0.0
  %2934 = vmatmul.mubr.f32.gmra.mrb[0].mxu0 %v2856
  %v2935 = vpop.f32.mrb[0].mxu0
  %v2936 = vadd.f32 0.0, %v2935
  %v2937 = vpop.f32.mrb[0].mxu0
  %2938 = vmatprep.mubr.f32.mxu0 0.0
  %2939 = vmatmul.mubr.f32.gmra.mrb[0].mxu0 %v2859
  %v2940 = vpop.f32.mrb[0].mxu0
  %v2941 = vadd.f32 0.0, %v2940
  %v2942 = vpop.f32.mrb[0].mxu0
  %2943 = vmatprep.mubr.f32.mxu0 0.0
  %2944 = vmatmul.mubr.f32.gmra.mrb[0].mxu0 %v2862
  %v2945 = vpop.f32.mrb[0].mxu0
  %v2946 = vadd.f32 0.0, %v2945
  %v2947 = vpop.f32.mrb[0].mxu0
  %2948 = vdwg.mxu0
  %v2949 = vadd.f32 %v2839, %v2931
  %v2950 = vadd.f32 %v2840, %v2936
  %v2951 = vadd.f32 %v2841, %v2941
  %v2952 = vadd.f32 %v2842, %v2946
  %v2953 = vld [vmem:[#allocation2 + $0xa] sm:$0xff]
  %v2954 = vld [vmem:[#allocation2 + $0x12] sm:$0xff]
  %v2955 = vld [vmem:[#allocation2 + $0x2a] sm:$0xff]
  %v2956 = vld [vmem:[#allocation2 + $0x32] sm:$0xff]
  %s2957 = scalar_lea.vmem %s1, 768
  %v2958 = vld [vmem:[%s2957] sm:$0xff]
  %v2959 = vld [vmem:[%s2957 + $0x8] sm:$0xff]
  %v2960 = vld [vmem:[%s2957 + $0x10] sm:$0xff]
  %v2961 = vld [vmem:[%s2957 + $0x18] sm:$0xff]
  %v2963 = vsel %vm20, %v2953, 0
  %v2966 = vsel %vm20, %v2954, 0
  %v2969 = vsel %vm20, %v2955, 0
  %v2972 = vsel %vm20, %v2956, 0
  %2974 = vmatprep.subr.mxu0 0.0
  %2975 = vmatpush1.msra.mxu0 %v2958
  %2976 = vmatprep.subr.mxu0 0.0
  %2977 = vmatpush1.msra.mxu0 %v2959
  %2978 = vmatprep.subr.mxu0 0.0
  %2979 = vmatpush1.msra.mxu0 %v2960
  %2980 = vmatprep.subr.mxu0 0.0
  %2981 = vmatpush1.msra.mxu0 %v2961
  %2982 = vmatprep.subr.mxu0 0.0
  %2983 = vmatpush1.msra.mxu0 0.0
  %2984 = vmatprep.subr.mxu0 0.0
  %2985 = vmatpush1.msra.mxu0 0.0
  %2986 = vmatprep.subr.mxu0 0.0
  %2987 = vmatpush1.msra.mxu0 0.0
  %2988 = vmatprep.subr.mxu0 0.0
  %2989 = vmatpush1.msra.mxu0 0.0
  %2990 = vmatprep.subr.mxu0 0.0
  %2991 = vmatpush1.msra.mxu0 0.0
  %2992 = vmatprep.subr.mxu0 0.0
  %2993 = vmatpush1.msra.mxu0 0.0
  %2994 = vmatprep.subr.mxu0 0.0
  %2995 = vmatpush1.msra.mxu0 0.0
  %2996 = vmatprep.subr.mxu0 0.0
  %2997 = vmatpush1.msra.mxu0 0.0
  %2998 = vmatprep.subr.mxu0 0.0
  %2999 = vmatpush1.msra.mxu0 0.0
  %3000 = vmatprep.subr.mxu0 0.0
  %3001 = vmatpush1.msra.mxu0 0.0
  %3002 = vmatprep.subr.mxu0 0.0
  %3003 = vmatpush1.msra.mxu0 0.0
  %3004 = vmatprep.subr.mxu0 0.0
  %3005 = vmatpush1.msra.mxu0 0.0
  %3006 = vmatprep.subr.mxu0 0.0
  %3007 = vmatpush1.msra.mxu0 0.0
  %3008 = vmatprep.subr.mxu0 0.0
  %3009 = vmatpush1.msra.mxu0 0.0
  %3010 = vmatprep.subr.mxu0 0.0
  %3011 = vmatpush1.msra.mxu0 0.0
  %3012 = vmatprep.subr.mxu0 0.0
  %3013 = vmatpush1.msra.mxu0 0.0
  %3014 = vmatprep.subr.mxu0 0.0
  %3015 = vmatpush1.msra.mxu0 0.0
  %3016 = vmatprep.subr.mxu0 0.0
  %3017 = vmatpush1.msra.mxu0 0.0
  %3018 = vmatprep.subr.mxu0 0.0
  %3019 = vmatpush1.msra.mxu0 0.0
  %3020 = vmatprep.subr.mxu0 0.0
  %3021 = vmatpush1.msra.mxu0 0.0
  %3022 = vmatprep.subr.mxu0 0.0
  %3023 = vmatpush1.msra.mxu0 0.0
  %3024 = vmatprep.subr.mxu0 0.0
  %3025 = vmatpush1.msra.mxu0 0.0
  %3026 = vmatprep.subr.mxu0 0.0
  %3027 = vmatpush1.msra.mxu0 0.0
  %3028 = vmatprep.subr.mxu0 0.0
  %3029 = vmatpush1.msra.mxu0 0.0
  %3030 = vmatprep.subr.mxu0 0.0
  %3031 = vmatpush1.msra.mxu0 0.0
  %3032 = vmatprep.subr.mxu0 0.0
  %3033 = vmatpush1.msra.mxu0 0.0
  %3034 = vmatprep.subr.mxu0 0.0
  %3035 = vmatpush1.msra.mxu0 0.0
  %3036 = vmatprep.subr.mxu0 0.0
  %3037 = vmatpush1.msra.mxu0 0.0
  %3038 = vmatprep.mubr.f32.mxu0 0.0
  %3039 = vmatmul.mubr.f32.gmra.mrb[0].mxu0 %v2963
  %v3040 = vpop.f32.mrb[0].mxu0
  %v3041 = vadd.f32 0.0, %v3040
  %v3042 = vpop.f32.mrb[0].mxu0
  %3043 = vmatprep.mubr.f32.mxu0 0.0
  %3044 = vmatmul.mubr.f32.gmra.mrb[0].mxu0 %v2966
  %v3045 = vpop.f32.mrb[0].mxu0
  %v3046 = vadd.f32 0.0, %v3045
  %v3047 = vpop.f32.mrb[0].mxu0
  %3048 = vmatprep.mubr.f32.mxu0 0.0
  %3049 = vmatmul.mubr.f32.gmra.mrb[0].mxu0 %v2969
  %v3050 = vpop.f32.mrb[0].mxu0
  %v3051 = vadd.f32 0.0, %v3050
  %v3052 = vpop.f32.mrb[0].mxu0
  %3053 = vmatprep.mubr.f32.mxu0 0.0
  %3054 = vmatmul.mubr.f32.gmra.mrb[0].mxu0 %v2972
  %v3055 = vpop.f32.mrb[0].mxu0
  %v3056 = vadd.f32 0.0, %v3055
  %v3057 = vpop.f32.mrb[0].mxu0
  %3058 = vdwg.mxu0
  %v3059 = vadd.f32 %v2949, %v3041
  %v3060 = vadd.f32 %v2950, %v3046
  %v3061 = vadd.f32 %v2951, %v3051
  %v3062 = vadd.f32 %v2952, %v3056
  %v3063 = vld [vmem:[%s2 + $0x4] sm:$0x1]
  %v3064 = vlaneseq
  %v3065 = vshrl.u32 %v3064, 7
  %v3066 = vsub.s32 0, %v3065
  %v3067 = vrot.slane %v3063, %v3066
  %v3068 = vadd.f32 %v3059, %v3067
  %v3069 = vadd.f32 %v3060, %v3067
  %v3070 = vadd.f32 %v3061, %v3067
  %v3071 = vadd.f32 %v3062, %v3067
  %v3072 = vmax.f32 %v3068, 0.0
  %v3073 = vmax.f32 %v3069, 0.0
  %v3074 = vmax.f32 %v3070, 0.0
  %v3075 = vmax.f32 %v3071, 0.0
  %v3076 = vsel %vm20, %v3072, 0.0
  %v3077 = vsel %vm20, %v3073, 0.0
  %v3078 = vadd.f32 %v3076, %v3077
  %v3079 = vsel %vm20, %v3074, 0.0
  %v3080 = vadd.f32 %v3078, %v3079
  %v3081 = vsel %vm20, %v3075, 0.0
  %v3082 = vadd.f32 %v3080, %v3081
  %v3083 = vrot.slane %v3082, 4
  %v3084 = vadd.f32 %v3082, %v3083
  %v3085 = vrot.slane %v3084, 2
  %v3086 = vadd.f32 %v3084, %v3085
  %v3087 = vrot.slane %v3086, 1
  %v3088 = vadd.f32 %v3086, %v3087
  %v3089 = vmul.f32 %v3088, %v604
  %v3090 = vmul.f32 %v3072, %v3072
  %v3091 = vmul.f32 %v3073, %v3073
  %v3092 = vmul.f32 %v3074, %v3074
  %v3093 = vmul.f32 %v3075, %v3075
  %v3094 = vsel %vm20, %v3090, 0.0
  %v3095 = vsel %vm20, %v3091, 0.0
  %v3096 = vadd.f32 %v3094, %v3095
  %v3097 = vsel %vm20, %v3092, 0.0
  %v3098 = vadd.f32 %v3096, %v3097
  %v3099 = vsel %vm20, %v3093, 0.0
  %v3100 = vadd.f32 %v3098, %v3099
  %v3101 = vrot.slane %v3100, 4
  %v3102 = vadd.f32 %v3100, %v3101
  %v3103 = vrot.slane %v3102, 2
  %v3104 = vadd.f32 %v3102, %v3103
  %v3105 = vrot.slane %v3104, 1
  %v3106 = vadd.f32 %v3104, %v3105
  %v3107 = vmul.f32 %v3106, %v604
  %v3108 = vmul.f32 %v3089, %v3089
  %v3109 = vsub.f32 %v3107, %v3108
  %v3110 = vsub.f32 %v3072, %v3089
  %v3111 = vsub.f32 %v3073, %v3089
  %v3112 = vsub.f32 %v3074, %v3089
  %v3113 = vsub.f32 %v3075, %v3089
  %v3114 = vadd.f32 %v3109, 1e-05
  %v3115 = vrsqrt.pop %v3114
  %v3116 = vmul.f32 %v3110, %v3115
  %v3117 = vmul.f32 %v3111, %v3115
  %v3118 = vmul.f32 %v3112, %v3115
  %v3119 = vmul.f32 %v3113, %v3115
  %v3120 = vld [vmem:[%s3 + $0x4] sm:$0x1]
  %v3121 = vlaneseq
  %v3122 = vshrl.u32 %v3121, 7
  %v3123 = vsub.s32 0, %v3122
  %v3124 = vrot.slane %v3120, %v3123
  %v3125 = vmul.f32 %v3116, %v3124
  %v3126 = vmul.f32 %v3117, %v3124
  %v3127 = vmul.f32 %v3118, %v3124
  %v3128 = vmul.f32 %v3119, %v3124
  %v3129 = vld [vmem:[%s4 + $0x4] sm:$0x1]
  %v3130 = vlaneseq
  %v3131 = vshrl.u32 %v3130, 7
  %v3132 = vsub.s32 0, %v3131
  %v3133 = vrot.slane %v3129, %v3132
  %v3134 = vadd.f32 %v3125, %v3133
  %v3135 = vadd.f32 %v3126, %v3133
  %v3136 = vadd.f32 %v3127, %v3133
  %v3137 = vadd.f32 %v3128, %v3133
  %3138 = vst.msk [vmem:[#allocation2 + $0x8] sm:$0xff] %vm20, %v3134
  %3139 = vst.msk [vmem:[#allocation2 + $0x10] sm:$0xff] %vm20, %v3135
  %3140 = vst.msk [vmem:[#allocation2 + $0x28] sm:$0xff] %vm20, %v3136
  %3141 = vst.msk [vmem:[#allocation2 + $0x30] sm:$0xff] %vm20, %v3137
  %v3142 = vld [vmem:[#allocation2 + $0x6] sm:$0xff]
  %v3143 = vld [vmem:[#allocation2 + $0xe] sm:$0xff]
  %v3144 = vld [vmem:[#allocation2 + $0x26] sm:$0xff]
  %v3145 = vld [vmem:[#allocation2 + $0x2e] sm:$0xff]
  %s3146 = scalar_lea.vmem %s1, 800
  %v3147 = vld [vmem:[%s3146] sm:$0xff]
  %v3148 = vld [vmem:[%s3146 + $0x8] sm:$0xff]
  %v3149 = vld [vmem:[%s3146 + $0x10] sm:$0xff]
  %v3150 = vld [vmem:[%s3146 + $0x18] sm:$0xff]
  %v3151 = vld [vmem:[#allocation2 + $0x7] sm:$0xff]
  %v3152 = vld [vmem:[#allocation2 + $0xf] sm:$0xff]
  %v3153 = vld [vmem:[#allocation2 + $0x27] sm:$0xff]
  %v3154 = vld [vmem:[#allocation2 + $0x2f] sm:$0xff]
  %s3155 = scalar_lea.vmem %s1, 832
  %v3156 = vld [vmem:[%s3155] sm:$0xff]
  %v3157 = vld [vmem:[%s3155 + $0x8] sm:$0xff]
  %v3158 = vld [vmem:[%s3155 + $0x10] sm:$0xff]
  %v3159 = vld [vmem:[%s3155 + $0x18] sm:$0xff]
  %v3161 = vsel %vm20, %v3151, 0
  %v3164 = vsel %vm20, %v3152, 0
  %v3167 = vsel %vm20, %v3153, 0
  %v3170 = vsel %vm20, %v3154, 0
  %3172 = vmatprep.subr.mxu0 0.0
  %3173 = vmatpush1.msra.mxu0 %v3156
  %3174 = vmatprep.subr.mxu0 0.0
  %3175 = vmatpush1.msra.mxu0 %v3157
  %3176 = vmatprep.subr.mxu0 0.0
  %3177 = vmatpush1.msra.mxu0 %v3158
  %3178 = vmatprep.subr.mxu0 0.0
  %3179 = vmatpush1.msra.mxu0 %v3159
  %3180 = vmatprep.subr.mxu0 0.0
  %3181 = vmatpush1.msra.mxu0 0.0
  %3182 = vmatprep.subr.mxu0 0.0
  %3183 = vmatpush1.msra.mxu0 0.0
  %3184 = vmatprep.subr.mxu0 0.0
  %3185 = vmatpush1.msra.mxu0 0.0
  %3186 = vmatprep.subr.mxu0 0.0
  %3187 = vmatpush1.msra.mxu0 0.0
  %3188 = vmatprep.subr.mxu0 0.0
  %3189 = vmatpush1.msra.mxu0 0.0
  %3190 = vmatprep.subr.mxu0 0.0
  %3191 = vmatpush1.msra.mxu0 0.0
  %3192 = vmatprep.subr.mxu0 0.0
  %3193 = vmatpush1.msra.mxu0 0.0
  %3194 = vmatprep.subr.mxu0 0.0
  %3195 = vmatpush1.msra.mxu0 0.0
  %3196 = vmatprep.subr.mxu0 0.0
  %3197 = vmatpush1.msra.mxu0 0.0
  %3198 = vmatprep.subr.mxu0 0.0
  %3199 = vmatpush1.msra.mxu0 0.0
  %3200 = vmatprep.subr.mxu0 0.0
  %3201 = vmatpush1.msra.mxu0 0.0
  %3202 = vmatprep.subr.mxu0 0.0
  %3203 = vmatpush1.msra.mxu0 0.0
  %3204 = vmatprep.subr.mxu0 0.0
  %3205 = vmatpush1.msra.mxu0 0.0
  %3206 = vmatprep.subr.mxu0 0.0
  %3207 = vmatpush1.msra.mxu0 0.0
  %3208 = vmatprep.subr.mxu0 0.0
  %3209 = vmatpush1.msra.mxu0 0.0
  %3210 = vmatprep.subr.mxu0 0.0
  %3211 = vmatpush1.msra.mxu0 0.0
  %3212 = vmatprep.subr.mxu0 0.0
  %3213 = vmatpush1.msra.mxu0 0.0
  %3214 = vmatprep.subr.mxu0 0.0
  %3215 = vmatpush1.msra.mxu0 0.0
  %3216 = vmatprep.subr.mxu0 0.0
  %3217 = vmatpush1.msra.mxu0 0.0
  %3218 = vmatprep.subr.mxu0 0.0
  %3219 = vmatpush1.msra.mxu0 0.0
  %3220 = vmatprep.subr.mxu0 0.0
  %3221 = vmatpush1.msra.mxu0 0.0
  %3222 = vmatprep.subr.mxu0 0.0
  %3223 = vmatpush1.msra.mxu0 0.0
  %3224 = vmatprep.subr.mxu0 0.0
  %3225 = vmatpush1.msra.mxu0 0.0
  %3226 = vmatprep.subr.mxu0 0.0
  %3227 = vmatpush1.msra.mxu0 0.0
  %3228 = vmatprep.subr.mxu0 0.0
  %3229 = vmatpush1.msra.mxu0 0.0
  %3230 = vmatprep.subr.mxu0 0.0
  %3231 = vmatpush1.msra.mxu0 0.0
  %3232 = vmatprep.subr.mxu0 0.0
  %3233 = vmatpush1.msra.mxu0 0.0
  %3234 = vmatprep.subr.mxu0 0.0
  %3235 = vmatpush1.msra.mxu0 0.0
  %3236 = vmatprep.mubr.f32.mxu0 0.0
  %3237 = vmatmul.mubr.f32.gmra.mrb[0].mxu0 %v3161
  %v3238 = vpop.f32.mrb[0].mxu0
  %v3239 = vadd.f32 0.0, %v3238
  %v3240 = vpop.f32.mrb[0].mxu0
  %3241 = vmatprep.mubr.f32.mxu0 0.0
  %3242 = vmatmul.mubr.f32.gmra.mrb[0].mxu0 %v3164
  %v3243 = vpop.f32.mrb[0].mxu0
  %v3244 = vadd.f32 0.0, %v3243
  %v3245 = vpop.f32.mrb[0].mxu0
  %3246 = vmatprep.mubr.f32.mxu0 0.0
  %3247 = vmatmul.mubr.f32.gmra.mrb[0].mxu0 %v3167
  %v3248 = vpop.f32.mrb[0].mxu0
  %v3249 = vadd.f32 0.0, %v3248
  %v3250 = vpop.f32.mrb[0].mxu0
  %3251 = vmatprep.mubr.f32.mxu0 0.0
  %3252 = vmatmul.mubr.f32.gmra.mrb[0].mxu0 %v3170
  %v3253 = vpop.f32.mrb[0].mxu0
  %v3254 = vadd.f32 0.0, %v3253
  %v3255 = vpop.f32.mrb[0].mxu0
  %3256 = vdwg.mxu0
  %v3258 = vsel %vm20, %v3142, 0
  %v3261 = vsel %vm20, %v3143, 0
  %v3264 = vsel %vm20, %v3144, 0
  %v3267 = vsel %vm20, %v3145, 0
  %3269 = vmatprep.subr.mxu0 0.0
  %3270 = vmatpush1.msra.mxu0 %v3147
  %3271 = vmatprep.subr.mxu0 0.0
  %3272 = vmatpush1.msra.mxu0 %v3148
  %3273 = vmatprep.subr.mxu0 0.0
  %3274 = vmatpush1.msra.mxu0 %v3149
  %3275 = vmatprep.subr.mxu0 0.0
  %3276 = vmatpush1.msra.mxu0 %v3150
  %3277 = vmatprep.subr.mxu0 0.0
  %3278 = vmatpush1.msra.mxu0 0.0
  %3279 = vmatprep.subr.mxu0 0.0
  %3280 = vmatpush1.msra.mxu0 0.0
  %3281 = vmatprep.subr.mxu0 0.0
  %3282 = vmatpush1.msra.mxu0 0.0
  %3283 = vmatprep.subr.mxu0 0.0
  %3284 = vmatpush1.msra.mxu0 0.0
  %3285 = vmatprep.subr.mxu0 0.0
  %3286 = vmatpush1.msra.mxu0 0.0
  %3287 = vmatprep.subr.mxu0 0.0
  %3288 = vmatpush1.msra.mxu0 0.0
  %3289 = vmatprep.subr.mxu0 0.0
  %3290 = vmatpush1.msra.mxu0 0.0
  %3291 = vmatprep.subr.mxu0 0.0
  %3292 = vmatpush1.msra.mxu0 0.0
  %3293 = vmatprep.subr.mxu0 0.0
  %3294 = vmatpush1.msra.mxu0 0.0
  %3295 = vmatprep.subr.mxu0 0.0
  %3296 = vmatpush1.msra.mxu0 0.0
  %3297 = vmatprep.subr.mxu0 0.0
  %3298 = vmatpush1.msra.mxu0 0.0
  %3299 = vmatprep.subr.mxu0 0.0
  %3300 = vmatpush1.msra.mxu0 0.0
  %3301 = vmatprep.subr.mxu0 0.0
  %3302 = vmatpush1.msra.mxu0 0.0
  %3303 = vmatprep.subr.mxu0 0.0
  %3304 = vmatpush1.msra.mxu0 0.0
  %3305 = vmatprep.subr.mxu0 0.0
  %3306 = vmatpush1.msra.mxu0 0.0
  %3307 = vmatprep.subr.mxu0 0.0
  %3308 = vmatpush1.msra.mxu0 0.0
  %3309 = vmatprep.subr.mxu0 0.0
  %3310 = vmatpush1.msra.mxu0 0.0
  %3311 = vmatprep.subr.mxu0 0.0
  %3312 = vmatpush1.msra.mxu0 0.0
  %3313 = vmatprep.subr.mxu0 0.0
  %3314 = vmatpush1.msra.mxu0 0.0
  %3315 = vmatprep.subr.mxu0 0.0
  %3316 = vmatpush1.msra.mxu0 0.0
  %3317 = vmatprep.subr.mxu0 0.0
  %3318 = vmatpush1.msra.mxu0 0.0
  %3319 = vmatprep.subr.mxu0 0.0
  %3320 = vmatpush1.msra.mxu0 0.0
  %3321 = vmatprep.subr.mxu0 0.0
  %3322 = vmatpush1.msra.mxu0 0.0
  %3323 = vmatprep.subr.mxu0 0.0
  %3324 = vmatpush1.msra.mxu0 0.0
  %3325 = vmatprep.subr.mxu0 0.0
  %3326 = vmatpush1.msra.mxu0 0.0
  %3327 = vmatprep.subr.mxu0 0.0
  %3328 = vmatpush1.msra.mxu0 0.0
  %3329 = vmatprep.subr.mxu0 0.0
  %3330 = vmatpush1.msra.mxu0 0.0
  %3331 = vmatprep.subr.mxu0 0.0
  %3332 = vmatpush1.msra.mxu0 0.0
  %3333 = vmatprep.mubr.f32.mxu0 0.0
  %3334 = vmatmul.mubr.f32.gmra.mrb[0].mxu0 %v3258
  %v3335 = vpop.f32.mrb[0].mxu0
  %v3336 = vadd.f32 %v3239, %v3335
  %v3337 = vpop.f32.mrb[0].mxu0
  %3338 = vmatprep.mubr.f32.mxu0 0.0
  %3339 = vmatmul.mubr.f32.gmra.mrb[0].mxu0 %v3261
  %v3340 = vpop.f32.mrb[0].mxu0
  %v3341 = vadd.f32 %v3244, %v3340
  %v3342 = vpop.f32.mrb[0].mxu0
  %3343 = vmatprep.mubr.f32.mxu0 0.0
  %3344 = vmatmul.mubr.f32.gmra.mrb[0].mxu0 %v3264
  %v3345 = vpop.f32.mrb[0].mxu0
  %v3346 = vadd.f32 %v3249, %v3345
  %v3347 = vpop.f32.mrb[0].mxu0
  %3348 = vmatprep.mubr.f32.mxu0 0.0
  %3349 = vmatmul.mubr.f32.gmra.mrb[0].mxu0 %v3267
  %v3350 = vpop.f32.mrb[0].mxu0
  %v3351 = vadd.f32 %v3254, %v3350
  %v3352 = vpop.f32.mrb[0].mxu0
  %3353 = vdwg.mxu0
  %v3354 = vld [vmem:[#allocation2 + $0x8] sm:$0xff]
  %v3355 = vld [vmem:[#allocation2 + $0x10] sm:$0xff]
  %v3356 = vld [vmem:[#allocation2 + $0x28] sm:$0xff]
  %v3357 = vld [vmem:[#allocation2 + $0x30] sm:$0xff]
  %s3358 = scalar_lea.vmem %s1, 864
  %v3359 = vld [vmem:[%s3358] sm:$0xff]
  %v3360 = vld [vmem:[%s3358 + $0x8] sm:$0xff]
  %v3361 = vld [vmem:[%s3358 + $0x10] sm:$0xff]
  %v3362 = vld [vmem:[%s3358 + $0x18] sm:$0xff]
  %v3364 = vsel %vm20, %v3354, 0
  %v3367 = vsel %vm20, %v3355, 0
  %v3370 = vsel %vm20, %v3356, 0
  %v3373 = vsel %vm20, %v3357, 0
  %3375 = vmatprep.subr.mxu0 0.0
  %3376 = vmatpush1.msra.mxu0 %v3359
  %3377 = vmatprep.subr.mxu0 0.0
  %3378 = vmatpush1.msra.mxu0 %v3360
  %3379 = vmatprep.subr.mxu0 0.0
  %3380 = vmatpush1.msra.mxu0 %v3361
  %3381 = vmatprep.subr.mxu0 0.0
  %3382 = vmatpush1.msra.mxu0 %v3362
  %3383 = vmatprep.subr.mxu0 0.0
  %3384 = vmatpush1.msra.mxu0 0.0
  %3385 = vmatprep.subr.mxu0 0.0
  %3386 = vmatpush1.msra.mxu0 0.0
  %3387 = vmatprep.subr.mxu0 0.0
  %3388 = vmatpush1.msra.mxu0 0.0
  %3389 = vmatprep.subr.mxu0 0.0
  %3390 = vmatpush1.msra.mxu0 0.0
  %3391 = vmatprep.subr.mxu0 0.0
  %3392 = vmatpush1.msra.mxu0 0.0
  %3393 = vmatprep.subr.mxu0 0.0
  %3394 = vmatpush1.msra.mxu0 0.0
  %3395 = vmatprep.subr.mxu0 0.0
  %3396 = vmatpush1.msra.mxu0 0.0
  %3397 = vmatprep.subr.mxu0 0.0
  %3398 = vmatpush1.msra.mxu0 0.0
  %3399 = vmatprep.subr.mxu0 0.0
  %3400 = vmatpush1.msra.mxu0 0.0
  %3401 = vmatprep.subr.mxu0 0.0
  %3402 = vmatpush1.msra.mxu0 0.0
  %3403 = vmatprep.subr.mxu0 0.0
  %3404 = vmatpush1.msra.mxu0 0.0
  %3405 = vmatprep.subr.mxu0 0.0
  %3406 = vmatpush1.msra.mxu0 0.0
  %3407 = vmatprep.subr.mxu0 0.0
  %3408 = vmatpush1.msra.mxu0 0.0
  %3409 = vmatprep.subr.mxu0 0.0
  %3410 = vmatpush1.msra.mxu0 0.0
  %3411 = vmatprep.subr.mxu0 0.0
  %3412 = vmatpush1.msra.mxu0 0.0
  %3413 = vmatprep.subr.mxu0 0.0
  %3414 = vmatpush1.msra.mxu0 0.0
  %3415 = vmatprep.subr.mxu0 0.0
  %3416 = vmatpush1.msra.mxu0 0.0
  %3417 = vmatprep.subr.mxu0 0.0
  %3418 = vmatpush1.msra.mxu0 0.0
  %3419 = vmatprep.subr.mxu0 0.0
  %3420 = vmatpush1.msra.mxu0 0.0
  %3421 = vmatprep.subr.mxu0 0.0
  %3422 = vmatpush1.msra.mxu0 0.0
  %3423 = vmatprep.subr.mxu0 0.0
  %3424 = vmatpush1.msra.mxu0 0.0
  %3425 = vmatprep.subr.mxu0 0.0
  %3426 = vmatpush1.msra.mxu0 0.0
  %3427 = vmatprep.subr.mxu0 0.0
  %3428 = vmatpush1.msra.mxu0 0.0
  %3429 = vmatprep.subr.mxu0 0.0
  %3430 = vmatpush1.msra.mxu0 0.0
  %3431 = vmatprep.subr.mxu0 0.0
  %3432 = vmatpush1.msra.mxu0 0.0
  %3433 = vmatprep.subr.mxu0 0.0
  %3434 = vmatpush1.msra.mxu0 0.0
  %3435 = vmatprep.subr.mxu0 0.0
  %3436 = vmatpush1.msra.mxu0 0.0
  %3437 = vmatprep.subr.mxu0 0.0
  %3438 = vmatpush1.msra.mxu0 0.0
  %3439 = vmatprep.mubr.f32.mxu0 0.0
  %3440 = vmatmul.mubr.f32.gmra.mrb[0].mxu0 %v3364
  %v3441 = vpop.f32.mrb[0].mxu0
  %v3442 = vadd.f32 0.0, %v3441
  %v3443 = vpop.f32.mrb[0].mxu0
  %3444 = vmatprep.mubr.f32.mxu0 0.0
  %3445 = vmatmul.mubr.f32.gmra.mrb[0].mxu0 %v3367
  %v3446 = vpop.f32.mrb[0].mxu0
  %v3447 = vadd.f32 0.0, %v3446
  %v3448 = vpop.f32.mrb[0].mxu0
  %3449 = vmatprep.mubr.f32.mxu0 0.0
  %3450 = vmatmul.mubr.f32.gmra.mrb[0].mxu0 %v3370
  %v3451 = vpop.f32.mrb[0].mxu0
  %v3452 = vadd.f32 0.0, %v3451
  %v3453 = vpop.f32.mrb[0].mxu0
  %3454 = vmatprep.mubr.f32.mxu0 0.0
  %3455 = vmatmul.mubr.f32.gmra.mrb[0].mxu0 %v3373
  %v3456 = vpop.f32.mrb[0].mxu0
  %v3457 = vadd.f32 0.0, %v3456
  %v3458 = vpop.f32.mrb[0].mxu0
  %3459 = vdwg.mxu0
  %v3460 = vadd.f32 %v3336, %v3442
  %v3461 = vadd.f32 %v3341, %v3447
  %v3462 = vadd.f32 %v3346, %v3452
  %v3463 = vadd.f32 %v3351, %v3457
  %v3464 = vld [vmem:[#allocation2 + $0x9] sm:$0xff]
  %v3465 = vld [vmem:[#allocation2 + $0x11] sm:$0xff]
  %v3466 = vld [vmem:[#allocation2 + $0x29] sm:$0xff]
  %v3467 = vld [vmem:[#allocation2 + $0x31] sm:$0xff]
  %s3468 = scalar_lea.vmem %s1, 896
  %v3469 = vld [vmem:[%s3468] sm:$0xff]
  %v3470 = vld [vmem:[%s3468 + $0x8] sm:$0xff]
  %v3471 = vld [vmem:[%s3468 + $0x10] sm:$0xff]
  %v3472 = vld [vmem:[%s3468 + $0x18] sm:$0xff]
  %v3474 = vsel %vm20, %v3464, 0
  %v3477 = vsel %vm20, %v3465, 0
  %v3480 = vsel %vm20, %v3466, 0
  %v3483 = vsel %vm20, %v3467, 0
  %3485 = vmatprep.subr.mxu0 0.0
  %3486 = vmatpush1.msra.mxu0 %v3469
  %3487 = vmatprep.subr.mxu0 0.0
  %3488 = vmatpush1.msra.mxu0 %v3470
  %3489 = vmatprep.subr.mxu0 0.0
  %3490 = vmatpush1.msra.mxu0 %v3471
  %3491 = vmatprep.subr.mxu0 0.0
  %3492 = vmatpush1.msra.mxu0 %v3472
  %3493 = vmatprep.subr.mxu0 0.0
  %3494 = vmatpush1.msra.mxu0 0.0
  %3495 = vmatprep.subr.mxu0 0.0
  %3496 = vmatpush1.msra.mxu0 0.0
  %3497 = vmatprep.subr.mxu0 0.0
  %3498 = vmatpush1.msra.mxu0 0.0
  %3499 = vmatprep.subr.mxu0 0.0
  %3500 = vmatpush1.msra.mxu0 0.0
  %3501 = vmatprep.subr.mxu0 0.0
  %3502 = vmatpush1.msra.mxu0 0.0
  %3503 = vmatprep.subr.mxu0 0.0
  %3504 = vmatpush1.msra.mxu0 0.0
  %3505 = vmatprep.subr.mxu0 0.0
  %3506 = vmatpush1.msra.mxu0 0.0
  %3507 = vmatprep.subr.mxu0 0.0
  %3508 = vmatpush1.msra.mxu0 0.0
  %3509 = vmatprep.subr.mxu0 0.0
  %3510 = vmatpush1.msra.mxu0 0.0
  %3511 = vmatprep.subr.mxu0 0.0
  %3512 = vmatpush1.msra.mxu0 0.0
  %3513 = vmatprep.subr.mxu0 0.0
  %3514 = vmatpush1.msra.mxu0 0.0
  %3515 = vmatprep.subr.mxu0 0.0
  %3516 = vmatpush1.msra.mxu0 0.0
  %3517 = vmatprep.subr.mxu0 0.0
  %3518 = vmatpush1.msra.mxu0 0.0
  %3519 = vmatprep.subr.mxu0 0.0
  %3520 = vmatpush1.msra.mxu0 0.0
  %3521 = vmatprep.subr.mxu0 0.0
  %3522 = vmatpush1.msra.mxu0 0.0
  %3523 = vmatprep.subr.mxu0 0.0
  %3524 = vmatpush1.msra.mxu0 0.0
  %3525 = vmatprep.subr.mxu0 0.0
  %3526 = vmatpush1.msra.mxu0 0.0
  %3527 = vmatprep.subr.mxu0 0.0
  %3528 = vmatpush1.msra.mxu0 0.0
  %3529 = vmatprep.subr.mxu0 0.0
  %3530 = vmatpush1.msra.mxu0 0.0
  %3531 = vmatprep.subr.mxu0 0.0
  %3532 = vmatpush1.msra.mxu0 0.0
  %3533 = vmatprep.subr.mxu0 0.0
  %3534 = vmatpush1.msra.mxu0 0.0
  %3535 = vmatprep.subr.mxu0 0.0
  %3536 = vmatpush1.msra.mxu0 0.0
  %3537 = vmatprep.subr.mxu0 0.0
  %3538 = vmatpush1.msra.mxu0 0.0
  %3539 = vmatprep.subr.mxu0 0.0
  %3540 = vmatpush1.msra.mxu0 0.0
  %3541 = vmatprep.subr.mxu0 0.0
  %3542 = vmatpush1.msra.mxu0 0.0
  %3543 = vmatprep.subr.mxu0 0.0
  %3544 = vmatpush1.msra.mxu0 0.0
  %3545 = vmatprep.subr.mxu0 0.0
  %3546 = vmatpush1.msra.mxu0 0.0
  %3547 = vmatprep.subr.mxu0 0.0
  %3548 = vmatpush1.msra.mxu0 0.0
  %3549 = vmatprep.mubr.f32.mxu0 0.0
  %3550 = vmatmul.mubr.f32.gmra.mrb[0].mxu0 %v3474
  %v3551 = vpop.f32.mrb[0].mxu0
  %v3552 = vadd.f32 0.0, %v3551
  %v3553 = vpop.f32.mrb[0].mxu0
  %3554 = vmatprep.mubr.f32.mxu0 0.0
  %3555 = vmatmul.mubr.f32.gmra.mrb[0].mxu0 %v3477
  %v3556 = vpop.f32.mrb[0].mxu0
  %v3557 = vadd.f32 0.0, %v3556
  %v3558 = vpop.f32.mrb[0].mxu0
  %3559 = vmatprep.mubr.f32.mxu0 0.0
  %3560 = vmatmul.mubr.f32.gmra.mrb[0].mxu0 %v3480
  %v3561 = vpop.f32.mrb[0].mxu0
  %v3562 = vadd.f32 0.0, %v3561
  %v3563 = vpop.f32.mrb[0].mxu0
  %3564 = vmatprep.mubr.f32.mxu0 0.0
  %3565 = vmatmul.mubr.f32.gmra.mrb[0].mxu0 %v3483
  %v3566 = vpop.f32.mrb[0].mxu0
  %v3567 = vadd.f32 0.0, %v3566
  %v3568 = vpop.f32.mrb[0].mxu0
  %3569 = vdwg.mxu0
  %v3570 = vadd.f32 %v3460, %v3552
  %v3571 = vadd.f32 %v3461, %v3557
  %v3572 = vadd.f32 %v3462, %v3562
  %v3573 = vadd.f32 %v3463, %v3567
  %v3574 = vld [vmem:[#allocation2 + $0xa] sm:$0xff]
  %v3575 = vld [vmem:[#allocation2 + $0x12] sm:$0xff]
  %v3576 = vld [vmem:[#allocation2 + $0x2a] sm:$0xff]
  %v3577 = vld [vmem:[#allocation2 + $0x32] sm:$0xff]
  %s3578 = scalar_lea.vmem %s1, 928
  %v3579 = vld [vmem:[%s3578] sm:$0xff]
  %v3580 = vld [vmem:[%s3578 + $0x8] sm:$0xff]
  %v3581 = vld [vmem:[%s3578 + $0x10] sm:$0xff]
  %v3582 = vld [vmem:[%s3578 + $0x18] sm:$0xff]
  %v3584 = vsel %vm20, %v3574, 0
  %v3587 = vsel %vm20, %v3575, 0
  %v3590 = vsel %vm20, %v3576, 0
  %v3593 = vsel %vm20, %v3577, 0
  %3595 = vmatprep.subr.mxu0 0.0
  %3596 = vmatpush1.msra.mxu0 %v3579
  %3597 = vmatprep.subr.mxu0 0.0
  %3598 = vmatpush1.msra.mxu0 %v3580
  %3599 = vmatprep.subr.mxu0 0.0
  %3600 = vmatpush1.msra.mxu0 %v3581
  %3601 = vmatprep.subr.mxu0 0.0
  %3602 = vmatpush1.msra.mxu0 %v3582
  %3603 = vmatprep.subr.mxu0 0.0
  %3604 = vmatpush1.msra.mxu0 0.0
  %3605 = vmatprep.subr.mxu0 0.0
  %3606 = vmatpush1.msra.mxu0 0.0
  %3607 = vmatprep.subr.mxu0 0.0
  %3608 = vmatpush1.msra.mxu0 0.0
  %3609 = vmatprep.subr.mxu0 0.0
  %3610 = vmatpush1.msra.mxu0 0.0
  %3611 = vmatprep.subr.mxu0 0.0
  %3612 = vmatpush1.msra.mxu0 0.0
  %3613 = vmatprep.subr.mxu0 0.0
  %3614 = vmatpush1.msra.mxu0 0.0
  %3615 = vmatprep.subr.mxu0 0.0
  %3616 = vmatpush1.msra.mxu0 0.0
  %3617 = vmatprep.subr.mxu0 0.0
  %3618 = vmatpush1.msra.mxu0 0.0
  %3619 = vmatprep.subr.mxu0 0.0
  %3620 = vmatpush1.msra.mxu0 0.0
  %3621 = vmatprep.subr.mxu0 0.0
  %3622 = vmatpush1.msra.mxu0 0.0
  %3623 = vmatprep.subr.mxu0 0.0
  %3624 = vmatpush1.msra.mxu0 0.0
  %3625 = vmatprep.subr.mxu0 0.0
  %3626 = vmatpush1.msra.mxu0 0.0
  %3627 = vmatprep.subr.mxu0 0.0
  %3628 = vmatpush1.msra.mxu0 0.0
  %3629 = vmatprep.subr.mxu0 0.0
  %3630 = vmatpush1.msra.mxu0 0.0
  %3631 = vmatprep.subr.mxu0 0.0
  %3632 = vmatpush1.msra.mxu0 0.0
  %3633 = vmatprep.subr.mxu0 0.0
  %3634 = vmatpush1.msra.mxu0 0.0
  %3635 = vmatprep.subr.mxu0 0.0
  %3636 = vmatpush1.msra.mxu0 0.0
  %3637 = vmatprep.subr.mxu0 0.0
  %3638 = vmatpush1.msra.mxu0 0.0
  %3639 = vmatprep.subr.mxu0 0.0
  %3640 = vmatpush1.msra.mxu0 0.0
  %3641 = vmatprep.subr.mxu0 0.0
  %3642 = vmatpush1.msra.mxu0 0.0
  %3643 = vmatprep.subr.mxu0 0.0
  %3644 = vmatpush1.msra.mxu0 0.0
  %3645 = vmatprep.subr.mxu0 0.0
  %3646 = vmatpush1.msra.mxu0 0.0
  %3647 = vmatprep.subr.mxu0 0.0
  %3648 = vmatpush1.msra.mxu0 0.0
  %3649 = vmatprep.subr.mxu0 0.0
  %3650 = vmatpush1.msra.mxu0 0.0
  %3651 = vmatprep.subr.mxu0 0.0
  %3652 = vmatpush1.msra.mxu0 0.0
  %3653 = vmatprep.subr.mxu0 0.0
  %3654 = vmatpush1.msra.mxu0 0.0
  %3655 = vmatprep.subr.mxu0 0.0
  %3656 = vmatpush1.msra.mxu0 0.0
  %3657 = vmatprep.subr.mxu0 0.0
  %3658 = vmatpush1.msra.mxu0 0.0
  %3659 = vmatprep.mubr.f32.mxu0 0.0
  %3660 = vmatmul.mubr.f32.gmra.mrb[0].mxu0 %v3584
  %v3661 = vpop.f32.mrb[0].mxu0
  %v3662 = vadd.f32 0.0, %v3661
  %v3663 = vpop.f32.mrb[0].mxu0
  %3664 = vmatprep.mubr.f32.mxu0 0.0
  %3665 = vmatmul.mubr.f32.gmra.mrb[0].mxu0 %v3587
  %v3666 = vpop.f32.mrb[0].mxu0
  %v3667 = vadd.f32 0.0, %v3666
  %v3668 = vpop.f32.mrb[0].mxu0
  %3669 = vmatprep.mubr.f32.mxu0 0.0
  %3670 = vmatmul.mubr.f32.gmra.mrb[0].mxu0 %v3590
  %v3671 = vpop.f32.mrb[0].mxu0
  %v3672 = vadd.f32 0.0, %v3671
  %v3673 = vpop.f32.mrb[0].mxu0
  %3674 = vmatprep.mubr.f32.mxu0 0.0
  %3675 = vmatmul.mubr.f32.gmra.mrb[0].mxu0 %v3593
  %v3676 = vpop.f32.mrb[0].mxu0
  %v3677 = vadd.f32 0.0, %v3676
  %v3678 = vpop.f32.mrb[0].mxu0
  %3679 = vdwg.mxu0
  %v3680 = vadd.f32 %v3570, %v3662
  %v3681 = vadd.f32 %v3571, %v3667
  %v3682 = vadd.f32 %v3572, %v3672
  %v3683 = vadd.f32 %v3573, %v3677
  %v3684 = vld [vmem:[%s2 + $0x5] sm:$0x1]
  %v3685 = vlaneseq
  %v3686 = vshrl.u32 %v3685, 7
  %v3687 = vsub.s32 0, %v3686
  %v3688 = vrot.slane %v3684, %v3687
  %v3689 = vadd.f32 %v3680, %v3688
  %v3690 = vadd.f32 %v3681, %v3688
  %v3691 = vadd.f32 %v3682, %v3688
  %v3692 = vadd.f32 %v3683, %v3688
  %v3693 = vld [vmem:[%s0] sm:$0xff]
  %v3694 = vld [vmem:[%s0 + $0x8] sm:$0xff]
  %v3695 = vld [vmem:[%s0 + $0x10] sm:$0xff]
  %v3696 = vld [vmem:[%s0 + $0x18] sm:$0xff]
  %v3697 = vadd.f32 %v3689, %v3693
  %v3698 = vadd.f32 %v3690, %v3694
  %v3699 = vadd.f32 %v3691, %v3695
  %v3700 = vadd.f32 %v3692, %v3696
  %v3701 = vsub.f32 0.0, %v3697
  %v3702 = vsub.f32 0.0, %v3698
  %v3703 = vsub.f32 0.0, %v3699
  %v3704 = vsub.f32 0.0, %v3700
  %v3705 = vmul.f32 %v3701, 1.442695
  %v3706 = vpow.pop %v3705
  %v3707 = vmul.f32 %v3702, 1.442695
  %v3708 = vpow.pop %v3707
  %v3709 = vmul.f32 %v3703, 1.442695
  %v3710 = vpow.pop %v3709
  %v3711 = vmul.f32 %v3704, 1.442695
  %v3712 = vpow.pop %v3711
  %v3713 = vadd.f32 %v3706, 1.0
  %v3714 = vadd.f32 %v3708, 1.0
  %v3715 = vadd.f32 %v3710, 1.0
  %v3716 = vadd.f32 %v3712, 1.0
  %v3717 = vrcp.pop %v3713
  %v3718 = vmul.f32 1.0, %v3717
  %v3719 = vrcp.pop %v3714
  %v3720 = vmul.f32 1.0, %v3719
  %v3721 = vrcp.pop %v3715
  %v3722 = vmul.f32 1.0, %v3721
  %v3723 = vrcp.pop %v3716
  %v3724 = vmul.f32 1.0, %v3723
  %vm3725 = vcmask 31744
  %3726 = vst.msk [vmem:[%s5] sm:$0xff] %vm3725, %v3718
  %3727 = vst.msk [vmem:[%s5 + $0x8] sm:$0xff] %vm3725, %v3720
  %3728 = vst.msk [vmem:[%s5 + $0x10] sm:$0xff] %vm3725, %v3722
  %3729 = vst.msk [vmem:[%s5 + $0x18] sm:$0xff] %vm3725, %v3724
  // Predicated region
  $region22: #{cnn_1d_forward.1} parent=0 // pred_check
    _
  $region23: #{cnn_1d_forward.1} parent=0 // pred_check_branch
    %3731 = sbr.rel (0) target = $region25
  $region24: #{cnn_1d_forward.1} parent=0 // pred_region
    _
  $region25: #{cnn_1d_forward.1} parent=0 // pred_fallthru
    _
  // Predicated region
  $region26: #{cnn_1d_forward.1} parent=0 // pred_check
    _
  $region27: #{cnn_1d_forward.1} parent=0 // pred_check_branch
    %3733 = sbr.rel (0) target = $region29
  $region28: #{cnn_1d_forward.1} parent=0 // pred_region
    _
  $region29: #{cnn_1d_forward.1} parent=0 // pred_fallthru
    _

</llo_original>
